<compile_context>
chip_gen: v5e
topology: v5e:2x2
jax: 0.10.0
libtpu: 0.0.40
codegen_flags: <defaults>
</compile_context>

<pallas_src>
import jax
import jax.numpy as jnp
from jax.experimental import pallas as pl
from jax.experimental.pallas import tpu as pltpu

IN_FEATS = 6
F_PAD = 8          # layer-0 features zero-padded 6 -> 8 (mathematically exact)
HIDDEN = 64        # hidden_size
NUM_LAYERS = 4     # num_layers
LABEL = 20         # label_size
LN_EPS = 1e-5


def stock_predictor_kernel(x_ref, w_ih0_ref, w_hh0_ref, w_fused_ref, b_ref,
                           ln_g_ref, ln_b_ref, w_out_ref, b_out_ref, out_ref):
    """Forward pass for one batch tile, fully resident in VMEM.

    x_ref      : (T, Bt, F_PAD)  f32, time-major layer-0 input (features 6 -> 8)
    w_ih0_ref  : (F_PAD, 4H)     bf16, layer-0 input->gate weights, cols [f,i,o,g]
    w_hh0_ref  : (H, 4H)         bf16, layer-0 hidden->gate weights, cols [f,i,o,g]
    w_fused_ref: (L-1, 2H, 4H)   bf16, layers 1.. fused [W_ih ; W_hh], cols [f,i,o,g]
    b_ref      : (L, 1, 4H)      f32, b_ih + b_hh, cols [f,i,o,g]
    ln_g_ref   : (1, H)          f32 LayerNorm gamma
    ln_b_ref   : (1, H)          f32 LayerNorm beta
    w_out_ref  : (H, LABEL)      f32 output Linear weight (transposed)
    b_out_ref  : (1, LABEL)      f32 output Linear bias
    out_ref    : (Bt, LABEL)
    """
    T, Bt, F = x_ref.shape
    L, H = NUM_LAYERS, HIDDEN
    G = 4 * H
    f32 = jnp.float32
    bf16 = jnp.bfloat16

    # Loop-invariant lane constants, hoisted once; (1, 2H) so they cost a single
    # vreg and sublane-broadcast for free in the VPU.
    lane = jax.lax.broadcasted_iota(jnp.int32, (1, 2 * H), 1)
    hi = lane >= H
    pre_scale = jnp.where(hi, 2.0, 1.0).astype(f32)     # [1 | 2]
    post_shift = jnp.where(hi, 1.0, 0.0).astype(f32)    # [0 | 1]

    # ---- Layer-0 input projection hoisted out of the recurrence ------------
    # (T, Bt, F) -> (T*Bt, F) is a tile-aligned leading-dim collapse (Bt % 8 == 0).
    x2 = x_ref[...].reshape(T * Bt, F).astype(bf16)
    pre0 = (jnp.dot(x2, w_ih0_ref[...], preferred_element_type=f32)
            + b_ref[0]).reshape(T, Bt, G)                # bias of layer 0 folded in

    w_hh0 = w_hh0_ref[...]
    w_fused = [w_fused_ref[l] for l in range(L - 1)]
    bias = [None] + [b_ref[l] for l in range(1, L)]

    h_bf = [jnp.zeros((Bt, H), bf16) for _ in range(L)]   # matmul operands (bf16)
    c = [jnp.zeros((Bt, H), f32) for _ in range(L)]       # cell state stays f32
    outs_bf = [[None] * T for _ in range(L)]
    h_top = [jnp.zeros((Bt, H), f32)]                     # top-layer h, f32 for LN

    def lstm_cell(l, t):
        # Gate columns are [f | i | o | g] (permuted at init time).
        if l == 0:
            gates = pre0[t] + jnp.dot(h_bf[0], w_hh0, preferred_element_type=f32)
        else:
            # Fused input+hidden projection: one (Bt,128)x(128,256) bf16 matmul.
            hin = jnp.concatenate([outs_bf[l - 1][t], h_bf[l]], axis=1)  # (Bt, 2H)
            gates = (jnp.dot(hin, w_fused[l - 1], preferred_element_type=f32)
                     + bias[l])

        v0 = gates[:, :2 * H]                   # [f_pre | i_pre]   lane-aligned
        v1 = gates[:, 2 * H:]                   # [o_pre | g_pre]   lane-aligned
        s0 = jax.nn.sigmoid(v0)                 # [sig f | sig i]
        # tanh(g) = 2*sigmoid(2g) - 1  ->  one EUP pass gives [sig o | tanh g]
        s1 = jax.nn.sigmoid(v1 * pre_scale) * pre_scale - post_shift
        p = s0 * s1                             # [sigf*sigo | sigi*tanh g]
        i_g = p[:, H:]                          # the single lane extract / cell
        f_gate = s0[:, :H]                      # lane-aligned slice (free)
        o_gate = s1[:, :H]                      # lane-aligned slice (free)

        c_new = f_gate * c[l] + i_g
        h_new = o_gate * jnp.tanh(c_new)
        c[l] = c_new
        hb = h_new.astype(bf16)                 # cast once; reused by 2 consumers
        h_bf[l] = hb
        if l < L - 1:
            outs_bf[l][t] = hb
        else:
            h_top[0] = h_new

    # Wavefront (diagonal) order over (layer, time): cell (l, t) depends only on
    # (l, t-1) and (l-1, t), so up to L recurrence chains overlap.
    # TODO(synk): for production T >> 8, replace the full unroll with a
    # lax.fori_loop over diagonals (carry h/c + previous diagonal, unroll=2-4)
    # to bound live ranges and compile time.
    for d in range(L + T - 1):
        for l in range(L):
            t = d - l
            if 0 <= t < T:
                lstm_cell(l, t)

    # LayerNorm is per-position, so LN(full seq)[:, -1, :] == LN(last hidden).
    h_last = h_top[0]
    mu = jnp.mean(h_last, axis=-1, keepdims=True)
    var = jnp.mean((h_last - mu) ** 2, axis=-1, keepdims=True)
    xn = (h_last - mu) * jax.lax.rsqrt(var + LN_EPS)
    xn = xn * ln_g_ref[...] + ln_b_ref[...]

    # Dropout: inference mode => identity (PyTorch .eval() semantics).
    # Output Linear runs once, off the recurrence critical path -> kept f32.
    out = jnp.dot(xn, w_out_ref[...], preferred_element_type=f32) + b_out_ref[...]
    out_ref[...] = out.astype(out_ref.dtype)


def _permute_gates(w):
    """Reorder PyTorch gate blocks [i, f, g, o] (leading axis) -> [f, i, o, g]."""
    h = w.shape[0] // 4
    i, f, g, o = w[:h], w[h:2 * h], w[2 * h:3 * h], w[3 * h:]
    return jnp.concatenate([f, i, o, g], axis=0)


def init_params(key):
    """PyTorch-style init: uniform(-1/sqrt(H), 1/sqrt(H)).

    Returns (packed_params_for_kernel, raw_pytorch_layout_params).
    """
    H, L = HIDDEN, NUM_LAYERS
    k = 1.0 / float(jnp.sqrt(jnp.float32(H)))
    keys = jax.random.split(key, 4 * L + 2)
    it = iter(keys)

    raw = {"w_ih": [], "w_hh": [], "b_ih": [], "b_hh": []}
    for l in range(L):
        in_sz = IN_FEATS if l == 0 else H
        raw["w_ih"].append(jax.random.uniform(next(it), (4 * H, in_sz), jnp.float32, -k, k))
        raw["w_hh"].append(jax.random.uniform(next(it), (4 * H, H), jnp.float32, -k, k))
        raw["b_ih"].append(jax.random.uniform(next(it), (4 * H,), jnp.float32, -k, k))
        raw["b_hh"].append(jax.random.uniform(next(it), (4 * H,), jnp.float32, -k, k))
    raw["w_out"] = jax.random.uniform(next(it), (LABEL, H), jnp.float32, -k, k)
    raw["b_out"] = jax.random.uniform(next(it), (LABEL,), jnp.float32, -k, k)
    raw["ln_g"] = jnp.ones((H,), jnp.float32)
    raw["ln_b"] = jnp.zeros((H,), jnp.float32)

    # Pack for the kernel: transpose to (in, 4H); permute gate columns to
    # [f, i, o, g]; zero-pad layer-0 input features 6 -> 8 (exact); fuse layers
    # 1..3 as [W_ih ; W_hh] along the contraction axis (K = 128); store all
    # recurrence matmul operands in bf16 (f32 accumulation in-kernel).
    w_ih0 = _permute_gates(raw["w_ih"][0]).T                        # (6, 4H)
    w_ih0 = jnp.zeros((F_PAD, 4 * H), jnp.float32).at[:IN_FEATS].set(w_ih0)
    w_fused = jnp.stack([
        jnp.concatenate([_permute_gates(raw["w_ih"][l]).T,
                         _permute_gates(raw["w_hh"][l]).T], axis=0)
        for l in range(1, L)])                                      # (L-1, 2H, 4H)
    params = {
        "w_ih0": w_ih0.astype(jnp.bfloat16),                        # (8, 4H)
        "w_hh0": _permute_gates(raw["w_hh"][0]).T.astype(jnp.bfloat16),   # (H, 4H)
        "w_fused": w_fused.astype(jnp.bfloat16),                    # (L-1, 2H, 4H)
        "b": jnp.stack([_permute_gates(raw["b_ih"][l] + raw["b_hh"][l]).reshape(1, 4 * H)
                        for l in range(L)]),                        # (L, 1, 4H) f32
        "ln_g": raw["ln_g"].reshape(1, H),
        "ln_b": raw["ln_b"].reshape(1, H),
        "w_out": raw["w_out"].T,                                    # (H, LABEL) f32
        "b_out": raw["b_out"].reshape(1, LABEL),
    }
    # NOTE: conv / conv_bn / fc1 / fc2 / fc_bn1 / fc_bn2 of the PyTorch module
    # are never used by forward(), so they are intentionally not materialized.
    return params, raw


def _round_up(a, b):
    return (a + b - 1) // b * b


def _batch_tiling(B):
    """Return (tile, num_tiles).

    Tile is a multiple of 8 and capped at 64 (vreg pressure); whenever B > 8 we
    force >= 2 grid steps so dimension_semantics=("parallel",) can shard the
    batch across v7x's two TensorCores (no effect on v5e/v6e).
    """
    if B <= 8:
        return 8, 1
    nb = max(2, pl.cdiv(B, 64))
    return _round_up(pl.cdiv(B, nb), 8), nb


@jax.jit
def stock_predictor_forward(x, params):
    B, T, F = x.shape
    assert F == IN_FEATS
    bt, nb = _batch_tiling(B)
    b_pad = bt * nb
    H, G = HIDDEN, 4 * HIDDEN

    # Time-major, batch padded to the tile grid, features zero-padded 6 -> 8.
    x_p = jnp.zeros((T, b_pad, F_PAD), jnp.float32)
    x_p = x_p.at[:, :B, :F].set(jnp.transpose(x.astype(jnp.float32), (1, 0, 2)))

    flops = (2 * b_pad * T * F_PAD * G                        # layer-0 input proj
             + 2 * b_pad * T * H * G                          # layer-0 hidden proj
             + 2 * b_pad * T * (NUM_LAYERS - 1) * 2 * H * G   # fused layers 1..
             + 2 * b_pad * H * LABEL)                         # output linear
    transcendentals = b_pad * T * NUM_LAYERS * 5 * H          # 2x(2H) sigmoid + H tanh
    bytes_accessed = int(x_p.size * x_p.dtype.itemsize
                         + sum(int(p.size) * p.dtype.itemsize for p in params.values())
                         + b_pad * LABEL * 4)

    def resident(a):
        nd = a.ndim
        return pl.BlockSpec(a.shape, lambda i, nd=nd: (0,) * nd)

    in_specs = [
        pl.BlockSpec((T, bt, F_PAD), lambda i: (0, i, 0)),
        resident(params["w_ih0"]),
        resident(params["w_hh0"]),
        resident(params["w_fused"]),
        resident(params["b"]),
        resident(params["ln_g"]),
        resident(params["ln_b"]),
        resident(params["w_out"]),
        resident(params["b_out"]),
    ]
    out_spec = pl.BlockSpec((bt, LABEL), lambda i: (i, 0))

    out = pl.pallas_call(
        stock_predictor_kernel,
        out_shape=jax.ShapeDtypeStruct((b_pad, LABEL), jnp.float32),
        grid=(nb,),
        in_specs=in_specs,
        out_specs=out_spec,
        cost_estimate=pl.CostEstimate(flops=flops,
                                      transcendentals=transcendentals,
                                      bytes_accessed=bytes_accessed),
        compiler_params=pltpu.CompilerParams(
            dimension_semantics=("parallel",)),
    )(x_p, params["w_ih0"], params["w_hh0"], params["w_fused"], params["b"],
      params["ln_g"], params["ln_b"], params["w_out"], params["b_out"])
    return out[:B]


def reference_forward(x, raw):
    """Pure-JAX f32 reference using standard PyTorch LSTM gate math (i, f, g, o)."""
    H = HIDDEN
    hp = jax.lax.Precision.HIGHEST
    seq = x.astype(jnp.float32)
    B, T, _ = seq.shape
    for l in range(NUM_LAYERS):
        w_ih, w_hh = raw["w_ih"][l], raw["w_hh"][l]
        b = raw["b_ih"][l] + raw["b_hh"][l]
        hs = jnp.zeros((B, H), jnp.float32)
        cs = jnp.zeros((B, H), jnp.float32)
        outs = []
        for t in range(T):
            g = (jnp.dot(seq[:, t, :], w_ih.T, precision=hp)
                 + jnp.dot(hs, w_hh.T, precision=hp) + b)
            i = jax.nn.sigmoid(g[:, 0 * H:1 * H])
            f = jax.nn.sigmoid(g[:, 1 * H:2 * H])
            gg = jnp.tanh(g[:, 2 * H:3 * H])
            o = jax.nn.sigmoid(g[:, 3 * H:4 * H])
            cs = f * cs + i * gg
            hs = o * jnp.tanh(cs)
            outs.append(hs)
        seq = jnp.stack(outs, axis=1)
    last = seq[:, -1, :]
    mu = last.mean(-1, keepdims=True)
    var = ((last - mu) ** 2).mean(-1, keepdims=True)
    xn = (last - mu) / jnp.sqrt(var + LN_EPS)
    xn = xn * raw["ln_g"] + raw["ln_b"]
    return jnp.dot(xn, raw["w_out"].T, precision=hp) + raw["b_out"]


if __name__ == "__main__":
    key = jax.random.PRNGKey(0)
    k_x, k_p = jax.random.split(key)

    B, T = 2, 8
    x = jax.random.normal(k_x, (B, T, IN_FEATS), jnp.float32)
    params, raw = init_params(k_p)

    out = stock_predictor_forward(x, params)
    jax.block_until_ready(out)
    assert out.shape == (B, LABEL), out.shape

    ref = reference_forward(x, raw)
    err = float(jnp.max(jnp.abs(out - ref)))
    # bf16 matmul operands on the recurrence (per perf review) vs. an f32
    # HIGHEST-precision reference; LayerNorm's 1/std amplifies hidden-state
    # rounding, so the tolerance is a bit looser than the previous f32 kernel.
    assert err < 3e-2, f"kernel/reference mismatch, max abs err = {err}"
    print("KERNEL_OK")
</pallas_src>

<mosaic_0001>
module attributes {stable_mosaic.version = 11 : i64} {
  func.func @stock_predictor_kernel(%arg0: i32, %arg1: memref<8x8x8xf32, #tpu.memory_space<vmem>>, %arg2: memref<8x256xbf16, #tpu.memory_space<vmem>>, %arg3: memref<64x256xbf16, #tpu.memory_space<vmem>>, %arg4: memref<3x128x256xbf16, #tpu.memory_space<vmem>>, %arg5: memref<4x1x256xf32, #tpu.memory_space<vmem>>, %arg6: memref<1x64xf32, #tpu.memory_space<vmem>>, %arg7: memref<1x64xf32, #tpu.memory_space<vmem>>, %arg8: memref<64x20xf32, #tpu.memory_space<vmem>>, %arg9: memref<1x20xf32, #tpu.memory_space<vmem>>, %arg10: memref<8x20xf32, #tpu.memory_space<vmem>>) attributes {dimension_semantics = [#tpu.dimension_semantics<parallel>], iteration_bounds = array<i64: 1>, scalar_prefetch = 0 : i64, scratch_operands = 0 : i64, tpu.core_type = #tpu.core_type<tc>, window_params = [{transform_indices = @transform_0, window_bounds = array<i64: 8, 8, 8>}, {pipeline_mode = #tpu.pipeline_mode<synchronous>, transform_indices = @transform_1, window_bounds = array<i64: 8, 256>}, {pipeline_mode = #tpu.pipeline_mode<synchronous>, transform_indices = @transform_2, window_bounds = array<i64: 64, 256>}, {pipeline_mode = #tpu.pipeline_mode<synchronous>, transform_indices = @transform_3, window_bounds = array<i64: 3, 128, 256>}, {pipeline_mode = #tpu.pipeline_mode<synchronous>, transform_indices = @transform_4, window_bounds = array<i64: 4, 1, 256>}, {pipeline_mode = #tpu.pipeline_mode<synchronous>, transform_indices = @transform_5, window_bounds = array<i64: 1, 64>}, {pipeline_mode = #tpu.pipeline_mode<synchronous>, transform_indices = @transform_6, window_bounds = array<i64: 1, 64>}, {pipeline_mode = #tpu.pipeline_mode<synchronous>, transform_indices = @transform_7, window_bounds = array<i64: 64, 20>}, {pipeline_mode = #tpu.pipeline_mode<synchronous>, transform_indices = @transform_8, window_bounds = array<i64: 1, 20>}, {transform_indices = @transform_9, window_bounds = array<i64: 8, 20>}]} {
    %0 = tpu.iota {dimensions = array<i32: 1>} : vector<1x128xi32>
    %c64_i32 = arith.constant 64 : i32
    %1 = vector.broadcast %c64_i32 : i32 to vector<1x128xi32>
    %2 = arith.cmpi sge, %0, %1 : vector<1x128xi32>
    %cst = arith.constant 2.000000e+00 : f32
    %cst_0 = arith.constant 1.000000e+00 : f32
    %3 = vector.broadcast %cst : f32 to vector<1x128xf32>
    %4 = vector.broadcast %cst_0 : f32 to vector<1x128xf32>
    %5 = arith.select %2, %3, %4 : vector<1x128xi1>, vector<1x128xf32>
    %cst_1 = arith.constant 1.000000e+00 : f32
    %cst_2 = arith.constant 0.000000e+00 : f32
    %6 = vector.broadcast %cst_1 : f32 to vector<1x128xf32>
    %7 = vector.broadcast %cst_2 : f32 to vector<1x128xf32>
    %8 = arith.select %2, %6, %7 : vector<1x128xi1>, vector<1x128xf32>
    %c0 = arith.constant 0 : index
    %c0_3 = arith.constant 0 : index
    %c0_4 = arith.constant 0 : index
    %9 = vector.load %arg1[%c0, %c0_3, %c0_4] : memref<8x8x8xf32, #tpu.memory_space<vmem>>, vector<8x8x8xf32>
    %10 = vector.shape_cast %9 : vector<8x8x8xf32> to vector<64x8xf32>
    %11 = arith.truncf %10 : vector<64x8xf32> to vector<64x8xbf16>
    %c0_5 = arith.constant 0 : index
    %c0_6 = arith.constant 0 : index
    %12 = vector.load %arg2[%c0_5, %c0_6] : memref<8x256xbf16, #tpu.memory_space<vmem>>, vector<8x256xbf16>
    %cst_7 = arith.constant dense<0.000000e+00> : vector<64x256xf32>
    %13 = tpu.matmul %11, %12, %cst_7 {dimension_numbers = #tpu.dot_dimension_numbers<[1], [0], [0], [1], [0, 0, 1, 1], [], []>} : vector<64x8xbf16>, vector<8x256xbf16>, vector<64x256xf32> -> vector<64x256xf32>
    %c0_8 = arith.constant 0 : index
    %c0_9 = arith.constant 0 : index
    %c0_10 = arith.constant 0 : index
    %14 = vector.load %arg5[%c0_8, %c0_9, %c0_10] : memref<4x1x256xf32, #tpu.memory_space<vmem>>, vector<1x1x256xf32>
    %15 = vector.shape_cast %14 : vector<1x1x256xf32> to vector<1x256xf32>
    %16 = vector.broadcast %15 : vector<1x256xf32> to vector<64x256xf32>
    %17 = arith.addf %13, %16 : vector<64x256xf32>
    %18 = vector.shape_cast %17 : vector<64x256xf32> to vector<8x8x256xf32>
    %c0_11 = arith.constant 0 : index
    %c0_12 = arith.constant 0 : index
    %19 = vector.load %arg3[%c0_11, %c0_12] : memref<64x256xbf16, #tpu.memory_space<vmem>>, vector<64x256xbf16>
    %c0_13 = arith.constant 0 : index
    %c0_14 = arith.constant 0 : index
    %c0_15 = arith.constant 0 : index
    %20 = vector.load %arg4[%c0_13, %c0_14, %c0_15] : memref<3x128x256xbf16, #tpu.memory_space<vmem>>, vector<1x128x256xbf16>
    %21 = vector.shape_cast %20 : vector<1x128x256xbf16> to vector<128x256xbf16>
    %c1 = arith.constant 1 : index
    %c0_16 = arith.constant 0 : index
    %c0_17 = arith.constant 0 : index
    %22 = vector.load %arg4[%c1, %c0_16, %c0_17] : memref<3x128x256xbf16, #tpu.memory_space<vmem>>, vector<1x128x256xbf16>
    %23 = vector.shape_cast %22 : vector<1x128x256xbf16> to vector<128x256xbf16>
    %c2 = arith.constant 2 : index
    %c0_18 = arith.constant 0 : index
    %c0_19 = arith.constant 0 : index
    %24 = vector.load %arg4[%c2, %c0_18, %c0_19] : memref<3x128x256xbf16, #tpu.memory_space<vmem>>, vector<1x128x256xbf16>
    %25 = vector.shape_cast %24 : vector<1x128x256xbf16> to vector<128x256xbf16>
    %c1_20 = arith.constant 1 : index
    %c0_21 = arith.constant 0 : index
    %c0_22 = arith.constant 0 : index
    %26 = vector.load %arg5[%c1_20, %c0_21, %c0_22] : memref<4x1x256xf32, #tpu.memory_space<vmem>>, vector<1x1x256xf32>
    %27 = vector.shape_cast %26 : vector<1x1x256xf32> to vector<1x256xf32>
    %c2_23 = arith.constant 2 : index
    %c0_24 = arith.constant 0 : index
    %c0_25 = arith.constant 0 : index
    %28 = vector.load %arg5[%c2_23, %c0_24, %c0_25] : memref<4x1x256xf32, #tpu.memory_space<vmem>>, vector<1x1x256xf32>
    %29 = vector.shape_cast %28 : vector<1x1x256xf32> to vector<1x256xf32>
    %c3 = arith.constant 3 : index
    %c0_26 = arith.constant 0 : index
    %c0_27 = arith.constant 0 : index
    %30 = vector.load %arg5[%c3, %c0_26, %c0_27] : memref<4x1x256xf32, #tpu.memory_space<vmem>>, vector<1x1x256xf32>
    %31 = vector.shape_cast %30 : vector<1x1x256xf32> to vector<1x256xf32>
    %cst_28 = arith.constant 0.000000e+00 : bf16
    %32 = vector.broadcast %cst_28 : bf16 to vector<8x64xbf16>
    %cst_29 = arith.constant 0.000000e+00 : bf16
    %33 = vector.broadcast %cst_29 : bf16 to vector<8x64xbf16>
    %cst_30 = arith.constant 0.000000e+00 : bf16
    %34 = vector.broadcast %cst_30 : bf16 to vector<8x64xbf16>
    %cst_31 = arith.constant 0.000000e+00 : bf16
    %35 = vector.broadcast %cst_31 : bf16 to vector<8x64xbf16>
    %cst_32 = arith.constant 0.000000e+00 : f32
    %36 = vector.broadcast %cst_32 : f32 to vector<8x64xf32>
    %cst_33 = arith.constant 0.000000e+00 : f32
    %37 = vector.broadcast %cst_33 : f32 to vector<8x64xf32>
    %cst_34 = arith.constant 0.000000e+00 : f32
    %38 = vector.broadcast %cst_34 : f32 to vector<8x64xf32>
    %cst_35 = arith.constant 0.000000e+00 : f32
    %39 = vector.broadcast %cst_35 : f32 to vector<8x64xf32>
    %40 = vector.extract_strided_slice %18 {offsets = [0, 0, 0], sizes = [1, 8, 256], strides = [1, 1, 1]} : vector<8x8x256xf32> to vector<1x8x256xf32>
    %41 = vector.shape_cast %40 : vector<1x8x256xf32> to vector<8x256xf32>
    %cst_36 = arith.constant dense<0.000000e+00> : vector<8x256xf32>
    %42 = tpu.matmul %32, %19, %cst_36 {dimension_numbers = #tpu.dot_dimension_numbers<[1], [0], [0], [1], [0, 0, 1, 1], [], []>} : vector<8x64xbf16>, vector<64x256xbf16>, vector<8x256xf32> -> vector<8x256xf32>
    %43 = arith.addf %41, %42 : vector<8x256xf32>
    %44 = vector.extract_strided_slice %43 {offsets = [0, 0], sizes = [8, 128], strides = [1, 1]} : vector<8x256xf32> to vector<8x128xf32>
    %45 = vector.extract_strided_slice %43 {offsets = [0, 128], sizes = [8, 128], strides = [1, 1]} : vector<8x256xf32> to vector<8x128xf32>
    %46 = arith.negf %44 : vector<8x128xf32>
    %47 = math.exp %46 : vector<8x128xf32>
    %cst_37 = arith.constant 1.000000e+00 : f32
    %48 = vector.broadcast %cst_37 : f32 to vector<8x128xf32>
    %49 = arith.addf %48, %47 : vector<8x128xf32>
    %50 = arith.divf %48, %49 : vector<8x128xf32>
    %51 = vector.broadcast %5 : vector<1x128xf32> to vector<8x128xf32>
    %52 = arith.mulf %45, %51 : vector<8x128xf32>
    %53 = arith.negf %52 : vector<8x128xf32>
    %54 = math.exp %53 : vector<8x128xf32>
    %cst_38 = arith.constant 1.000000e+00 : f32
    %55 = vector.broadcast %cst_38 : f32 to vector<8x128xf32>
    %56 = arith.addf %55, %54 : vector<8x128xf32>
    %57 = arith.divf %55, %56 : vector<8x128xf32>
    %58 = vector.broadcast %5 : vector<1x128xf32> to vector<8x128xf32>
    %59 = arith.mulf %57, %58 : vector<8x128xf32>
    %60 = vector.broadcast %8 : vector<1x128xf32> to vector<8x128xf32>
    %61 = arith.subf %59, %60 : vector<8x128xf32>
    %62 = arith.mulf %50, %61 : vector<8x128xf32>
    %63 = vector.extract_strided_slice %62 {offsets = [0, 64], sizes = [8, 64], strides = [1, 1]} : vector<8x128xf32> to vector<8x64xf32>
    %64 = vector.extract_strided_slice %50 {offsets = [0, 0], sizes = [8, 64], strides = [1, 1]} : vector<8x128xf32> to vector<8x64xf32>
    %65 = vector.extract_strided_slice %61 {offsets = [0, 0], sizes = [8, 64], strides = [1, 1]} : vector<8x128xf32> to vector<8x64xf32>
    %66 = arith.mulf %64, %36 : vector<8x64xf32>
    %67 = arith.addf %66, %63 : vector<8x64xf32>
    %68 = math.tanh %67 : vector<8x64xf32>
    %69 = arith.mulf %65, %68 : vector<8x64xf32>
    %70 = arith.truncf %69 : vector<8x64xf32> to vector<8x64xbf16>
    %71 = vector.extract_strided_slice %18 {offsets = [1, 0, 0], sizes = [1, 8, 256], strides = [1, 1, 1]} : vector<8x8x256xf32> to vector<1x8x256xf32>
    %72 = vector.shape_cast %71 : vector<1x8x256xf32> to vector<8x256xf32>
    %cst_39 = arith.constant dense<0.000000e+00> : vector<8x256xf32>
    %73 = tpu.matmul %70, %19, %cst_39 {dimension_numbers = #tpu.dot_dimension_numbers<[1], [0], [0], [1], [0, 0, 1, 1], [], []>} : vector<8x64xbf16>, vector<64x256xbf16>, vector<8x256xf32> -> vector<8x256xf32>
    %74 = arith.addf %72, %73 : vector<8x256xf32>
    %75 = vector.extract_strided_slice %74 {offsets = [0, 0], sizes = [8, 128], strides = [1, 1]} : vector<8x256xf32> to vector<8x128xf32>
    %76 = vector.extract_strided_slice %74 {offsets = [0, 128], sizes = [8, 128], strides = [1, 1]} : vector<8x256xf32> to vector<8x128xf32>
    %77 = arith.negf %75 : vector<8x128xf32>
    %78 = math.exp %77 : vector<8x128xf32>
    %cst_40 = arith.constant 1.000000e+00 : f32
    %79 = vector.broadcast %cst_40 : f32 to vector<8x128xf32>
    %80 = arith.addf %79, %78 : vector<8x128xf32>
    %81 = arith.divf %79, %80 : vector<8x128xf32>
    %82 = vector.broadcast %5 : vector<1x128xf32> to vector<8x128xf32>
    %83 = arith.mulf %76, %82 : vector<8x128xf32>
    %84 = arith.negf %83 : vector<8x128xf32>
    %85 = math.exp %84 : vector<8x128xf32>
    %cst_41 = arith.constant 1.000000e+00 : f32
    %86 = vector.broadcast %cst_41 : f32 to vector<8x128xf32>
    %87 = arith.addf %86, %85 : vector<8x128xf32>
    %88 = arith.divf %86, %87 : vector<8x128xf32>
    %89 = vector.broadcast %5 : vector<1x128xf32> to vector<8x128xf32>
    %90 = arith.mulf %88, %89 : vector<8x128xf32>
    %91 = vector.broadcast %8 : vector<1x128xf32> to vector<8x128xf32>
    %92 = arith.subf %90, %91 : vector<8x128xf32>
    %93 = arith.mulf %81, %92 : vector<8x128xf32>
    %94 = vector.extract_strided_slice %93 {offsets = [0, 64], sizes = [8, 64], strides = [1, 1]} : vector<8x128xf32> to vector<8x64xf32>
    %95 = vector.extract_strided_slice %81 {offsets = [0, 0], sizes = [8, 64], strides = [1, 1]} : vector<8x128xf32> to vector<8x64xf32>
    %96 = vector.extract_strided_slice %92 {offsets = [0, 0], sizes = [8, 64], strides = [1, 1]} : vector<8x128xf32> to vector<8x64xf32>
    %97 = arith.mulf %95, %67 : vector<8x64xf32>
    %98 = arith.addf %97, %94 : vector<8x64xf32>
    %99 = math.tanh %98 : vector<8x64xf32>
    %100 = arith.mulf %96, %99 : vector<8x64xf32>
    %101 = arith.truncf %100 : vector<8x64xf32> to vector<8x64xbf16>
    %102 = tpu.concatenate %70, %33 in 1 : vector<8x64xbf16>, vector<8x64xbf16> -> vector<8x128xbf16>
    %cst_42 = arith.constant dense<0.000000e+00> : vector<8x256xf32>
    %103 = tpu.matmul %102, %21, %cst_42 {dimension_numbers = #tpu.dot_dimension_numbers<[1], [0], [0], [1], [0, 0, 1, 1], [], []>} : vector<8x128xbf16>, vector<128x256xbf16>, vector<8x256xf32> -> vector<8x256xf32>
    %104 = vector.broadcast %27 : vector<1x256xf32> to vector<8x256xf32>
    %105 = arith.addf %103, %104 : vector<8x256xf32>
    %106 = vector.extract_strided_slice %105 {offsets = [0, 0], sizes = [8, 128], strides = [1, 1]} : vector<8x256xf32> to vector<8x128xf32>
    %107 = vector.extract_strided_slice %105 {offsets = [0, 128], sizes = [8, 128], strides = [1, 1]} : vector<8x256xf32> to vector<8x128xf32>
    %108 = arith.negf %106 : vector<8x128xf32>
    %109 = math.exp %108 : vector<8x128xf32>
    %cst_43 = arith.constant 1.000000e+00 : f32
    %110 = vector.broadcast %cst_43 : f32 to vector<8x128xf32>
    %111 = arith.addf %110, %109 : vector<8x128xf32>
    %112 = arith.divf %110, %111 : vector<8x128xf32>
    %113 = vector.broadcast %5 : vector<1x128xf32> to vector<8x128xf32>
    %114 = arith.mulf %107, %113 : vector<8x128xf32>
    %115 = arith.negf %114 : vector<8x128xf32>
    %116 = math.exp %115 : vector<8x128xf32>
    %cst_44 = arith.constant 1.000000e+00 : f32
    %117 = vector.broadcast %cst_44 : f32 to vector<8x128xf32>
    %118 = arith.addf %117, %116 : vector<8x128xf32>
    %119 = arith.divf %117, %118 : vector<8x128xf32>
    %120 = vector.broadcast %5 : vector<1x128xf32> to vector<8x128xf32>
    %121 = arith.mulf %119, %120 : vector<8x128xf32>
    %122 = vector.broadcast %8 : vector<1x128xf32> to vector<8x128xf32>
    %123 = arith.subf %121, %122 : vector<8x128xf32>
    %124 = arith.mulf %112, %123 : vector<8x128xf32>
    %125 = vector.extract_strided_slice %124 {offsets = [0, 64], sizes = [8, 64], strides = [1, 1]} : vector<8x128xf32> to vector<8x64xf32>
    %126 = vector.extract_strided_slice %112 {offsets = [0, 0], sizes = [8, 64], strides = [1, 1]} : vector<8x128xf32> to vector<8x64xf32>
    %127 = vector.extract_strided_slice %123 {offsets = [0, 0], sizes = [8, 64], strides = [1, 1]} : vector<8x128xf32> to vector<8x64xf32>
    %128 = arith.mulf %126, %37 : vector<8x64xf32>
    %129 = arith.addf %128, %125 : vector<8x64xf32>
    %130 = math.tanh %129 : vector<8x64xf32>
    %131 = arith.mulf %127, %130 : vector<8x64xf32>
    %132 = arith.truncf %131 : vector<8x64xf32> to vector<8x64xbf16>
    %133 = vector.extract_strided_slice %18 {offsets = [2, 0, 0], sizes = [1, 8, 256], strides = [1, 1, 1]} : vector<8x8x256xf32> to vector<1x8x256xf32>
    %134 = vector.shape_cast %133 : vector<1x8x256xf32> to vector<8x256xf32>
    %cst_45 = arith.constant dense<0.000000e+00> : vector<8x256xf32>
    %135 = tpu.matmul %101, %19, %cst_45 {dimension_numbers = #tpu.dot_dimension_numbers<[1], [0], [0], [1], [0, 0, 1, 1], [], []>} : vector<8x64xbf16>, vector<64x256xbf16>, vector<8x256xf32> -> vector<8x256xf32>
    %136 = arith.addf %134, %135 : vector<8x256xf32>
    %137 = vector.extract_strided_slice %136 {offsets = [0, 0], sizes = [8, 128], strides = [1, 1]} : vector<8x256xf32> to vector<8x128xf32>
    %138 = vector.extract_strided_slice %136 {offsets = [0, 128], sizes = [8, 128], strides = [1, 1]} : vector<8x256xf32> to vector<8x128xf32>
    %139 = arith.negf %137 : vector<8x128xf32>
    %140 = math.exp %139 : vector<8x128xf32>
    %cst_46 = arith.constant 1.000000e+00 : f32
    %141 = vector.broadcast %cst_46 : f32 to vector<8x128xf32>
    %142 = arith.addf %141, %140 : vector<8x128xf32>
    %143 = arith.divf %141, %142 : vector<8x128xf32>
    %144 = vector.broadcast %5 : vector<1x128xf32> to vector<8x128xf32>
    %145 = arith.mulf %138, %144 : vector<8x128xf32>
    %146 = arith.negf %145 : vector<8x128xf32>
    %147 = math.exp %146 : vector<8x128xf32>
    %cst_47 = arith.constant 1.000000e+00 : f32
    %148 = vector.broadcast %cst_47 : f32 to vector<8x128xf32>
    %149 = arith.addf %148, %147 : vector<8x128xf32>
    %150 = arith.divf %148, %149 : vector<8x128xf32>
    %151 = vector.broadcast %5 : vector<1x128xf32> to vector<8x128xf32>
    %152 = arith.mulf %150, %151 : vector<8x128xf32>
    %153 = vector.broadcast %8 : vector<1x128xf32> to vector<8x128xf32>
    %154 = arith.subf %152, %153 : vector<8x128xf32>
    %155 = arith.mulf %143, %154 : vector<8x128xf32>
    %156 = vector.extract_strided_slice %155 {offsets = [0, 64], sizes = [8, 64], strides = [1, 1]} : vector<8x128xf32> to vector<8x64xf32>
    %157 = vector.extract_strided_slice %143 {offsets = [0, 0], sizes = [8, 64], strides = [1, 1]} : vector<8x128xf32> to vector<8x64xf32>
    %158 = vector.extract_strided_slice %154 {offsets = [0, 0], sizes = [8, 64], strides = [1, 1]} : vector<8x128xf32> to vector<8x64xf32>
    %159 = arith.mulf %157, %98 : vector<8x64xf32>
    %160 = arith.addf %159, %156 : vector<8x64xf32>
    %161 = math.tanh %160 : vector<8x64xf32>
    %162 = arith.mulf %158, %161 : vector<8x64xf32>
    %163 = arith.truncf %162 : vector<8x64xf32> to vector<8x64xbf16>
    %164 = tpu.concatenate %101, %132 in 1 : vector<8x64xbf16>, vector<8x64xbf16> -> vector<8x128xbf16>
    %cst_48 = arith.constant dense<0.000000e+00> : vector<8x256xf32>
    %165 = tpu.matmul %164, %21, %cst_48 {dimension_numbers = #tpu.dot_dimension_numbers<[1], [0], [0], [1], [0, 0, 1, 1], [], []>} : vector<8x128xbf16>, vector<128x256xbf16>, vector<8x256xf32> -> vector<8x256xf32>
    %166 = vector.broadcast %27 : vector<1x256xf32> to vector<8x256xf32>
    %167 = arith.addf %165, %166 : vector<8x256xf32>
    %168 = vector.extract_strided_slice %167 {offsets = [0, 0], sizes = [8, 128], strides = [1, 1]} : vector<8x256xf32> to vector<8x128xf32>
    %169 = vector.extract_strided_slice %167 {offsets = [0, 128], sizes = [8, 128], strides = [1, 1]} : vector<8x256xf32> to vector<8x128xf32>
    %170 = arith.negf %168 : vector<8x128xf32>
    %171 = math.exp %170 : vector<8x128xf32>
    %cst_49 = arith.constant 1.000000e+00 : f32
    %172 = vector.broadcast %cst_49 : f32 to vector<8x128xf32>
    %173 = arith.addf %172, %171 : vector<8x128xf32>
    %174 = arith.divf %172, %173 : vector<8x128xf32>
    %175 = vector.broadcast %5 : vector<1x128xf32> to vector<8x128xf32>
    %176 = arith.mulf %169, %175 : vector<8x128xf32>
    %177 = arith.negf %176 : vector<8x128xf32>
    %178 = math.exp %177 : vector<8x128xf32>
    %cst_50 = arith.constant 1.000000e+00 : f32
    %179 = vector.broadcast %cst_50 : f32 to vector<8x128xf32>
    %180 = arith.addf %179, %178 : vector<8x128xf32>
    %181 = arith.divf %179, %180 : vector<8x128xf32>
    %182 = vector.broadcast %5 : vector<1x128xf32> to vector<8x128xf32>
    %183 = arith.mulf %181, %182 : vector<8x128xf32>
    %184 = vector.broadcast %8 : vector<1x128xf32> to vector<8x128xf32>
    %185 = arith.subf %183, %184 : vector<8x128xf32>
    %186 = arith.mulf %174, %185 : vector<8x128xf32>
    %187 = vector.extract_strided_slice %186 {offsets = [0, 64], sizes = [8, 64], strides = [1, 1]} : vector<8x128xf32> to vector<8x64xf32>
    %188 = vector.extract_strided_slice %174 {offsets = [0, 0], sizes = [8, 64], strides = [1, 1]} : vector<8x128xf32> to vector<8x64xf32>
    %189 = vector.extract_strided_slice %185 {offsets = [0, 0], sizes = [8, 64], strides = [1, 1]} : vector<8x128xf32> to vector<8x64xf32>
    %190 = arith.mulf %188, %129 : vector<8x64xf32>
    %191 = arith.addf %190, %187 : vector<8x64xf32>
    %192 = math.tanh %191 : vector<8x64xf32>
    %193 = arith.mulf %189, %192 : vector<8x64xf32>
    %194 = arith.truncf %193 : vector<8x64xf32> to vector<8x64xbf16>
    %195 = tpu.concatenate %132, %34 in 1 : vector<8x64xbf16>, vector<8x64xbf16> -> vector<8x128xbf16>
    %cst_51 = arith.constant dense<0.000000e+00> : vector<8x256xf32>
    %196 = tpu.matmul %195, %23, %cst_51 {dimension_numbers = #tpu.dot_dimension_numbers<[1], [0], [0], [1], [0, 0, 1, 1], [], []>} : vector<8x128xbf16>, vector<128x256xbf16>, vector<8x256xf32> -> vector<8x256xf32>
    %197 = vector.broadcast %29 : vector<1x256xf32> to vector<8x256xf32>
    %198 = arith.addf %196, %197 : vector<8x256xf32>
    %199 = vector.extract_strided_slice %198 {offsets = [0, 0], sizes = [8, 128], strides = [1, 1]} : vector<8x256xf32> to vector<8x128xf32>
    %200 = vector.extract_strided_slice %198 {offsets = [0, 128], sizes = [8, 128], strides = [1, 1]} : vector<8x256xf32> to vector<8x128xf32>
    %201 = arith.negf %199 : vector<8x128xf32>
    %202 = math.exp %201 : vector<8x128xf32>
    %cst_52 = arith.constant 1.000000e+00 : f32
    %203 = vector.broadcast %cst_52 : f32 to vector<8x128xf32>
    %204 = arith.addf %203, %202 : vector<8x128xf32>
    %205 = arith.divf %203, %204 : vector<8x128xf32>
    %206 = vector.broadcast %5 : vector<1x128xf32> to vector<8x128xf32>
    %207 = arith.mulf %200, %206 : vector<8x128xf32>
    %208 = arith.negf %207 : vector<8x128xf32>
    %209 = math.exp %208 : vector<8x128xf32>
    %cst_53 = arith.constant 1.000000e+00 : f32
    %210 = vector.broadcast %cst_53 : f32 to vector<8x128xf32>
    %211 = arith.addf %210, %209 : vector<8x128xf32>
    %212 = arith.divf %210, %211 : vector<8x128xf32>
    %213 = vector.broadcast %5 : vector<1x128xf32> to vector<8x128xf32>
    %214 = arith.mulf %212, %213 : vector<8x128xf32>
    %215 = vector.broadcast %8 : vector<1x128xf32> to vector<8x128xf32>
    %216 = arith.subf %214, %215 : vector<8x128xf32>
    %217 = arith.mulf %205, %216 : vector<8x128xf32>
    %218 = vector.extract_strided_slice %217 {offsets = [0, 64], sizes = [8, 64], strides = [1, 1]} : vector<8x128xf32> to vector<8x64xf32>
    %219 = vector.extract_strided_slice %205 {offsets = [0, 0], sizes = [8, 64], strides = [1, 1]} : vector<8x128xf32> to vector<8x64xf32>
    %220 = vector.extract_strided_slice %216 {offsets = [0, 0], sizes = [8, 64], strides = [1, 1]} : vector<8x128xf32> to vector<8x64xf32>
    %221 = arith.mulf %219, %38 : vector<8x64xf32>
    %222 = arith.addf %221, %218 : vector<8x64xf32>
    %223 = math.tanh %222 : vector<8x64xf32>
    %224 = arith.mulf %220, %223 : vector<8x64xf32>
    %225 = arith.truncf %224 : vector<8x64xf32> to vector<8x64xbf16>
    %226 = vector.extract_strided_slice %18 {offsets = [3, 0, 0], sizes = [1, 8, 256], strides = [1, 1, 1]} : vector<8x8x256xf32> to vector<1x8x256xf32>
    %227 = vector.shape_cast %226 : vector<1x8x256xf32> to vector<8x256xf32>
    %cst_54 = arith.constant dense<0.000000e+00> : vector<8x256xf32>
    %228 = tpu.matmul %163, %19, %cst_54 {dimension_numbers = #tpu.dot_dimension_numbers<[1], [0], [0], [1], [0, 0, 1, 1], [], []>} : vector<8x64xbf16>, vector<64x256xbf16>, vector<8x256xf32> -> vector<8x256xf32>
    %229 = arith.addf %227, %228 : vector<8x256xf32>
    %230 = vector.extract_strided_slice %229 {offsets = [0, 0], sizes = [8, 128], strides = [1, 1]} : vector<8x256xf32> to vector<8x128xf32>
    %231 = vector.extract_strided_slice %229 {offsets = [0, 128], sizes = [8, 128], strides = [1, 1]} : vector<8x256xf32> to vector<8x128xf32>
    %232 = arith.negf %230 : vector<8x128xf32>
    %233 = math.exp %232 : vector<8x128xf32>
    %cst_55 = arith.constant 1.000000e+00 : f32
    %234 = vector.broadcast %cst_55 : f32 to vector<8x128xf32>
    %235 = arith.addf %234, %233 : vector<8x128xf32>
    %236 = arith.divf %234, %235 : vector<8x128xf32>
    %237 = vector.broadcast %5 : vector<1x128xf32> to vector<8x128xf32>
    %238 = arith.mulf %231, %237 : vector<8x128xf32>
    %239 = arith.negf %238 : vector<8x128xf32>
    %240 = math.exp %239 : vector<8x128xf32>
    %cst_56 = arith.constant 1.000000e+00 : f32
    %241 = vector.broadcast %cst_56 : f32 to vector<8x128xf32>
    %242 = arith.addf %241, %240 : vector<8x128xf32>
    %243 = arith.divf %241, %242 : vector<8x128xf32>
    %244 = vector.broadcast %5 : vector<1x128xf32> to vector<8x128xf32>
    %245 = arith.mulf %243, %244 : vector<8x128xf32>
    %246 = vector.broadcast %8 : vector<1x128xf32> to vector<8x128xf32>
    %247 = arith.subf %245, %246 : vector<8x128xf32>
    %248 = arith.mulf %236, %247 : vector<8x128xf32>
    %249 = vector.extract_strided_slice %248 {offsets = [0, 64], sizes = [8, 64], strides = [1, 1]} : vector<8x128xf32> to vector<8x64xf32>
    %250 = vector.extract_strided_slice %236 {offsets = [0, 0], sizes = [8, 64], strides = [1, 1]} : vector<8x128xf32> to vector<8x64xf32>
    %251 = vector.extract_strided_slice %247 {offsets = [0, 0], sizes = [8, 64], strides = [1, 1]} : vector<8x128xf32> to vector<8x64xf32>
    %252 = arith.mulf %250, %160 : vector<8x64xf32>
    %253 = arith.addf %252, %249 : vector<8x64xf32>
    %254 = math.tanh %253 : vector<8x64xf32>
    %255 = arith.mulf %251, %254 : vector<8x64xf32>
    %256 = arith.truncf %255 : vector<8x64xf32> to vector<8x64xbf16>
    %257 = tpu.concatenate %163, %194 in 1 : vector<8x64xbf16>, vector<8x64xbf16> -> vector<8x128xbf16>
    %cst_57 = arith.constant dense<0.000000e+00> : vector<8x256xf32>
    %258 = tpu.matmul %257, %21, %cst_57 {dimension_numbers = #tpu.dot_dimension_numbers<[1], [0], [0], [1], [0, 0, 1, 1], [], []>} : vector<8x128xbf16>, vector<128x256xbf16>, vector<8x256xf32> -> vector<8x256xf32>
    %259 = vector.broadcast %27 : vector<1x256xf32> to vector<8x256xf32>
    %260 = arith.addf %258, %259 : vector<8x256xf32>
    %261 = vector.extract_strided_slice %260 {offsets = [0, 0], sizes = [8, 128], strides = [1, 1]} : vector<8x256xf32> to vector<8x128xf32>
    %262 = vector.extract_strided_slice %260 {offsets = [0, 128], sizes = [8, 128], strides = [1, 1]} : vector<8x256xf32> to vector<8x128xf32>
    %263 = arith.negf %261 : vector<8x128xf32>
    %264 = math.exp %263 : vector<8x128xf32>
    %cst_58 = arith.constant 1.000000e+00 : f32
    %265 = vector.broadcast %cst_58 : f32 to vector<8x128xf32>
    %266 = arith.addf %265, %264 : vector<8x128xf32>
    %267 = arith.divf %265, %266 : vector<8x128xf32>
    %268 = vector.broadcast %5 : vector<1x128xf32> to vector<8x128xf32>
    %269 = arith.mulf %262, %268 : vector<8x128xf32>
    %270 = arith.negf %269 : vector<8x128xf32>
    %271 = math.exp %270 : vector<8x128xf32>
    %cst_59 = arith.constant 1.000000e+00 : f32
    %272 = vector.broadcast %cst_59 : f32 to vector<8x128xf32>
    %273 = arith.addf %272, %271 : vector<8x128xf32>
    %274 = arith.divf %272, %273 : vector<8x128xf32>
    %275 = vector.broadcast %5 : vector<1x128xf32> to vector<8x128xf32>
    %276 = arith.mulf %274, %275 : vector<8x128xf32>
    %277 = vector.broadcast %8 : vector<1x128xf32> to vector<8x128xf32>
    %278 = arith.subf %276, %277 : vector<8x128xf32>
    %279 = arith.mulf %267, %278 : vector<8x128xf32>
    %280 = vector.extract_strided_slice %279 {offsets = [0, 64], sizes = [8, 64], strides = [1, 1]} : vector<8x128xf32> to vector<8x64xf32>
    %281 = vector.extract_strided_slice %267 {offsets = [0, 0], sizes = [8, 64], strides = [1, 1]} : vector<8x128xf32> to vector<8x64xf32>
    %282 = vector.extract_strided_slice %278 {offsets = [0, 0], sizes = [8, 64], strides = [1, 1]} : vector<8x128xf32> to vector<8x64xf32>
    %283 = arith.mulf %281, %191 : vector<8x64xf32>
    %284 = arith.addf %283, %280 : vector<8x64xf32>
    %285 = math.tanh %284 : vector<8x64xf32>
    %286 = arith.mulf %282, %285 : vector<8x64xf32>
    %287 = arith.truncf %286 : vector<8x64xf32> to vector<8x64xbf16>
    %288 = tpu.concatenate %194, %225 in 1 : vector<8x64xbf16>, vector<8x64xbf16> -> vector<8x128xbf16>
    %cst_60 = arith.constant dense<0.000000e+00> : vector<8x256xf32>
    %289 = tpu.matmul %288, %23, %cst_60 {dimension_numbers = #tpu.dot_dimension_numbers<[1], [0], [0], [1], [0, 0, 1, 1], [], []>} : vector<8x128xbf16>, vector<128x256xbf16>, vector<8x256xf32> -> vector<8x256xf32>
    %290 = vector.broadcast %29 : vector<1x256xf32> to vector<8x256xf32>
    %291 = arith.addf %289, %290 : vector<8x256xf32>
    %292 = vector.extract_strided_slice %291 {offsets = [0, 0], sizes = [8, 128], strides = [1, 1]} : vector<8x256xf32> to vector<8x128xf32>
    %293 = vector.extract_strided_slice %291 {offsets = [0, 128], sizes = [8, 128], strides = [1, 1]} : vector<8x256xf32> to vector<8x128xf32>
    %294 = arith.negf %292 : vector<8x128xf32>
    %295 = math.exp %294 : vector<8x128xf32>
    %cst_61 = arith.constant 1.000000e+00 : f32
    %296 = vector.broadcast %cst_61 : f32 to vector<8x128xf32>
    %297 = arith.addf %296, %295 : vector<8x128xf32>
    %298 = arith.divf %296, %297 : vector<8x128xf32>
    %299 = vector.broadcast %5 : vector<1x128xf32> to vector<8x128xf32>
    %300 = arith.mulf %293, %299 : vector<8x128xf32>
    %301 = arith.negf %300 : vector<8x128xf32>
    %302 = math.exp %301 : vector<8x128xf32>
    %cst_62 = arith.constant 1.000000e+00 : f32
    %303 = vector.broadcast %cst_62 : f32 to vector<8x128xf32>
    %304 = arith.addf %303, %302 : vector<8x128xf32>
    %305 = arith.divf %303, %304 : vector<8x128xf32>
    %306 = vector.broadcast %5 : vector<1x128xf32> to vector<8x128xf32>
    %307 = arith.mulf %305, %306 : vector<8x128xf32>
    %308 = vector.broadcast %8 : vector<1x128xf32> to vector<8x128xf32>
    %309 = arith.subf %307, %308 : vector<8x128xf32>
    %310 = arith.mulf %298, %309 : vector<8x128xf32>
    %311 = vector.extract_strided_slice %310 {offsets = [0, 64], sizes = [8, 64], strides = [1, 1]} : vector<8x128xf32> to vector<8x64xf32>
    %312 = vector.extract_strided_slice %298 {offsets = [0, 0], sizes = [8, 64], strides = [1, 1]} : vector<8x128xf32> to vector<8x64xf32>
    %313 = vector.extract_strided_slice %309 {offsets = [0, 0], sizes = [8, 64], strides = [1, 1]} : vector<8x128xf32> to vector<8x64xf32>
    %314 = arith.mulf %312, %222 : vector<8x64xf32>
    %315 = arith.addf %314, %311 : vector<8x64xf32>
    %316 = math.tanh %315 : vector<8x64xf32>
    %317 = arith.mulf %313, %316 : vector<8x64xf32>
    %318 = arith.truncf %317 : vector<8x64xf32> to vector<8x64xbf16>
    %319 = tpu.concatenate %225, %35 in 1 : vector<8x64xbf16>, vector<8x64xbf16> -> vector<8x128xbf16>
    %cst_63 = arith.constant dense<0.000000e+00> : vector<8x256xf32>
    %320 = tpu.matmul %319, %25, %cst_63 {dimension_numbers = #tpu.dot_dimension_numbers<[1], [0], [0], [1], [0, 0, 1, 1], [], []>} : vector<8x128xbf16>, vector<128x256xbf16>, vector<8x256xf32> -> vector<8x256xf32>
    %321 = vector.broadcast %31 : vector<1x256xf32> to vector<8x256xf32>
    %322 = arith.addf %320, %321 : vector<8x256xf32>
    %323 = vector.extract_strided_slice %322 {offsets = [0, 0], sizes = [8, 128], strides = [1, 1]} : vector<8x256xf32> to vector<8x128xf32>
    %324 = vector.extract_strided_slice %322 {offsets = [0, 128], sizes = [8, 128], strides = [1, 1]} : vector<8x256xf32> to vector<8x128xf32>
    %325 = arith.negf %323 : vector<8x128xf32>
    %326 = math.exp %325 : vector<8x128xf32>
    %cst_64 = arith.constant 1.000000e+00 : f32
    %327 = vector.broadcast %cst_64 : f32 to vector<8x128xf32>
    %328 = arith.addf %327, %326 : vector<8x128xf32>
    %329 = arith.divf %327, %328 : vector<8x128xf32>
    %330 = vector.broadcast %5 : vector<1x128xf32> to vector<8x128xf32>
    %331 = arith.mulf %324, %330 : vector<8x128xf32>
    %332 = arith.negf %331 : vector<8x128xf32>
    %333 = math.exp %332 : vector<8x128xf32>
    %cst_65 = arith.constant 1.000000e+00 : f32
    %334 = vector.broadcast %cst_65 : f32 to vector<8x128xf32>
    %335 = arith.addf %334, %333 : vector<8x128xf32>
    %336 = arith.divf %334, %335 : vector<8x128xf32>
    %337 = vector.broadcast %5 : vector<1x128xf32> to vector<8x128xf32>
    %338 = arith.mulf %336, %337 : vector<8x128xf32>
    %339 = vector.broadcast %8 : vector<1x128xf32> to vector<8x128xf32>
    %340 = arith.subf %338, %339 : vector<8x128xf32>
    %341 = arith.mulf %329, %340 : vector<8x128xf32>
    %342 = vector.extract_strided_slice %341 {offsets = [0, 64], sizes = [8, 64], strides = [1, 1]} : vector<8x128xf32> to vector<8x64xf32>
    %343 = vector.extract_strided_slice %329 {offsets = [0, 0], sizes = [8, 64], strides = [1, 1]} : vector<8x128xf32> to vector<8x64xf32>
    %344 = vector.extract_strided_slice %340 {offsets = [0, 0], sizes = [8, 64], strides = [1, 1]} : vector<8x128xf32> to vector<8x64xf32>
    %345 = arith.mulf %343, %39 : vector<8x64xf32>
    %346 = arith.addf %345, %342 : vector<8x64xf32>
    %347 = math.tanh %346 : vector<8x64xf32>
    %348 = arith.mulf %344, %347 : vector<8x64xf32>
    %349 = arith.truncf %348 : vector<8x64xf32> to vector<8x64xbf16>
    %350 = vector.extract_strided_slice %18 {offsets = [4, 0, 0], sizes = [1, 8, 256], strides = [1, 1, 1]} : vector<8x8x256xf32> to vector<1x8x256xf32>
    %351 = vector.shape_cast %350 : vector<1x8x256xf32> to vector<8x256xf32>
    %cst_66 = arith.constant dense<0.000000e+00> : vector<8x256xf32>
    %352 = tpu.matmul %256, %19, %cst_66 {dimension_numbers = #tpu.dot_dimension_numbers<[1], [0], [0], [1], [0, 0, 1, 1], [], []>} : vector<8x64xbf16>, vector<64x256xbf16>, vector<8x256xf32> -> vector<8x256xf32>
    %353 = arith.addf %351, %352 : vector<8x256xf32>
    %354 = vector.extract_strided_slice %353 {offsets = [0, 0], sizes = [8, 128], strides = [1, 1]} : vector<8x256xf32> to vector<8x128xf32>
    %355 = vector.extract_strided_slice %353 {offsets = [0, 128], sizes = [8, 128], strides = [1, 1]} : vector<8x256xf32> to vector<8x128xf32>
    %356 = arith.negf %354 : vector<8x128xf32>
    %357 = math.exp %356 : vector<8x128xf32>
    %cst_67 = arith.constant 1.000000e+00 : f32
    %358 = vector.broadcast %cst_67 : f32 to vector<8x128xf32>
    %359 = arith.addf %358, %357 : vector<8x128xf32>
    %360 = arith.divf %358, %359 : vector<8x128xf32>
    %361 = vector.broadcast %5 : vector<1x128xf32> to vector<8x128xf32>
    %362 = arith.mulf %355, %361 : vector<8x128xf32>
    %363 = arith.negf %362 : vector<8x128xf32>
    %364 = math.exp %363 : vector<8x128xf32>
    %cst_68 = arith.constant 1.000000e+00 : f32
    %365 = vector.broadcast %cst_68 : f32 to vector<8x128xf32>
    %366 = arith.addf %365, %364 : vector<8x128xf32>
    %367 = arith.divf %365, %366 : vector<8x128xf32>
    %368 = vector.broadcast %5 : vector<1x128xf32> to vector<8x128xf32>
    %369 = arith.mulf %367, %368 : vector<8x128xf32>
    %370 = vector.broadcast %8 : vector<1x128xf32> to vector<8x128xf32>
    %371 = arith.subf %369, %370 : vector<8x128xf32>
    %372 = arith.mulf %360, %371 : vector<8x128xf32>
    %373 = vector.extract_strided_slice %372 {offsets = [0, 64], sizes = [8, 64], strides = [1, 1]} : vector<8x128xf32> to vector<8x64xf32>
    %374 = vector.extract_strided_slice %360 {offsets = [0, 0], sizes = [8, 64], strides = [1, 1]} : vector<8x128xf32> to vector<8x64xf32>
    %375 = vector.extract_strided_slice %371 {offsets = [0, 0], sizes = [8, 64], strides = [1, 1]} : vector<8x128xf32> to vector<8x64xf32>
    %376 = arith.mulf %374, %253 : vector<8x64xf32>
    %377 = arith.addf %376, %373 : vector<8x64xf32>
    %378 = math.tanh %377 : vector<8x64xf32>
    %379 = arith.mulf %375, %378 : vector<8x64xf32>
    %380 = arith.truncf %379 : vector<8x64xf32> to vector<8x64xbf16>
    %381 = tpu.concatenate %256, %287 in 1 : vector<8x64xbf16>, vector<8x64xbf16> -> vector<8x128xbf16>
    %cst_69 = arith.constant dense<0.000000e+00> : vector<8x256xf32>
    %382 = tpu.matmul %381, %21, %cst_69 {dimension_numbers = #tpu.dot_dimension_numbers<[1], [0], [0], [1], [0, 0, 1, 1], [], []>} : vector<8x128xbf16>, vector<128x256xbf16>, vector<8x256xf32> -> vector<8x256xf32>
    %383 = vector.broadcast %27 : vector<1x256xf32> to vector<8x256xf32>
    %384 = arith.addf %382, %383 : vector<8x256xf32>
    %385 = vector.extract_strided_slice %384 {offsets = [0, 0], sizes = [8, 128], strides = [1, 1]} : vector<8x256xf32> to vector<8x128xf32>
    %386 = vector.extract_strided_slice %384 {offsets = [0, 128], sizes = [8, 128], strides = [1, 1]} : vector<8x256xf32> to vector<8x128xf32>
    %387 = arith.negf %385 : vector<8x128xf32>
    %388 = math.exp %387 : vector<8x128xf32>
    %cst_70 = arith.constant 1.000000e+00 : f32
    %389 = vector.broadcast %cst_70 : f32 to vector<8x128xf32>
    %390 = arith.addf %389, %388 : vector<8x128xf32>
    %391 = arith.divf %389, %390 : vector<8x128xf32>
    %392 = vector.broadcast %5 : vector<1x128xf32> to vector<8x128xf32>
    %393 = arith.mulf %386, %392 : vector<8x128xf32>
    %394 = arith.negf %393 : vector<8x128xf32>
    %395 = math.exp %394 : vector<8x128xf32>
    %cst_71 = arith.constant 1.000000e+00 : f32
    %396 = vector.broadcast %cst_71 : f32 to vector<8x128xf32>
    %397 = arith.addf %396, %395 : vector<8x128xf32>
    %398 = arith.divf %396, %397 : vector<8x128xf32>
    %399 = vector.broadcast %5 : vector<1x128xf32> to vector<8x128xf32>
    %400 = arith.mulf %398, %399 : vector<8x128xf32>
    %401 = vector.broadcast %8 : vector<1x128xf32> to vector<8x128xf32>
    %402 = arith.subf %400, %401 : vector<8x128xf32>
    %403 = arith.mulf %391, %402 : vector<8x128xf32>
    %404 = vector.extract_strided_slice %403 {offsets = [0, 64], sizes = [8, 64], strides = [1, 1]} : vector<8x128xf32> to vector<8x64xf32>
    %405 = vector.extract_strided_slice %391 {offsets = [0, 0], sizes = [8, 64], strides = [1, 1]} : vector<8x128xf32> to vector<8x64xf32>
    %406 = vector.extract_strided_slice %402 {offsets = [0, 0], sizes = [8, 64], strides = [1, 1]} : vector<8x128xf32> to vector<8x64xf32>
    %407 = arith.mulf %405, %284 : vector<8x64xf32>
    %408 = arith.addf %407, %404 : vector<8x64xf32>
    %409 = math.tanh %408 : vector<8x64xf32>
    %410 = arith.mulf %406, %409 : vector<8x64xf32>
    %411 = arith.truncf %410 : vector<8x64xf32> to vector<8x64xbf16>
    %412 = tpu.concatenate %287, %318 in 1 : vector<8x64xbf16>, vector<8x64xbf16> -> vector<8x128xbf16>
    %cst_72 = arith.constant dense<0.000000e+00> : vector<8x256xf32>
    %413 = tpu.matmul %412, %23, %cst_72 {dimension_numbers = #tpu.dot_dimension_numbers<[1], [0], [0], [1], [0, 0, 1, 1], [], []>} : vector<8x128xbf16>, vector<128x256xbf16>, vector<8x256xf32> -> vector<8x256xf32>
    %414 = vector.broadcast %29 : vector<1x256xf32> to vector<8x256xf32>
    %415 = arith.addf %413, %414 : vector<8x256xf32>
    %416 = vector.extract_strided_slice %415 {offsets = [0, 0], sizes = [8, 128], strides = [1, 1]} : vector<8x256xf32> to vector<8x128xf32>
    %417 = vector.extract_strided_slice %415 {offsets = [0, 128], sizes = [8, 128], strides = [1, 1]} : vector<8x256xf32> to vector<8x128xf32>
    %418 = arith.negf %416 : vector<8x128xf32>
    %419 = math.exp %418 : vector<8x128xf32>
    %cst_73 = arith.constant 1.000000e+00 : f32
    %420 = vector.broadcast %cst_73 : f32 to vector<8x128xf32>
    %421 = arith.addf %420, %419 : vector<8x128xf32>
    %422 = arith.divf %420, %421 : vector<8x128xf32>
    %423 = vector.broadcast %5 : vector<1x128xf32> to vector<8x128xf32>
    %424 = arith.mulf %417, %423 : vector<8x128xf32>
    %425 = arith.negf %424 : vector<8x128xf32>
    %426 = math.exp %425 : vector<8x128xf32>
    %cst_74 = arith.constant 1.000000e+00 : f32
    %427 = vector.broadcast %cst_74 : f32 to vector<8x128xf32>
    %428 = arith.addf %427, %426 : vector<8x128xf32>
    %429 = arith.divf %427, %428 : vector<8x128xf32>
    %430 = vector.broadcast %5 : vector<1x128xf32> to vector<8x128xf32>
    %431 = arith.mulf %429, %430 : vector<8x128xf32>
    %432 = vector.broadcast %8 : vector<1x128xf32> to vector<8x128xf32>
    %433 = arith.subf %431, %432 : vector<8x128xf32>
    %434 = arith.mulf %422, %433 : vector<8x128xf32>
    %435 = vector.extract_strided_slice %434 {offsets = [0, 64], sizes = [8, 64], strides = [1, 1]} : vector<8x128xf32> to vector<8x64xf32>
    %436 = vector.extract_strided_slice %422 {offsets = [0, 0], sizes = [8, 64], strides = [1, 1]} : vector<8x128xf32> to vector<8x64xf32>
    %437 = vector.extract_strided_slice %433 {offsets = [0, 0], sizes = [8, 64], strides = [1, 1]} : vector<8x128xf32> to vector<8x64xf32>
    %438 = arith.mulf %436, %315 : vector<8x64xf32>
    %439 = arith.addf %438, %435 : vector<8x64xf32>
    %440 = math.tanh %439 : vector<8x64xf32>
    %441 = arith.mulf %437, %440 : vector<8x64xf32>
    %442 = arith.truncf %441 : vector<8x64xf32> to vector<8x64xbf16>
    %443 = tpu.concatenate %318, %349 in 1 : vector<8x64xbf16>, vector<8x64xbf16> -> vector<8x128xbf16>
    %cst_75 = arith.constant dense<0.000000e+00> : vector<8x256xf32>
    %444 = tpu.matmul %443, %25, %cst_75 {dimension_numbers = #tpu.dot_dimension_numbers<[1], [0], [0], [1], [0, 0, 1, 1], [], []>} : vector<8x128xbf16>, vector<128x256xbf16>, vector<8x256xf32> -> vector<8x256xf32>
    %445 = vector.broadcast %31 : vector<1x256xf32> to vector<8x256xf32>
    %446 = arith.addf %444, %445 : vector<8x256xf32>
    %447 = vector.extract_strided_slice %446 {offsets = [0, 0], sizes = [8, 128], strides = [1, 1]} : vector<8x256xf32> to vector<8x128xf32>
    %448 = vector.extract_strided_slice %446 {offsets = [0, 128], sizes = [8, 128], strides = [1, 1]} : vector<8x256xf32> to vector<8x128xf32>
    %449 = arith.negf %447 : vector<8x128xf32>
    %450 = math.exp %449 : vector<8x128xf32>
    %cst_76 = arith.constant 1.000000e+00 : f32
    %451 = vector.broadcast %cst_76 : f32 to vector<8x128xf32>
    %452 = arith.addf %451, %450 : vector<8x128xf32>
    %453 = arith.divf %451, %452 : vector<8x128xf32>
    %454 = vector.broadcast %5 : vector<1x128xf32> to vector<8x128xf32>
    %455 = arith.mulf %448, %454 : vector<8x128xf32>
    %456 = arith.negf %455 : vector<8x128xf32>
    %457 = math.exp %456 : vector<8x128xf32>
    %cst_77 = arith.constant 1.000000e+00 : f32
    %458 = vector.broadcast %cst_77 : f32 to vector<8x128xf32>
    %459 = arith.addf %458, %457 : vector<8x128xf32>
    %460 = arith.divf %458, %459 : vector<8x128xf32>
    %461 = vector.broadcast %5 : vector<1x128xf32> to vector<8x128xf32>
    %462 = arith.mulf %460, %461 : vector<8x128xf32>
    %463 = vector.broadcast %8 : vector<1x128xf32> to vector<8x128xf32>
    %464 = arith.subf %462, %463 : vector<8x128xf32>
    %465 = arith.mulf %453, %464 : vector<8x128xf32>
    %466 = vector.extract_strided_slice %465 {offsets = [0, 64], sizes = [8, 64], strides = [1, 1]} : vector<8x128xf32> to vector<8x64xf32>
    %467 = vector.extract_strided_slice %453 {offsets = [0, 0], sizes = [8, 64], strides = [1, 1]} : vector<8x128xf32> to vector<8x64xf32>
    %468 = vector.extract_strided_slice %464 {offsets = [0, 0], sizes = [8, 64], strides = [1, 1]} : vector<8x128xf32> to vector<8x64xf32>
    %469 = arith.mulf %467, %346 : vector<8x64xf32>
    %470 = arith.addf %469, %466 : vector<8x64xf32>
    %471 = math.tanh %470 : vector<8x64xf32>
    %472 = arith.mulf %468, %471 : vector<8x64xf32>
    %473 = arith.truncf %472 : vector<8x64xf32> to vector<8x64xbf16>
    %474 = vector.extract_strided_slice %18 {offsets = [5, 0, 0], sizes = [1, 8, 256], strides = [1, 1, 1]} : vector<8x8x256xf32> to vector<1x8x256xf32>
    %475 = vector.shape_cast %474 : vector<1x8x256xf32> to vector<8x256xf32>
    %cst_78 = arith.constant dense<0.000000e+00> : vector<8x256xf32>
    %476 = tpu.matmul %380, %19, %cst_78 {dimension_numbers = #tpu.dot_dimension_numbers<[1], [0], [0], [1], [0, 0, 1, 1], [], []>} : vector<8x64xbf16>, vector<64x256xbf16>, vector<8x256xf32> -> vector<8x256xf32>
    %477 = arith.addf %475, %476 : vector<8x256xf32>
    %478 = vector.extract_strided_slice %477 {offsets = [0, 0], sizes = [8, 128], strides = [1, 1]} : vector<8x256xf32> to vector<8x128xf32>
    %479 = vector.extract_strided_slice %477 {offsets = [0, 128], sizes = [8, 128], strides = [1, 1]} : vector<8x256xf32> to vector<8x128xf32>
    %480 = arith.negf %478 : vector<8x128xf32>
    %481 = math.exp %480 : vector<8x128xf32>
    %cst_79 = arith.constant 1.000000e+00 : f32
    %482 = vector.broadcast %cst_79 : f32 to vector<8x128xf32>
    %483 = arith.addf %482, %481 : vector<8x128xf32>
    %484 = arith.divf %482, %483 : vector<8x128xf32>
    %485 = vector.broadcast %5 : vector<1x128xf32> to vector<8x128xf32>
    %486 = arith.mulf %479, %485 : vector<8x128xf32>
    %487 = arith.negf %486 : vector<8x128xf32>
    %488 = math.exp %487 : vector<8x128xf32>
    %cst_80 = arith.constant 1.000000e+00 : f32
    %489 = vector.broadcast %cst_80 : f32 to vector<8x128xf32>
    %490 = arith.addf %489, %488 : vector<8x128xf32>
    %491 = arith.divf %489, %490 : vector<8x128xf32>
    %492 = vector.broadcast %5 : vector<1x128xf32> to vector<8x128xf32>
    %493 = arith.mulf %491, %492 : vector<8x128xf32>
    %494 = vector.broadcast %8 : vector<1x128xf32> to vector<8x128xf32>
    %495 = arith.subf %493, %494 : vector<8x128xf32>
    %496 = arith.mulf %484, %495 : vector<8x128xf32>
    %497 = vector.extract_strided_slice %496 {offsets = [0, 64], sizes = [8, 64], strides = [1, 1]} : vector<8x128xf32> to vector<8x64xf32>
    %498 = vector.extract_strided_slice %484 {offsets = [0, 0], sizes = [8, 64], strides = [1, 1]} : vector<8x128xf32> to vector<8x64xf32>
    %499 = vector.extract_strided_slice %495 {offsets = [0, 0], sizes = [8, 64], strides = [1, 1]} : vector<8x128xf32> to vector<8x64xf32>
    %500 = arith.mulf %498, %377 : vector<8x64xf32>
    %501 = arith.addf %500, %497 : vector<8x64xf32>
    %502 = math.tanh %501 : vector<8x64xf32>
    %503 = arith.mulf %499, %502 : vector<8x64xf32>
    %504 = arith.truncf %503 : vector<8x64xf32> to vector<8x64xbf16>
    %505 = tpu.concatenate %380, %411 in 1 : vector<8x64xbf16>, vector<8x64xbf16> -> vector<8x128xbf16>
    %cst_81 = arith.constant dense<0.000000e+00> : vector<8x256xf32>
    %506 = tpu.matmul %505, %21, %cst_81 {dimension_numbers = #tpu.dot_dimension_numbers<[1], [0], [0], [1], [0, 0, 1, 1], [], []>} : vector<8x128xbf16>, vector<128x256xbf16>, vector<8x256xf32> -> vector<8x256xf32>
    %507 = vector.broadcast %27 : vector<1x256xf32> to vector<8x256xf32>
    %508 = arith.addf %506, %507 : vector<8x256xf32>
    %509 = vector.extract_strided_slice %508 {offsets = [0, 0], sizes = [8, 128], strides = [1, 1]} : vector<8x256xf32> to vector<8x128xf32>
    %510 = vector.extract_strided_slice %508 {offsets = [0, 128], sizes = [8, 128], strides = [1, 1]} : vector<8x256xf32> to vector<8x128xf32>
    %511 = arith.negf %509 : vector<8x128xf32>
    %512 = math.exp %511 : vector<8x128xf32>
    %cst_82 = arith.constant 1.000000e+00 : f32
    %513 = vector.broadcast %cst_82 : f32 to vector<8x128xf32>
    %514 = arith.addf %513, %512 : vector<8x128xf32>
    %515 = arith.divf %513, %514 : vector<8x128xf32>
    %516 = vector.broadcast %5 : vector<1x128xf32> to vector<8x128xf32>
    %517 = arith.mulf %510, %516 : vector<8x128xf32>
    %518 = arith.negf %517 : vector<8x128xf32>
    %519 = math.exp %518 : vector<8x128xf32>
    %cst_83 = arith.constant 1.000000e+00 : f32
    %520 = vector.broadcast %cst_83 : f32 to vector<8x128xf32>
    %521 = arith.addf %520, %519 : vector<8x128xf32>
    %522 = arith.divf %520, %521 : vector<8x128xf32>
    %523 = vector.broadcast %5 : vector<1x128xf32> to vector<8x128xf32>
    %524 = arith.mulf %522, %523 : vector<8x128xf32>
    %525 = vector.broadcast %8 : vector<1x128xf32> to vector<8x128xf32>
    %526 = arith.subf %524, %525 : vector<8x128xf32>
    %527 = arith.mulf %515, %526 : vector<8x128xf32>
    %528 = vector.extract_strided_slice %527 {offsets = [0, 64], sizes = [8, 64], strides = [1, 1]} : vector<8x128xf32> to vector<8x64xf32>
    %529 = vector.extract_strided_slice %515 {offsets = [0, 0], sizes = [8, 64], strides = [1, 1]} : vector<8x128xf32> to vector<8x64xf32>
    %530 = vector.extract_strided_slice %526 {offsets = [0, 0], sizes = [8, 64], strides = [1, 1]} : vector<8x128xf32> to vector<8x64xf32>
    %531 = arith.mulf %529, %408 : vector<8x64xf32>
    %532 = arith.addf %531, %528 : vector<8x64xf32>
    %533 = math.tanh %532 : vector<8x64xf32>
    %534 = arith.mulf %530, %533 : vector<8x64xf32>
    %535 = arith.truncf %534 : vector<8x64xf32> to vector<8x64xbf16>
    %536 = tpu.concatenate %411, %442 in 1 : vector<8x64xbf16>, vector<8x64xbf16> -> vector<8x128xbf16>
    %cst_84 = arith.constant dense<0.000000e+00> : vector<8x256xf32>
    %537 = tpu.matmul %536, %23, %cst_84 {dimension_numbers = #tpu.dot_dimension_numbers<[1], [0], [0], [1], [0, 0, 1, 1], [], []>} : vector<8x128xbf16>, vector<128x256xbf16>, vector<8x256xf32> -> vector<8x256xf32>
    %538 = vector.broadcast %29 : vector<1x256xf32> to vector<8x256xf32>
    %539 = arith.addf %537, %538 : vector<8x256xf32>
    %540 = vector.extract_strided_slice %539 {offsets = [0, 0], sizes = [8, 128], strides = [1, 1]} : vector<8x256xf32> to vector<8x128xf32>
    %541 = vector.extract_strided_slice %539 {offsets = [0, 128], sizes = [8, 128], strides = [1, 1]} : vector<8x256xf32> to vector<8x128xf32>
    %542 = arith.negf %540 : vector<8x128xf32>
    %543 = math.exp %542 : vector<8x128xf32>
    %cst_85 = arith.constant 1.000000e+00 : f32
    %544 = vector.broadcast %cst_85 : f32 to vector<8x128xf32>
    %545 = arith.addf %544, %543 : vector<8x128xf32>
    %546 = arith.divf %544, %545 : vector<8x128xf32>
    %547 = vector.broadcast %5 : vector<1x128xf32> to vector<8x128xf32>
    %548 = arith.mulf %541, %547 : vector<8x128xf32>
    %549 = arith.negf %548 : vector<8x128xf32>
    %550 = math.exp %549 : vector<8x128xf32>
    %cst_86 = arith.constant 1.000000e+00 : f32
    %551 = vector.broadcast %cst_86 : f32 to vector<8x128xf32>
    %552 = arith.addf %551, %550 : vector<8x128xf32>
    %553 = arith.divf %551, %552 : vector<8x128xf32>
    %554 = vector.broadcast %5 : vector<1x128xf32> to vector<8x128xf32>
    %555 = arith.mulf %553, %554 : vector<8x128xf32>
    %556 = vector.broadcast %8 : vector<1x128xf32> to vector<8x128xf32>
    %557 = arith.subf %555, %556 : vector<8x128xf32>
    %558 = arith.mulf %546, %557 : vector<8x128xf32>
    %559 = vector.extract_strided_slice %558 {offsets = [0, 64], sizes = [8, 64], strides = [1, 1]} : vector<8x128xf32> to vector<8x64xf32>
    %560 = vector.extract_strided_slice %546 {offsets = [0, 0], sizes = [8, 64], strides = [1, 1]} : vector<8x128xf32> to vector<8x64xf32>
    %561 = vector.extract_strided_slice %557 {offsets = [0, 0], sizes = [8, 64], strides = [1, 1]} : vector<8x128xf32> to vector<8x64xf32>
    %562 = arith.mulf %560, %439 : vector<8x64xf32>
    %563 = arith.addf %562, %559 : vector<8x64xf32>
    %564 = math.tanh %563 : vector<8x64xf32>
    %565 = arith.mulf %561, %564 : vector<8x64xf32>
    %566 = arith.truncf %565 : vector<8x64xf32> to vector<8x64xbf16>
    %567 = tpu.concatenate %442, %473 in 1 : vector<8x64xbf16>, vector<8x64xbf16> -> vector<8x128xbf16>
    %cst_87 = arith.constant dense<0.000000e+00> : vector<8x256xf32>
    %568 = tpu.matmul %567, %25, %cst_87 {dimension_numbers = #tpu.dot_dimension_numbers<[1], [0], [0], [1], [0, 0, 1, 1], [], []>} : vector<8x128xbf16>, vector<128x256xbf16>, vector<8x256xf32> -> vector<8x256xf32>
    %569 = vector.broadcast %31 : vector<1x256xf32> to vector<8x256xf32>
    %570 = arith.addf %568, %569 : vector<8x256xf32>
    %571 = vector.extract_strided_slice %570 {offsets = [0, 0], sizes = [8, 128], strides = [1, 1]} : vector<8x256xf32> to vector<8x128xf32>
    %572 = vector.extract_strided_slice %570 {offsets = [0, 128], sizes = [8, 128], strides = [1, 1]} : vector<8x256xf32> to vector<8x128xf32>
    %573 = arith.negf %571 : vector<8x128xf32>
    %574 = math.exp %573 : vector<8x128xf32>
    %cst_88 = arith.constant 1.000000e+00 : f32
    %575 = vector.broadcast %cst_88 : f32 to vector<8x128xf32>
    %576 = arith.addf %575, %574 : vector<8x128xf32>
    %577 = arith.divf %575, %576 : vector<8x128xf32>
    %578 = vector.broadcast %5 : vector<1x128xf32> to vector<8x128xf32>
    %579 = arith.mulf %572, %578 : vector<8x128xf32>
    %580 = arith.negf %579 : vector<8x128xf32>
    %581 = math.exp %580 : vector<8x128xf32>
    %cst_89 = arith.constant 1.000000e+00 : f32
    %582 = vector.broadcast %cst_89 : f32 to vector<8x128xf32>
    %583 = arith.addf %582, %581 : vector<8x128xf32>
    %584 = arith.divf %582, %583 : vector<8x128xf32>
    %585 = vector.broadcast %5 : vector<1x128xf32> to vector<8x128xf32>
    %586 = arith.mulf %584, %585 : vector<8x128xf32>
    %587 = vector.broadcast %8 : vector<1x128xf32> to vector<8x128xf32>
    %588 = arith.subf %586, %587 : vector<8x128xf32>
    %589 = arith.mulf %577, %588 : vector<8x128xf32>
    %590 = vector.extract_strided_slice %589 {offsets = [0, 64], sizes = [8, 64], strides = [1, 1]} : vector<8x128xf32> to vector<8x64xf32>
    %591 = vector.extract_strided_slice %577 {offsets = [0, 0], sizes = [8, 64], strides = [1, 1]} : vector<8x128xf32> to vector<8x64xf32>
    %592 = vector.extract_strided_slice %588 {offsets = [0, 0], sizes = [8, 64], strides = [1, 1]} : vector<8x128xf32> to vector<8x64xf32>
    %593 = arith.mulf %591, %470 : vector<8x64xf32>
    %594 = arith.addf %593, %590 : vector<8x64xf32>
    %595 = math.tanh %594 : vector<8x64xf32>
    %596 = arith.mulf %592, %595 : vector<8x64xf32>
    %597 = arith.truncf %596 : vector<8x64xf32> to vector<8x64xbf16>
    %598 = vector.extract_strided_slice %18 {offsets = [6, 0, 0], sizes = [1, 8, 256], strides = [1, 1, 1]} : vector<8x8x256xf32> to vector<1x8x256xf32>
    %599 = vector.shape_cast %598 : vector<1x8x256xf32> to vector<8x256xf32>
    %cst_90 = arith.constant dense<0.000000e+00> : vector<8x256xf32>
    %600 = tpu.matmul %504, %19, %cst_90 {dimension_numbers = #tpu.dot_dimension_numbers<[1], [0], [0], [1], [0, 0, 1, 1], [], []>} : vector<8x64xbf16>, vector<64x256xbf16>, vector<8x256xf32> -> vector<8x256xf32>
    %601 = arith.addf %599, %600 : vector<8x256xf32>
    %602 = vector.extract_strided_slice %601 {offsets = [0, 0], sizes = [8, 128], strides = [1, 1]} : vector<8x256xf32> to vector<8x128xf32>
    %603 = vector.extract_strided_slice %601 {offsets = [0, 128], sizes = [8, 128], strides = [1, 1]} : vector<8x256xf32> to vector<8x128xf32>
    %604 = arith.negf %602 : vector<8x128xf32>
    %605 = math.exp %604 : vector<8x128xf32>
    %cst_91 = arith.constant 1.000000e+00 : f32
    %606 = vector.broadcast %cst_91 : f32 to vector<8x128xf32>
    %607 = arith.addf %606, %605 : vector<8x128xf32>
    %608 = arith.divf %606, %607 : vector<8x128xf32>
    %609 = vector.broadcast %5 : vector<1x128xf32> to vector<8x128xf32>
    %610 = arith.mulf %603, %609 : vector<8x128xf32>
    %611 = arith.negf %610 : vector<8x128xf32>
    %612 = math.exp %611 : vector<8x128xf32>
    %cst_92 = arith.constant 1.000000e+00 : f32
    %613 = vector.broadcast %cst_92 : f32 to vector<8x128xf32>
    %614 = arith.addf %613, %612 : vector<8x128xf32>
    %615 = arith.divf %613, %614 : vector<8x128xf32>
    %616 = vector.broadcast %5 : vector<1x128xf32> to vector<8x128xf32>
    %617 = arith.mulf %615, %616 : vector<8x128xf32>
    %618 = vector.broadcast %8 : vector<1x128xf32> to vector<8x128xf32>
    %619 = arith.subf %617, %618 : vector<8x128xf32>
    %620 = arith.mulf %608, %619 : vector<8x128xf32>
    %621 = vector.extract_strided_slice %620 {offsets = [0, 64], sizes = [8, 64], strides = [1, 1]} : vector<8x128xf32> to vector<8x64xf32>
    %622 = vector.extract_strided_slice %608 {offsets = [0, 0], sizes = [8, 64], strides = [1, 1]} : vector<8x128xf32> to vector<8x64xf32>
    %623 = vector.extract_strided_slice %619 {offsets = [0, 0], sizes = [8, 64], strides = [1, 1]} : vector<8x128xf32> to vector<8x64xf32>
    %624 = arith.mulf %622, %501 : vector<8x64xf32>
    %625 = arith.addf %624, %621 : vector<8x64xf32>
    %626 = math.tanh %625 : vector<8x64xf32>
    %627 = arith.mulf %623, %626 : vector<8x64xf32>
    %628 = arith.truncf %627 : vector<8x64xf32> to vector<8x64xbf16>
    %629 = tpu.concatenate %504, %535 in 1 : vector<8x64xbf16>, vector<8x64xbf16> -> vector<8x128xbf16>
    %cst_93 = arith.constant dense<0.000000e+00> : vector<8x256xf32>
    %630 = tpu.matmul %629, %21, %cst_93 {dimension_numbers = #tpu.dot_dimension_numbers<[1], [0], [0], [1], [0, 0, 1, 1], [], []>} : vector<8x128xbf16>, vector<128x256xbf16>, vector<8x256xf32> -> vector<8x256xf32>
    %631 = vector.broadcast %27 : vector<1x256xf32> to vector<8x256xf32>
    %632 = arith.addf %630, %631 : vector<8x256xf32>
    %633 = vector.extract_strided_slice %632 {offsets = [0, 0], sizes = [8, 128], strides = [1, 1]} : vector<8x256xf32> to vector<8x128xf32>
    %634 = vector.extract_strided_slice %632 {offsets = [0, 128], sizes = [8, 128], strides = [1, 1]} : vector<8x256xf32> to vector<8x128xf32>
    %635 = arith.negf %633 : vector<8x128xf32>
    %636 = math.exp %635 : vector<8x128xf32>
    %cst_94 = arith.constant 1.000000e+00 : f32
    %637 = vector.broadcast %cst_94 : f32 to vector<8x128xf32>
    %638 = arith.addf %637, %636 : vector<8x128xf32>
    %639 = arith.divf %637, %638 : vector<8x128xf32>
    %640 = vector.broadcast %5 : vector<1x128xf32> to vector<8x128xf32>
    %641 = arith.mulf %634, %640 : vector<8x128xf32>
    %642 = arith.negf %641 : vector<8x128xf32>
    %643 = math.exp %642 : vector<8x128xf32>
    %cst_95 = arith.constant 1.000000e+00 : f32
    %644 = vector.broadcast %cst_95 : f32 to vector<8x128xf32>
    %645 = arith.addf %644, %643 : vector<8x128xf32>
    %646 = arith.divf %644, %645 : vector<8x128xf32>
    %647 = vector.broadcast %5 : vector<1x128xf32> to vector<8x128xf32>
    %648 = arith.mulf %646, %647 : vector<8x128xf32>
    %649 = vector.broadcast %8 : vector<1x128xf32> to vector<8x128xf32>
    %650 = arith.subf %648, %649 : vector<8x128xf32>
    %651 = arith.mulf %639, %650 : vector<8x128xf32>
    %652 = vector.extract_strided_slice %651 {offsets = [0, 64], sizes = [8, 64], strides = [1, 1]} : vector<8x128xf32> to vector<8x64xf32>
    %653 = vector.extract_strided_slice %639 {offsets = [0, 0], sizes = [8, 64], strides = [1, 1]} : vector<8x128xf32> to vector<8x64xf32>
    %654 = vector.extract_strided_slice %650 {offsets = [0, 0], sizes = [8, 64], strides = [1, 1]} : vector<8x128xf32> to vector<8x64xf32>
    %655 = arith.mulf %653, %532 : vector<8x64xf32>
    %656 = arith.addf %655, %652 : vector<8x64xf32>
    %657 = math.tanh %656 : vector<8x64xf32>
    %658 = arith.mulf %654, %657 : vector<8x64xf32>
    %659 = arith.truncf %658 : vector<8x64xf32> to vector<8x64xbf16>
    %660 = tpu.concatenate %535, %566 in 1 : vector<8x64xbf16>, vector<8x64xbf16> -> vector<8x128xbf16>
    %cst_96 = arith.constant dense<0.000000e+00> : vector<8x256xf32>
    %661 = tpu.matmul %660, %23, %cst_96 {dimension_numbers = #tpu.dot_dimension_numbers<[1], [0], [0], [1], [0, 0, 1, 1], [], []>} : vector<8x128xbf16>, vector<128x256xbf16>, vector<8x256xf32> -> vector<8x256xf32>
    %662 = vector.broadcast %29 : vector<1x256xf32> to vector<8x256xf32>
    %663 = arith.addf %661, %662 : vector<8x256xf32>
    %664 = vector.extract_strided_slice %663 {offsets = [0, 0], sizes = [8, 128], strides = [1, 1]} : vector<8x256xf32> to vector<8x128xf32>
    %665 = vector.extract_strided_slice %663 {offsets = [0, 128], sizes = [8, 128], strides = [1, 1]} : vector<8x256xf32> to vector<8x128xf32>
    %666 = arith.negf %664 : vector<8x128xf32>
    %667 = math.exp %666 : vector<8x128xf32>
    %cst_97 = arith.constant 1.000000e+00 : f32
    %668 = vector.broadcast %cst_97 : f32 to vector<8x128xf32>
    %669 = arith.addf %668, %667 : vector<8x128xf32>
    %670 = arith.divf %668, %669 : vector<8x128xf32>
    %671 = vector.broadcast %5 : vector<1x128xf32> to vector<8x128xf32>
    %672 = arith.mulf %665, %671 : vector<8x128xf32>
    %673 = arith.negf %672 : vector<8x128xf32>
    %674 = math.exp %673 : vector<8x128xf32>
    %cst_98 = arith.constant 1.000000e+00 : f32
    %675 = vector.broadcast %cst_98 : f32 to vector<8x128xf32>
    %676 = arith.addf %675, %674 : vector<8x128xf32>
    %677 = arith.divf %675, %676 : vector<8x128xf32>
    %678 = vector.broadcast %5 : vector<1x128xf32> to vector<8x128xf32>
    %679 = arith.mulf %677, %678 : vector<8x128xf32>
    %680 = vector.broadcast %8 : vector<1x128xf32> to vector<8x128xf32>
    %681 = arith.subf %679, %680 : vector<8x128xf32>
    %682 = arith.mulf %670, %681 : vector<8x128xf32>
    %683 = vector.extract_strided_slice %682 {offsets = [0, 64], sizes = [8, 64], strides = [1, 1]} : vector<8x128xf32> to vector<8x64xf32>
    %684 = vector.extract_strided_slice %670 {offsets = [0, 0], sizes = [8, 64], strides = [1, 1]} : vector<8x128xf32> to vector<8x64xf32>
    %685 = vector.extract_strided_slice %681 {offsets = [0, 0], sizes = [8, 64], strides = [1, 1]} : vector<8x128xf32> to vector<8x64xf32>
    %686 = arith.mulf %684, %563 : vector<8x64xf32>
    %687 = arith.addf %686, %683 : vector<8x64xf32>
    %688 = math.tanh %687 : vector<8x64xf32>
    %689 = arith.mulf %685, %688 : vector<8x64xf32>
    %690 = arith.truncf %689 : vector<8x64xf32> to vector<8x64xbf16>
    %691 = tpu.concatenate %566, %597 in 1 : vector<8x64xbf16>, vector<8x64xbf16> -> vector<8x128xbf16>
    %cst_99 = arith.constant dense<0.000000e+00> : vector<8x256xf32>
    %692 = tpu.matmul %691, %25, %cst_99 {dimension_numbers = #tpu.dot_dimension_numbers<[1], [0], [0], [1], [0, 0, 1, 1], [], []>} : vector<8x128xbf16>, vector<128x256xbf16>, vector<8x256xf32> -> vector<8x256xf32>
    %693 = vector.broadcast %31 : vector<1x256xf32> to vector<8x256xf32>
    %694 = arith.addf %692, %693 : vector<8x256xf32>
    %695 = vector.extract_strided_slice %694 {offsets = [0, 0], sizes = [8, 128], strides = [1, 1]} : vector<8x256xf32> to vector<8x128xf32>
    %696 = vector.extract_strided_slice %694 {offsets = [0, 128], sizes = [8, 128], strides = [1, 1]} : vector<8x256xf32> to vector<8x128xf32>
    %697 = arith.negf %695 : vector<8x128xf32>
    %698 = math.exp %697 : vector<8x128xf32>
    %cst_100 = arith.constant 1.000000e+00 : f32
    %699 = vector.broadcast %cst_100 : f32 to vector<8x128xf32>
    %700 = arith.addf %699, %698 : vector<8x128xf32>
    %701 = arith.divf %699, %700 : vector<8x128xf32>
    %702 = vector.broadcast %5 : vector<1x128xf32> to vector<8x128xf32>
    %703 = arith.mulf %696, %702 : vector<8x128xf32>
    %704 = arith.negf %703 : vector<8x128xf32>
    %705 = math.exp %704 : vector<8x128xf32>
    %cst_101 = arith.constant 1.000000e+00 : f32
    %706 = vector.broadcast %cst_101 : f32 to vector<8x128xf32>
    %707 = arith.addf %706, %705 : vector<8x128xf32>
    %708 = arith.divf %706, %707 : vector<8x128xf32>
    %709 = vector.broadcast %5 : vector<1x128xf32> to vector<8x128xf32>
    %710 = arith.mulf %708, %709 : vector<8x128xf32>
    %711 = vector.broadcast %8 : vector<1x128xf32> to vector<8x128xf32>
    %712 = arith.subf %710, %711 : vector<8x128xf32>
    %713 = arith.mulf %701, %712 : vector<8x128xf32>
    %714 = vector.extract_strided_slice %713 {offsets = [0, 64], sizes = [8, 64], strides = [1, 1]} : vector<8x128xf32> to vector<8x64xf32>
    %715 = vector.extract_strided_slice %701 {offsets = [0, 0], sizes = [8, 64], strides = [1, 1]} : vector<8x128xf32> to vector<8x64xf32>
    %716 = vector.extract_strided_slice %712 {offsets = [0, 0], sizes = [8, 64], strides = [1, 1]} : vector<8x128xf32> to vector<8x64xf32>
    %717 = arith.mulf %715, %594 : vector<8x64xf32>
    %718 = arith.addf %717, %714 : vector<8x64xf32>
    %719 = math.tanh %718 : vector<8x64xf32>
    %720 = arith.mulf %716, %719 : vector<8x64xf32>
    %721 = arith.truncf %720 : vector<8x64xf32> to vector<8x64xbf16>
    %722 = vector.extract_strided_slice %18 {offsets = [7, 0, 0], sizes = [1, 8, 256], strides = [1, 1, 1]} : vector<8x8x256xf32> to vector<1x8x256xf32>
    %723 = vector.shape_cast %722 : vector<1x8x256xf32> to vector<8x256xf32>
    %cst_102 = arith.constant dense<0.000000e+00> : vector<8x256xf32>
    %724 = tpu.matmul %628, %19, %cst_102 {dimension_numbers = #tpu.dot_dimension_numbers<[1], [0], [0], [1], [0, 0, 1, 1], [], []>} : vector<8x64xbf16>, vector<64x256xbf16>, vector<8x256xf32> -> vector<8x256xf32>
    %725 = arith.addf %723, %724 : vector<8x256xf32>
    %726 = vector.extract_strided_slice %725 {offsets = [0, 0], sizes = [8, 128], strides = [1, 1]} : vector<8x256xf32> to vector<8x128xf32>
    %727 = vector.extract_strided_slice %725 {offsets = [0, 128], sizes = [8, 128], strides = [1, 1]} : vector<8x256xf32> to vector<8x128xf32>
    %728 = arith.negf %726 : vector<8x128xf32>
    %729 = math.exp %728 : vector<8x128xf32>
    %cst_103 = arith.constant 1.000000e+00 : f32
    %730 = vector.broadcast %cst_103 : f32 to vector<8x128xf32>
    %731 = arith.addf %730, %729 : vector<8x128xf32>
    %732 = arith.divf %730, %731 : vector<8x128xf32>
    %733 = vector.broadcast %5 : vector<1x128xf32> to vector<8x128xf32>
    %734 = arith.mulf %727, %733 : vector<8x128xf32>
    %735 = arith.negf %734 : vector<8x128xf32>
    %736 = math.exp %735 : vector<8x128xf32>
    %cst_104 = arith.constant 1.000000e+00 : f32
    %737 = vector.broadcast %cst_104 : f32 to vector<8x128xf32>
    %738 = arith.addf %737, %736 : vector<8x128xf32>
    %739 = arith.divf %737, %738 : vector<8x128xf32>
    %740 = vector.broadcast %5 : vector<1x128xf32> to vector<8x128xf32>
    %741 = arith.mulf %739, %740 : vector<8x128xf32>
    %742 = vector.broadcast %8 : vector<1x128xf32> to vector<8x128xf32>
    %743 = arith.subf %741, %742 : vector<8x128xf32>
    %744 = arith.mulf %732, %743 : vector<8x128xf32>
    %745 = vector.extract_strided_slice %744 {offsets = [0, 64], sizes = [8, 64], strides = [1, 1]} : vector<8x128xf32> to vector<8x64xf32>
    %746 = vector.extract_strided_slice %732 {offsets = [0, 0], sizes = [8, 64], strides = [1, 1]} : vector<8x128xf32> to vector<8x64xf32>
    %747 = vector.extract_strided_slice %743 {offsets = [0, 0], sizes = [8, 64], strides = [1, 1]} : vector<8x128xf32> to vector<8x64xf32>
    %748 = arith.mulf %746, %625 : vector<8x64xf32>
    %749 = arith.addf %748, %745 : vector<8x64xf32>
    %750 = math.tanh %749 : vector<8x64xf32>
    %751 = arith.mulf %747, %750 : vector<8x64xf32>
    %752 = arith.truncf %751 : vector<8x64xf32> to vector<8x64xbf16>
    %753 = tpu.concatenate %628, %659 in 1 : vector<8x64xbf16>, vector<8x64xbf16> -> vector<8x128xbf16>
    %cst_105 = arith.constant dense<0.000000e+00> : vector<8x256xf32>
    %754 = tpu.matmul %753, %21, %cst_105 {dimension_numbers = #tpu.dot_dimension_numbers<[1], [0], [0], [1], [0, 0, 1, 1], [], []>} : vector<8x128xbf16>, vector<128x256xbf16>, vector<8x256xf32> -> vector<8x256xf32>
    %755 = vector.broadcast %27 : vector<1x256xf32> to vector<8x256xf32>
    %756 = arith.addf %754, %755 : vector<8x256xf32>
    %757 = vector.extract_strided_slice %756 {offsets = [0, 0], sizes = [8, 128], strides = [1, 1]} : vector<8x256xf32> to vector<8x128xf32>
    %758 = vector.extract_strided_slice %756 {offsets = [0, 128], sizes = [8, 128], strides = [1, 1]} : vector<8x256xf32> to vector<8x128xf32>
    %759 = arith.negf %757 : vector<8x128xf32>
    %760 = math.exp %759 : vector<8x128xf32>
    %cst_106 = arith.constant 1.000000e+00 : f32
    %761 = vector.broadcast %cst_106 : f32 to vector<8x128xf32>
    %762 = arith.addf %761, %760 : vector<8x128xf32>
    %763 = arith.divf %761, %762 : vector<8x128xf32>
    %764 = vector.broadcast %5 : vector<1x128xf32> to vector<8x128xf32>
    %765 = arith.mulf %758, %764 : vector<8x128xf32>
    %766 = arith.negf %765 : vector<8x128xf32>
    %767 = math.exp %766 : vector<8x128xf32>
    %cst_107 = arith.constant 1.000000e+00 : f32
    %768 = vector.broadcast %cst_107 : f32 to vector<8x128xf32>
    %769 = arith.addf %768, %767 : vector<8x128xf32>
    %770 = arith.divf %768, %769 : vector<8x128xf32>
    %771 = vector.broadcast %5 : vector<1x128xf32> to vector<8x128xf32>
    %772 = arith.mulf %770, %771 : vector<8x128xf32>
    %773 = vector.broadcast %8 : vector<1x128xf32> to vector<8x128xf32>
    %774 = arith.subf %772, %773 : vector<8x128xf32>
    %775 = arith.mulf %763, %774 : vector<8x128xf32>
    %776 = vector.extract_strided_slice %775 {offsets = [0, 64], sizes = [8, 64], strides = [1, 1]} : vector<8x128xf32> to vector<8x64xf32>
    %777 = vector.extract_strided_slice %763 {offsets = [0, 0], sizes = [8, 64], strides = [1, 1]} : vector<8x128xf32> to vector<8x64xf32>
    %778 = vector.extract_strided_slice %774 {offsets = [0, 0], sizes = [8, 64], strides = [1, 1]} : vector<8x128xf32> to vector<8x64xf32>
    %779 = arith.mulf %777, %656 : vector<8x64xf32>
    %780 = arith.addf %779, %776 : vector<8x64xf32>
    %781 = math.tanh %780 : vector<8x64xf32>
    %782 = arith.mulf %778, %781 : vector<8x64xf32>
    %783 = arith.truncf %782 : vector<8x64xf32> to vector<8x64xbf16>
    %784 = tpu.concatenate %659, %690 in 1 : vector<8x64xbf16>, vector<8x64xbf16> -> vector<8x128xbf16>
    %cst_108 = arith.constant dense<0.000000e+00> : vector<8x256xf32>
    %785 = tpu.matmul %784, %23, %cst_108 {dimension_numbers = #tpu.dot_dimension_numbers<[1], [0], [0], [1], [0, 0, 1, 1], [], []>} : vector<8x128xbf16>, vector<128x256xbf16>, vector<8x256xf32> -> vector<8x256xf32>
    %786 = vector.broadcast %29 : vector<1x256xf32> to vector<8x256xf32>
    %787 = arith.addf %785, %786 : vector<8x256xf32>
    %788 = vector.extract_strided_slice %787 {offsets = [0, 0], sizes = [8, 128], strides = [1, 1]} : vector<8x256xf32> to vector<8x128xf32>
    %789 = vector.extract_strided_slice %787 {offsets = [0, 128], sizes = [8, 128], strides = [1, 1]} : vector<8x256xf32> to vector<8x128xf32>
    %790 = arith.negf %788 : vector<8x128xf32>
    %791 = math.exp %790 : vector<8x128xf32>
    %cst_109 = arith.constant 1.000000e+00 : f32
    %792 = vector.broadcast %cst_109 : f32 to vector<8x128xf32>
    %793 = arith.addf %792, %791 : vector<8x128xf32>
    %794 = arith.divf %792, %793 : vector<8x128xf32>
    %795 = vector.broadcast %5 : vector<1x128xf32> to vector<8x128xf32>
    %796 = arith.mulf %789, %795 : vector<8x128xf32>
    %797 = arith.negf %796 : vector<8x128xf32>
    %798 = math.exp %797 : vector<8x128xf32>
    %cst_110 = arith.constant 1.000000e+00 : f32
    %799 = vector.broadcast %cst_110 : f32 to vector<8x128xf32>
    %800 = arith.addf %799, %798 : vector<8x128xf32>
    %801 = arith.divf %799, %800 : vector<8x128xf32>
    %802 = vector.broadcast %5 : vector<1x128xf32> to vector<8x128xf32>
    %803 = arith.mulf %801, %802 : vector<8x128xf32>
    %804 = vector.broadcast %8 : vector<1x128xf32> to vector<8x128xf32>
    %805 = arith.subf %803, %804 : vector<8x128xf32>
    %806 = arith.mulf %794, %805 : vector<8x128xf32>
    %807 = vector.extract_strided_slice %806 {offsets = [0, 64], sizes = [8, 64], strides = [1, 1]} : vector<8x128xf32> to vector<8x64xf32>
    %808 = vector.extract_strided_slice %794 {offsets = [0, 0], sizes = [8, 64], strides = [1, 1]} : vector<8x128xf32> to vector<8x64xf32>
    %809 = vector.extract_strided_slice %805 {offsets = [0, 0], sizes = [8, 64], strides = [1, 1]} : vector<8x128xf32> to vector<8x64xf32>
    %810 = arith.mulf %808, %687 : vector<8x64xf32>
    %811 = arith.addf %810, %807 : vector<8x64xf32>
    %812 = math.tanh %811 : vector<8x64xf32>
    %813 = arith.mulf %809, %812 : vector<8x64xf32>
    %814 = arith.truncf %813 : vector<8x64xf32> to vector<8x64xbf16>
    %815 = tpu.concatenate %690, %721 in 1 : vector<8x64xbf16>, vector<8x64xbf16> -> vector<8x128xbf16>
    %cst_111 = arith.constant dense<0.000000e+00> : vector<8x256xf32>
    %816 = tpu.matmul %815, %25, %cst_111 {dimension_numbers = #tpu.dot_dimension_numbers<[1], [0], [0], [1], [0, 0, 1, 1], [], []>} : vector<8x128xbf16>, vector<128x256xbf16>, vector<8x256xf32> -> vector<8x256xf32>
    %817 = vector.broadcast %31 : vector<1x256xf32> to vector<8x256xf32>
    %818 = arith.addf %816, %817 : vector<8x256xf32>
    %819 = vector.extract_strided_slice %818 {offsets = [0, 0], sizes = [8, 128], strides = [1, 1]} : vector<8x256xf32> to vector<8x128xf32>
    %820 = vector.extract_strided_slice %818 {offsets = [0, 128], sizes = [8, 128], strides = [1, 1]} : vector<8x256xf32> to vector<8x128xf32>
    %821 = arith.negf %819 : vector<8x128xf32>
    %822 = math.exp %821 : vector<8x128xf32>
    %cst_112 = arith.constant 1.000000e+00 : f32
    %823 = vector.broadcast %cst_112 : f32 to vector<8x128xf32>
    %824 = arith.addf %823, %822 : vector<8x128xf32>
    %825 = arith.divf %823, %824 : vector<8x128xf32>
    %826 = vector.broadcast %5 : vector<1x128xf32> to vector<8x128xf32>
    %827 = arith.mulf %820, %826 : vector<8x128xf32>
    %828 = arith.negf %827 : vector<8x128xf32>
    %829 = math.exp %828 : vector<8x128xf32>
    %cst_113 = arith.constant 1.000000e+00 : f32
    %830 = vector.broadcast %cst_113 : f32 to vector<8x128xf32>
    %831 = arith.addf %830, %829 : vector<8x128xf32>
    %832 = arith.divf %830, %831 : vector<8x128xf32>
    %833 = vector.broadcast %5 : vector<1x128xf32> to vector<8x128xf32>
    %834 = arith.mulf %832, %833 : vector<8x128xf32>
    %835 = vector.broadcast %8 : vector<1x128xf32> to vector<8x128xf32>
    %836 = arith.subf %834, %835 : vector<8x128xf32>
    %837 = arith.mulf %825, %836 : vector<8x128xf32>
    %838 = vector.extract_strided_slice %837 {offsets = [0, 64], sizes = [8, 64], strides = [1, 1]} : vector<8x128xf32> to vector<8x64xf32>
    %839 = vector.extract_strided_slice %825 {offsets = [0, 0], sizes = [8, 64], strides = [1, 1]} : vector<8x128xf32> to vector<8x64xf32>
    %840 = vector.extract_strided_slice %836 {offsets = [0, 0], sizes = [8, 64], strides = [1, 1]} : vector<8x128xf32> to vector<8x64xf32>
    %841 = arith.mulf %839, %718 : vector<8x64xf32>
    %842 = arith.addf %841, %838 : vector<8x64xf32>
    %843 = math.tanh %842 : vector<8x64xf32>
    %844 = arith.mulf %840, %843 : vector<8x64xf32>
    %845 = arith.truncf %844 : vector<8x64xf32> to vector<8x64xbf16>
    %846 = tpu.concatenate %752, %783 in 1 : vector<8x64xbf16>, vector<8x64xbf16> -> vector<8x128xbf16>
    %cst_114 = arith.constant dense<0.000000e+00> : vector<8x256xf32>
    %847 = tpu.matmul %846, %21, %cst_114 {dimension_numbers = #tpu.dot_dimension_numbers<[1], [0], [0], [1], [0, 0, 1, 1], [], []>} : vector<8x128xbf16>, vector<128x256xbf16>, vector<8x256xf32> -> vector<8x256xf32>
    %848 = vector.broadcast %27 : vector<1x256xf32> to vector<8x256xf32>
    %849 = arith.addf %847, %848 : vector<8x256xf32>
    %850 = vector.extract_strided_slice %849 {offsets = [0, 0], sizes = [8, 128], strides = [1, 1]} : vector<8x256xf32> to vector<8x128xf32>
    %851 = vector.extract_strided_slice %849 {offsets = [0, 128], sizes = [8, 128], strides = [1, 1]} : vector<8x256xf32> to vector<8x128xf32>
    %852 = arith.negf %850 : vector<8x128xf32>
    %853 = math.exp %852 : vector<8x128xf32>
    %cst_115 = arith.constant 1.000000e+00 : f32
    %854 = vector.broadcast %cst_115 : f32 to vector<8x128xf32>
    %855 = arith.addf %854, %853 : vector<8x128xf32>
    %856 = arith.divf %854, %855 : vector<8x128xf32>
    %857 = vector.broadcast %5 : vector<1x128xf32> to vector<8x128xf32>
    %858 = arith.mulf %851, %857 : vector<8x128xf32>
    %859 = arith.negf %858 : vector<8x128xf32>
    %860 = math.exp %859 : vector<8x128xf32>
    %cst_116 = arith.constant 1.000000e+00 : f32
    %861 = vector.broadcast %cst_116 : f32 to vector<8x128xf32>
    %862 = arith.addf %861, %860 : vector<8x128xf32>
    %863 = arith.divf %861, %862 : vector<8x128xf32>
    %864 = vector.broadcast %5 : vector<1x128xf32> to vector<8x128xf32>
    %865 = arith.mulf %863, %864 : vector<8x128xf32>
    %866 = vector.broadcast %8 : vector<1x128xf32> to vector<8x128xf32>
    %867 = arith.subf %865, %866 : vector<8x128xf32>
    %868 = arith.mulf %856, %867 : vector<8x128xf32>
    %869 = vector.extract_strided_slice %868 {offsets = [0, 64], sizes = [8, 64], strides = [1, 1]} : vector<8x128xf32> to vector<8x64xf32>
    %870 = vector.extract_strided_slice %856 {offsets = [0, 0], sizes = [8, 64], strides = [1, 1]} : vector<8x128xf32> to vector<8x64xf32>
    %871 = vector.extract_strided_slice %867 {offsets = [0, 0], sizes = [8, 64], strides = [1, 1]} : vector<8x128xf32> to vector<8x64xf32>
    %872 = arith.mulf %870, %780 : vector<8x64xf32>
    %873 = arith.addf %872, %869 : vector<8x64xf32>
    %874 = math.tanh %873 : vector<8x64xf32>
    %875 = arith.mulf %871, %874 : vector<8x64xf32>
    %876 = arith.truncf %875 : vector<8x64xf32> to vector<8x64xbf16>
    %877 = tpu.concatenate %783, %814 in 1 : vector<8x64xbf16>, vector<8x64xbf16> -> vector<8x128xbf16>
    %cst_117 = arith.constant dense<0.000000e+00> : vector<8x256xf32>
    %878 = tpu.matmul %877, %23, %cst_117 {dimension_numbers = #tpu.dot_dimension_numbers<[1], [0], [0], [1], [0, 0, 1, 1], [], []>} : vector<8x128xbf16>, vector<128x256xbf16>, vector<8x256xf32> -> vector<8x256xf32>
    %879 = vector.broadcast %29 : vector<1x256xf32> to vector<8x256xf32>
    %880 = arith.addf %878, %879 : vector<8x256xf32>
    %881 = vector.extract_strided_slice %880 {offsets = [0, 0], sizes = [8, 128], strides = [1, 1]} : vector<8x256xf32> to vector<8x128xf32>
    %882 = vector.extract_strided_slice %880 {offsets = [0, 128], sizes = [8, 128], strides = [1, 1]} : vector<8x256xf32> to vector<8x128xf32>
    %883 = arith.negf %881 : vector<8x128xf32>
    %884 = math.exp %883 : vector<8x128xf32>
    %cst_118 = arith.constant 1.000000e+00 : f32
    %885 = vector.broadcast %cst_118 : f32 to vector<8x128xf32>
    %886 = arith.addf %885, %884 : vector<8x128xf32>
    %887 = arith.divf %885, %886 : vector<8x128xf32>
    %888 = vector.broadcast %5 : vector<1x128xf32> to vector<8x128xf32>
    %889 = arith.mulf %882, %888 : vector<8x128xf32>
    %890 = arith.negf %889 : vector<8x128xf32>
    %891 = math.exp %890 : vector<8x128xf32>
    %cst_119 = arith.constant 1.000000e+00 : f32
    %892 = vector.broadcast %cst_119 : f32 to vector<8x128xf32>
    %893 = arith.addf %892, %891 : vector<8x128xf32>
    %894 = arith.divf %892, %893 : vector<8x128xf32>
    %895 = vector.broadcast %5 : vector<1x128xf32> to vector<8x128xf32>
    %896 = arith.mulf %894, %895 : vector<8x128xf32>
    %897 = vector.broadcast %8 : vector<1x128xf32> to vector<8x128xf32>
    %898 = arith.subf %896, %897 : vector<8x128xf32>
    %899 = arith.mulf %887, %898 : vector<8x128xf32>
    %900 = vector.extract_strided_slice %899 {offsets = [0, 64], sizes = [8, 64], strides = [1, 1]} : vector<8x128xf32> to vector<8x64xf32>
    %901 = vector.extract_strided_slice %887 {offsets = [0, 0], sizes = [8, 64], strides = [1, 1]} : vector<8x128xf32> to vector<8x64xf32>
    %902 = vector.extract_strided_slice %898 {offsets = [0, 0], sizes = [8, 64], strides = [1, 1]} : vector<8x128xf32> to vector<8x64xf32>
    %903 = arith.mulf %901, %811 : vector<8x64xf32>
    %904 = arith.addf %903, %900 : vector<8x64xf32>
    %905 = math.tanh %904 : vector<8x64xf32>
    %906 = arith.mulf %902, %905 : vector<8x64xf32>
    %907 = arith.truncf %906 : vector<8x64xf32> to vector<8x64xbf16>
    %908 = tpu.concatenate %814, %845 in 1 : vector<8x64xbf16>, vector<8x64xbf16> -> vector<8x128xbf16>
    %cst_120 = arith.constant dense<0.000000e+00> : vector<8x256xf32>
    %909 = tpu.matmul %908, %25, %cst_120 {dimension_numbers = #tpu.dot_dimension_numbers<[1], [0], [0], [1], [0, 0, 1, 1], [], []>} : vector<8x128xbf16>, vector<128x256xbf16>, vector<8x256xf32> -> vector<8x256xf32>
    %910 = vector.broadcast %31 : vector<1x256xf32> to vector<8x256xf32>
    %911 = arith.addf %909, %910 : vector<8x256xf32>
    %912 = vector.extract_strided_slice %911 {offsets = [0, 0], sizes = [8, 128], strides = [1, 1]} : vector<8x256xf32> to vector<8x128xf32>
    %913 = vector.extract_strided_slice %911 {offsets = [0, 128], sizes = [8, 128], strides = [1, 1]} : vector<8x256xf32> to vector<8x128xf32>
    %914 = arith.negf %912 : vector<8x128xf32>
    %915 = math.exp %914 : vector<8x128xf32>
    %cst_121 = arith.constant 1.000000e+00 : f32
    %916 = vector.broadcast %cst_121 : f32 to vector<8x128xf32>
    %917 = arith.addf %916, %915 : vector<8x128xf32>
    %918 = arith.divf %916, %917 : vector<8x128xf32>
    %919 = vector.broadcast %5 : vector<1x128xf32> to vector<8x128xf32>
    %920 = arith.mulf %913, %919 : vector<8x128xf32>
    %921 = arith.negf %920 : vector<8x128xf32>
    %922 = math.exp %921 : vector<8x128xf32>
    %cst_122 = arith.constant 1.000000e+00 : f32
    %923 = vector.broadcast %cst_122 : f32 to vector<8x128xf32>
    %924 = arith.addf %923, %922 : vector<8x128xf32>
    %925 = arith.divf %923, %924 : vector<8x128xf32>
    %926 = vector.broadcast %5 : vector<1x128xf32> to vector<8x128xf32>
    %927 = arith.mulf %925, %926 : vector<8x128xf32>
    %928 = vector.broadcast %8 : vector<1x128xf32> to vector<8x128xf32>
    %929 = arith.subf %927, %928 : vector<8x128xf32>
    %930 = arith.mulf %918, %929 : vector<8x128xf32>
    %931 = vector.extract_strided_slice %930 {offsets = [0, 64], sizes = [8, 64], strides = [1, 1]} : vector<8x128xf32> to vector<8x64xf32>
    %932 = vector.extract_strided_slice %918 {offsets = [0, 0], sizes = [8, 64], strides = [1, 1]} : vector<8x128xf32> to vector<8x64xf32>
    %933 = vector.extract_strided_slice %929 {offsets = [0, 0], sizes = [8, 64], strides = [1, 1]} : vector<8x128xf32> to vector<8x64xf32>
    %934 = arith.mulf %932, %842 : vector<8x64xf32>
    %935 = arith.addf %934, %931 : vector<8x64xf32>
    %936 = math.tanh %935 : vector<8x64xf32>
    %937 = arith.mulf %933, %936 : vector<8x64xf32>
    %938 = arith.truncf %937 : vector<8x64xf32> to vector<8x64xbf16>
    %939 = tpu.concatenate %876, %907 in 1 : vector<8x64xbf16>, vector<8x64xbf16> -> vector<8x128xbf16>
    %cst_123 = arith.constant dense<0.000000e+00> : vector<8x256xf32>
    %940 = tpu.matmul %939, %23, %cst_123 {dimension_numbers = #tpu.dot_dimension_numbers<[1], [0], [0], [1], [0, 0, 1, 1], [], []>} : vector<8x128xbf16>, vector<128x256xbf16>, vector<8x256xf32> -> vector<8x256xf32>
    %941 = vector.broadcast %29 : vector<1x256xf32> to vector<8x256xf32>
    %942 = arith.addf %940, %941 : vector<8x256xf32>
    %943 = vector.extract_strided_slice %942 {offsets = [0, 0], sizes = [8, 128], strides = [1, 1]} : vector<8x256xf32> to vector<8x128xf32>
    %944 = vector.extract_strided_slice %942 {offsets = [0, 128], sizes = [8, 128], strides = [1, 1]} : vector<8x256xf32> to vector<8x128xf32>
    %945 = arith.negf %943 : vector<8x128xf32>
    %946 = math.exp %945 : vector<8x128xf32>
    %cst_124 = arith.constant 1.000000e+00 : f32
    %947 = vector.broadcast %cst_124 : f32 to vector<8x128xf32>
    %948 = arith.addf %947, %946 : vector<8x128xf32>
    %949 = arith.divf %947, %948 : vector<8x128xf32>
    %950 = vector.broadcast %5 : vector<1x128xf32> to vector<8x128xf32>
    %951 = arith.mulf %944, %950 : vector<8x128xf32>
    %952 = arith.negf %951 : vector<8x128xf32>
    %953 = math.exp %952 : vector<8x128xf32>
    %cst_125 = arith.constant 1.000000e+00 : f32
    %954 = vector.broadcast %cst_125 : f32 to vector<8x128xf32>
    %955 = arith.addf %954, %953 : vector<8x128xf32>
    %956 = arith.divf %954, %955 : vector<8x128xf32>
    %957 = vector.broadcast %5 : vector<1x128xf32> to vector<8x128xf32>
    %958 = arith.mulf %956, %957 : vector<8x128xf32>
    %959 = vector.broadcast %8 : vector<1x128xf32> to vector<8x128xf32>
    %960 = arith.subf %958, %959 : vector<8x128xf32>
    %961 = arith.mulf %949, %960 : vector<8x128xf32>
    %962 = vector.extract_strided_slice %961 {offsets = [0, 64], sizes = [8, 64], strides = [1, 1]} : vector<8x128xf32> to vector<8x64xf32>
    %963 = vector.extract_strided_slice %949 {offsets = [0, 0], sizes = [8, 64], strides = [1, 1]} : vector<8x128xf32> to vector<8x64xf32>
    %964 = vector.extract_strided_slice %960 {offsets = [0, 0], sizes = [8, 64], strides = [1, 1]} : vector<8x128xf32> to vector<8x64xf32>
    %965 = arith.mulf %963, %904 : vector<8x64xf32>
    %966 = arith.addf %965, %962 : vector<8x64xf32>
    %967 = math.tanh %966 : vector<8x64xf32>
    %968 = arith.mulf %964, %967 : vector<8x64xf32>
    %969 = arith.truncf %968 : vector<8x64xf32> to vector<8x64xbf16>
    %970 = tpu.concatenate %907, %938 in 1 : vector<8x64xbf16>, vector<8x64xbf16> -> vector<8x128xbf16>
    %cst_126 = arith.constant dense<0.000000e+00> : vector<8x256xf32>
    %971 = tpu.matmul %970, %25, %cst_126 {dimension_numbers = #tpu.dot_dimension_numbers<[1], [0], [0], [1], [0, 0, 1, 1], [], []>} : vector<8x128xbf16>, vector<128x256xbf16>, vector<8x256xf32> -> vector<8x256xf32>
    %972 = vector.broadcast %31 : vector<1x256xf32> to vector<8x256xf32>
    %973 = arith.addf %971, %972 : vector<8x256xf32>
    %974 = vector.extract_strided_slice %973 {offsets = [0, 0], sizes = [8, 128], strides = [1, 1]} : vector<8x256xf32> to vector<8x128xf32>
    %975 = vector.extract_strided_slice %973 {offsets = [0, 128], sizes = [8, 128], strides = [1, 1]} : vector<8x256xf32> to vector<8x128xf32>
    %976 = arith.negf %974 : vector<8x128xf32>
    %977 = math.exp %976 : vector<8x128xf32>
    %cst_127 = arith.constant 1.000000e+00 : f32
    %978 = vector.broadcast %cst_127 : f32 to vector<8x128xf32>
    %979 = arith.addf %978, %977 : vector<8x128xf32>
    %980 = arith.divf %978, %979 : vector<8x128xf32>
    %981 = vector.broadcast %5 : vector<1x128xf32> to vector<8x128xf32>
    %982 = arith.mulf %975, %981 : vector<8x128xf32>
    %983 = arith.negf %982 : vector<8x128xf32>
    %984 = math.exp %983 : vector<8x128xf32>
    %cst_128 = arith.constant 1.000000e+00 : f32
    %985 = vector.broadcast %cst_128 : f32 to vector<8x128xf32>
    %986 = arith.addf %985, %984 : vector<8x128xf32>
    %987 = arith.divf %985, %986 : vector<8x128xf32>
    %988 = vector.broadcast %5 : vector<1x128xf32> to vector<8x128xf32>
    %989 = arith.mulf %987, %988 : vector<8x128xf32>
    %990 = vector.broadcast %8 : vector<1x128xf32> to vector<8x128xf32>
    %991 = arith.subf %989, %990 : vector<8x128xf32>
    %992 = arith.mulf %980, %991 : vector<8x128xf32>
    %993 = vector.extract_strided_slice %992 {offsets = [0, 64], sizes = [8, 64], strides = [1, 1]} : vector<8x128xf32> to vector<8x64xf32>
    %994 = vector.extract_strided_slice %980 {offsets = [0, 0], sizes = [8, 64], strides = [1, 1]} : vector<8x128xf32> to vector<8x64xf32>
    %995 = vector.extract_strided_slice %991 {offsets = [0, 0], sizes = [8, 64], strides = [1, 1]} : vector<8x128xf32> to vector<8x64xf32>
    %996 = arith.mulf %994, %935 : vector<8x64xf32>
    %997 = arith.addf %996, %993 : vector<8x64xf32>
    %998 = math.tanh %997 : vector<8x64xf32>
    %999 = arith.mulf %995, %998 : vector<8x64xf32>
    %1000 = arith.truncf %999 : vector<8x64xf32> to vector<8x64xbf16>
    %1001 = tpu.concatenate %969, %1000 in 1 : vector<8x64xbf16>, vector<8x64xbf16> -> vector<8x128xbf16>
    %cst_129 = arith.constant dense<0.000000e+00> : vector<8x256xf32>
    %1002 = tpu.matmul %1001, %25, %cst_129 {dimension_numbers = #tpu.dot_dimension_numbers<[1], [0], [0], [1], [0, 0, 1, 1], [], []>} : vector<8x128xbf16>, vector<128x256xbf16>, vector<8x256xf32> -> vector<8x256xf32>
    %1003 = vector.broadcast %31 : vector<1x256xf32> to vector<8x256xf32>
    %1004 = arith.addf %1002, %1003 : vector<8x256xf32>
    %1005 = vector.extract_strided_slice %1004 {offsets = [0, 0], sizes = [8, 128], strides = [1, 1]} : vector<8x256xf32> to vector<8x128xf32>
    %1006 = vector.extract_strided_slice %1004 {offsets = [0, 128], sizes = [8, 128], strides = [1, 1]} : vector<8x256xf32> to vector<8x128xf32>
    %1007 = arith.negf %1005 : vector<8x128xf32>
    %1008 = math.exp %1007 : vector<8x128xf32>
    %cst_130 = arith.constant 1.000000e+00 : f32
    %1009 = vector.broadcast %cst_130 : f32 to vector<8x128xf32>
    %1010 = arith.addf %1009, %1008 : vector<8x128xf32>
    %1011 = arith.divf %1009, %1010 : vector<8x128xf32>
    %1012 = vector.broadcast %5 : vector<1x128xf32> to vector<8x128xf32>
    %1013 = arith.mulf %1006, %1012 : vector<8x128xf32>
    %1014 = arith.negf %1013 : vector<8x128xf32>
    %1015 = math.exp %1014 : vector<8x128xf32>
    %cst_131 = arith.constant 1.000000e+00 : f32
    %1016 = vector.broadcast %cst_131 : f32 to vector<8x128xf32>
    %1017 = arith.addf %1016, %1015 : vector<8x128xf32>
    %1018 = arith.divf %1016, %1017 : vector<8x128xf32>
    %1019 = vector.broadcast %5 : vector<1x128xf32> to vector<8x128xf32>
    %1020 = arith.mulf %1018, %1019 : vector<8x128xf32>
    %1021 = vector.broadcast %8 : vector<1x128xf32> to vector<8x128xf32>
    %1022 = arith.subf %1020, %1021 : vector<8x128xf32>
    %1023 = arith.mulf %1011, %1022 : vector<8x128xf32>
    %1024 = vector.extract_strided_slice %1023 {offsets = [0, 64], sizes = [8, 64], strides = [1, 1]} : vector<8x128xf32> to vector<8x64xf32>
    %1025 = vector.extract_strided_slice %1011 {offsets = [0, 0], sizes = [8, 64], strides = [1, 1]} : vector<8x128xf32> to vector<8x64xf32>
    %1026 = vector.extract_strided_slice %1022 {offsets = [0, 0], sizes = [8, 64], strides = [1, 1]} : vector<8x128xf32> to vector<8x64xf32>
    %1027 = arith.mulf %1025, %997 : vector<8x64xf32>
    %1028 = arith.addf %1027, %1024 : vector<8x64xf32>
    %1029 = math.tanh %1028 : vector<8x64xf32>
    %1030 = arith.mulf %1026, %1029 : vector<8x64xf32>
    %cst_132 = arith.constant dense<0.000000e+00> : vector<8xf32>
    %1031 = vector.multi_reduction <add>, %1030, %cst_132 [1] : vector<8x64xf32> to vector<8xf32>
    %1032 = vector.shape_cast %1031 : vector<8xf32> to vector<8x1xf32>
    %cst_133 = arith.constant 6.400000e+01 : f32
    %1033 = vector.broadcast %cst_133 : f32 to vector<8x1xf32>
    %1034 = arith.divf %1032, %1033 : vector<8x1xf32>
    %1035 = vector.broadcast %1034 : vector<8x1xf32> to vector<8x64xf32>
    %1036 = arith.subf %1030, %1035 : vector<8x64xf32>
    %1037 = arith.mulf %1036, %1036 : vector<8x64xf32>
    %cst_134 = arith.constant dense<0.000000e+00> : vector<8xf32>
    %1038 = vector.multi_reduction <add>, %1037, %cst_134 [1] : vector<8x64xf32> to vector<8xf32>
    %1039 = vector.shape_cast %1038 : vector<8xf32> to vector<8x1xf32>
    %cst_135 = arith.constant 6.400000e+01 : f32
    %1040 = vector.broadcast %cst_135 : f32 to vector<8x1xf32>
    %1041 = arith.divf %1039, %1040 : vector<8x1xf32>
    %1042 = vector.broadcast %1034 : vector<8x1xf32> to vector<8x64xf32>
    %1043 = arith.subf %1030, %1042 : vector<8x64xf32>
    %cst_136 = arith.constant 9.99999974E-6 : f32
    %1044 = vector.broadcast %cst_136 : f32 to vector<8x1xf32>
    %1045 = arith.addf %1041, %1044 : vector<8x1xf32>
    %1046 = math.rsqrt %1045 : vector<8x1xf32>
    %1047 = vector.broadcast %1046 : vector<8x1xf32> to vector<8x64xf32>
    %1048 = arith.mulf %1043, %1047 : vector<8x64xf32>
    %c0_137 = arith.constant 0 : index
    %c0_138 = arith.constant 0 : index
    %1049 = vector.load %arg6[%c0_137, %c0_138] : memref<1x64xf32, #tpu.memory_space<vmem>>, vector<1x64xf32>
    %1050 = vector.broadcast %1049 : vector<1x64xf32> to vector<8x64xf32>
    %1051 = arith.mulf %1048, %1050 : vector<8x64xf32>
    %c0_139 = arith.constant 0 : index
    %c0_140 = arith.constant 0 : index
    %1052 = vector.load %arg7[%c0_139, %c0_140] : memref<1x64xf32, #tpu.memory_space<vmem>>, vector<1x64xf32>
    %1053 = vector.broadcast %1052 : vector<1x64xf32> to vector<8x64xf32>
    %1054 = arith.addf %1051, %1053 : vector<8x64xf32>
    %c0_141 = arith.constant 0 : index
    %c0_142 = arith.constant 0 : index
    %1055 = vector.load %arg8[%c0_141, %c0_142] : memref<64x20xf32, #tpu.memory_space<vmem>>, vector<64x20xf32>
    %cst_143 = arith.constant dense<0.000000e+00> : vector<8x20xf32>
    %1056 = tpu.matmul %1054, %1055, %cst_143 {dimension_numbers = #tpu.dot_dimension_numbers<[1], [0], [0], [1], [0, 0, 1, 1], [], []>} : vector<8x64xf32>, vector<64x20xf32>, vector<8x20xf32> -> vector<8x20xf32>
    %c0_144 = arith.constant 0 : index
    %c0_145 = arith.constant 0 : index
    %1057 = vector.load %arg9[%c0_144, %c0_145] : memref<1x20xf32, #tpu.memory_space<vmem>>, vector<1x20xf32>
    %1058 = vector.broadcast %1057 : vector<1x20xf32> to vector<8x20xf32>
    %1059 = arith.addf %1056, %1058 : vector<8x20xf32>
    %c0_146 = arith.constant 0 : index
    %c0_147 = arith.constant 0 : index
    %1060 = vector.load %arg10[%c0_146, %c0_147] : memref<8x20xf32, #tpu.memory_space<vmem>>, vector<8x20xf32>
    tpu.vector_store %arg10[%c0_146, %c0_147], %1059 {strides = array<i32>} : memref<8x20xf32, #tpu.memory_space<vmem>>, vector<8x20xf32>,
    return
  }
  func.func @transform_0(%arg0: i32) -> (i32, i32, i32) {
    %c0_i32 = arith.constant 0 : i32
    %c0_i32_0 = arith.constant 0 : i32
    %c0_i32_1 = arith.constant 0 : i32
    return %c0_i32, %arg0, %c0_i32_0 : i32, i32, i32
  }
  func.func @transform_1(%arg0: i32) -> (i32, i32) {
    %c0_i32 = arith.constant 0 : i32
    %c0_i32_0 = arith.constant 0 : i32
    %c0_i32_1 = arith.constant 0 : i32
    return %c0_i32, %c0_i32_0 : i32, i32
  }
  func.func @transform_2(%arg0: i32) -> (i32, i32) {
    %c0_i32 = arith.constant 0 : i32
    %c0_i32_0 = arith.constant 0 : i32
    %c0_i32_1 = arith.constant 0 : i32
    return %c0_i32, %c0_i32_0 : i32, i32
  }
  func.func @transform_3(%arg0: i32) -> (i32, i32, i32) {
    %c0_i32 = arith.constant 0 : i32
    %c0_i32_0 = arith.constant 0 : i32
    %c0_i32_1 = arith.constant 0 : i32
    %c0_i32_2 = arith.constant 0 : i32
    return %c0_i32, %c0_i32_0, %c0_i32_1 : i32, i32, i32
  }
  func.func @transform_4(%arg0: i32) -> (i32, i32, i32) {
    %c0_i32 = arith.constant 0 : i32
    %c0_i32_0 = arith.constant 0 : i32
    %c0_i32_1 = arith.constant 0 : i32
    %c0_i32_2 = arith.constant 0 : i32
    return %c0_i32, %c0_i32_0, %c0_i32_1 : i32, i32, i32
  }
  func.func @transform_5(%arg0: i32) -> (i32, i32) {
    %c0_i32 = arith.constant 0 : i32
    %c0_i32_0 = arith.constant 0 : i32
    %c0_i32_1 = arith.constant 0 : i32
    return %c0_i32, %c0_i32_0 : i32, i32
  }
  func.func @transform_6(%arg0: i32) -> (i32, i32) {
    %c0_i32 = arith.constant 0 : i32
    %c0_i32_0 = arith.constant 0 : i32
    %c0_i32_1 = arith.constant 0 : i32
    return %c0_i32, %c0_i32_0 : i32, i32
  }
  func.func @transform_7(%arg0: i32) -> (i32, i32) {
    %c0_i32 = arith.constant 0 : i32
    %c0_i32_0 = arith.constant 0 : i32
    %c0_i32_1 = arith.constant 0 : i32
    return %c0_i32, %c0_i32_0 : i32, i32
  }
  func.func @transform_8(%arg0: i32) -> (i32, i32) {
    %c0_i32 = arith.constant 0 : i32
    %c0_i32_0 = arith.constant 0 : i32
    %c0_i32_1 = arith.constant 0 : i32
    return %c0_i32, %c0_i32_0 : i32, i32
  }
  func.func @transform_9(%arg0: i32) -> (i32, i32) {
    %c0_i32 = arith.constant 0 : i32
    %c0_i32_0 = arith.constant 0 : i32
    return %arg0, %c0_i32 : i32, i32
  }
}

</mosaic_0001>

<llo_original>
// kernel: stock_predictor_forward.1
$region0: #{stock_predictor_forward.1}
  #allocation0 [shape = 'u32[]', space=smem, size = 0x4, offset = 0x4, fixed_abs, tag = 'smem constant byte address 0x4 - core index']
  #allocation1 [shape = 'u32[72,128]{1,0:T(1,128)}', space=vmem, size = 0x9000, scoped, tag = 'internal scratch']
  %s0 = inlined_call_operand.vmem [shape: f32[8,8,8], index: 0, kind: input, shape index: {}]
  %s1 = inlined_call_operand.vmem [shape: bf16[8,256], index: 1, kind: input, shape index: {}]
  %s2 = inlined_call_operand.vmem [shape: bf16[64,256], index: 2, kind: input, shape index: {}]
  %s3 = inlined_call_operand.hbm [shape: bf16[3,128,256], index: 3, kind: input, shape index: {}]
  %s4 = inlined_call_operand.vmem [shape: f32[4,1,256], index: 4, kind: input, shape index: {}]
  %s5 = inlined_call_operand.vmem [shape: f32[1,64], index: 5, kind: input, shape index: {}]
  %s6 = inlined_call_operand.vmem [shape: f32[1,64], index: 6, kind: input, shape index: {}]
  %s7 = inlined_call_operand.vmem [shape: f32[64,20], index: 7, kind: input, shape index: {}]
  %s8 = inlined_call_operand.vmem [shape: f32[1,20], index: 8, kind: input, shape index: {}]
  %s9 = inlined_call_operand.vmem [shape: f32[8,20], index: 9, kind: output, shape index: {}]
  %s10 = sld [smem:[#allocation0]]
  $region50: #{stock_predictor_forward.1} parent=0
    _
  %s12 = ssub.s32 1, %s10
  %s13 = scalar_select 0, %s12, %s10
  $region1: #{stock_predictor_forward.1} parent=0
    #allocation2 [shape = 'u8[196608]{0}', space=vmem, size = 0x30000, scoped, tag = 'input window, operand 3, single buffered']
    #allocation3 [shape = 's32[1]{0}', space=sflag, size = 0x4, scoped, tag = 'scoped memory for stock_predictor_forward.1']
    %14 = vsyncpa [#allocation3], 0
    // Predicated region
    $region2: #{stock_predictor_forward.1} parent=1 // pred_check
      _
    $region3: #{stock_predictor_forward.1} parent=1 // pred_check_branch
      %16 = sbr.rel (0) target = $region5
    $region4: #{stock_predictor_forward.1} parent=1 // pred_region
      _
    $region5: #{stock_predictor_forward.1} parent=1 // pred_fallthru
      _
    // Predicated region
    $region6: #{stock_predictor_forward.1} parent=1 // pred_check
      _
    $region7: #{stock_predictor_forward.1} parent=1 // pred_check_branch
      %18 = sbr.rel (0) target = $region9
    $region8: #{stock_predictor_forward.1} parent=1 // pred_region
      _
    $region9: #{stock_predictor_forward.1} parent=1 // pred_fallthru
      _
    // Predicated region
    $region10: #{stock_predictor_forward.1} parent=1 // pred_check
      _
    $region11: #{stock_predictor_forward.1} parent=1 // pred_check_branch
      %20 = sbr.rel (0) target = $region13
    $region12: #{stock_predictor_forward.1} parent=1 // pred_region
      _
    $region13: #{stock_predictor_forward.1} parent=1 // pred_fallthru
      _
    // Predicated region
    $region14: #{stock_predictor_forward.1} parent=1 // pred_check
      _
    $region15: #{stock_predictor_forward.1} parent=1 // pred_check_branch
      %22 = sbr.rel (0) target = $region17
    $region16: #{stock_predictor_forward.1} parent=1 // pred_region
      %24 = vsyncadd [#allocation3], 0
      %s25 = sshll.u32 %s3, 4
      %s26 = int_to_ptr.hbm [resolvable:$true] %s25
      %s27 = sshll.u32 [#allocation2], 4
      %s28 = int_to_ptr.vmem [resolvable:$true] %s27
      %33 = dma.hbm_to_vmem [thread:$0]  %s26, 6144, %s28, [#allocation3], 128, 128, 8
    $region17: #{stock_predictor_forward.1} parent=1 // pred_fallthru
      _
    // Predicated region
    $region18: #{stock_predictor_forward.1} parent=1 // pred_check
      _
    $region19: #{stock_predictor_forward.1} parent=1 // pred_check_branch
      %35 = sbr.rel (0) target = $region21
    $region20: #{stock_predictor_forward.1} parent=1 // pred_region
      _
    $region21: #{stock_predictor_forward.1} parent=1 // pred_fallthru
      _
    // Predicated region
    $region22: #{stock_predictor_forward.1} parent=1 // pred_check
      _
    $region23: #{stock_predictor_forward.1} parent=1 // pred_check_branch
      %37 = sbr.rel (0) target = $region25
    $region24: #{stock_predictor_forward.1} parent=1 // pred_region
      _
    $region25: #{stock_predictor_forward.1} parent=1 // pred_fallthru
      _
    // Predicated region
    $region26: #{stock_predictor_forward.1} parent=1 // pred_check
      _
    $region27: #{stock_predictor_forward.1} parent=1 // pred_check_branch
      %39 = sbr.rel (0) target = $region29
    $region28: #{stock_predictor_forward.1} parent=1 // pred_region
      _
    $region29: #{stock_predictor_forward.1} parent=1 // pred_fallthru
      _
    // Predicated region
    $region30: #{stock_predictor_forward.1} parent=1 // pred_check
      _
    $region31: #{stock_predictor_forward.1} parent=1 // pred_check_branch
      %41 = sbr.rel (0) target = $region33
    $region32: #{stock_predictor_forward.1} parent=1 // pred_region
      _
    $region33: #{stock_predictor_forward.1} parent=1 // pred_fallthru
      _
    // Predicated region
    $region34: #{stock_predictor_forward.1} parent=1 // pred_check
      _
    $region35: #{stock_predictor_forward.1} parent=1 // pred_check_branch
      %43 = sbr.rel (0) target = $region37
    $region36: #{stock_predictor_forward.1} parent=1 // pred_region
      _
    $region37: #{stock_predictor_forward.1} parent=1 // pred_fallthru
      _
    // Predicated region
    $region38: #{stock_predictor_forward.1} parent=1 // pred_check
      _
    $region39: #{stock_predictor_forward.1} parent=1 // pred_check_branch
      %45 = sbr.rel (0) target = $region41
    $region40: #{stock_predictor_forward.1} parent=1 // pred_region
      %47 = dma.done [#allocation3], 6144
    $region41: #{stock_predictor_forward.1} parent=1 // pred_fallthru
      _
    %v49 = vlaneseq
    %v50 = vand.u32 %v49, 127
    %vm51 = vcmp.ge.s32.totalorder %v50, 64
    %v52 = vsel %vm51, 2.0, 1.0
    %v53 = vsel %vm51, 1.0, 0.0
    %v54 = vld [vmem:[%s0] sm:$0xff]
    %v55 = vld [vmem:[%s0 + $0x8] sm:$0xff]
    %v56 = vld [vmem:[%s0 + $0x10] sm:$0xff]
    %v57 = vld [vmem:[%s0 + $0x18] sm:$0xff]
    %v58 = vld [vmem:[%s0 + $0x20] sm:$0xff]
    %v59 = vld [vmem:[%s0 + $0x28] sm:$0xff]
    %v60 = vld [vmem:[%s0 + $0x30] sm:$0xff]
    %v61 = vld [vmem:[%s0 + $0x38] sm:$0xff]
    %v62 = vpack.c.bf16 %v55, %v54
    %v63 = vpack.c.bf16 %v57, %v56
    %v64 = vpack.c.bf16 %v59, %v58
    %v65 = vpack.c.bf16 %v61, %v60
    %v66 = vld [vmem:[%s1] sm:$0xff]
    %v67 = vld [vmem:[%s4] sm:$0x3]
    %v69 = vperm.slane %v67, 0
    %v70 = vperm.slane %v67, 1
    %v74 = vunpack.c.l.b16 %v66
    %v75 = vunpack.c.h.b16 %v66
    %v76 = vpack.c.b16 %v74, %v74
    %v77 = vpack.c.b16 %v75, %v75
    %vm78 = vcmask 64512
    %v80 = vsel %vm78, %v62, 0
    %v83 = vsel %vm78, %v63, 0
    %v86 = vsel %vm78, %v64, 0
    %v89 = vsel %vm78, %v65, 0
    %vm91 = vcmask 1043456
    %v93 = vsel %vm91, %v76, 0
    %v96 = vsel %vm91, %v77, 0
    %98 = vmatpush.bf16.msra.mxu0 0
    %99 = vmatpush.bf16.msra.mxu0 0
    %100 = vmatpush.bf16.msra.mxu0 0
    %101 = vmatpush.bf16.msra.mxu0 0
    %102 = vmatpush.bf16.msra.mxu0 0
    %103 = vmatpush.bf16.msra.mxu0 0
    %104 = vmatpush.bf16.msra.mxu0 0
    %105 = vmatpush.bf16.msra.mxu0 %v93
    %106 = vmatmul.bf16.gmra.mxu0 %v80
    %v107 = vpop.f32.mrf.mxu0
    %v108 = vadd.f32 %v69, %v107
    %v109 = vpop.f32.mrf.mxu0
    %v110 = vadd.f32 %v69, %v109
    %111 = vmatmul.bf16.gmra.mxu0 %v83
    %v112 = vpop.f32.mrf.mxu0
    %v113 = vadd.f32 %v69, %v112
    %v114 = vpop.f32.mrf.mxu0
    %v115 = vadd.f32 %v69, %v114
    %116 = vmatmul.bf16.gmra.mxu0 %v86
    %v117 = vpop.f32.mrf.mxu0
    %v118 = vadd.f32 %v69, %v117
    %v119 = vpop.f32.mrf.mxu0
    %v120 = vadd.f32 %v69, %v119
    %121 = vmatmul.bf16.gmra.mxu0 %v89
    %v122 = vpop.f32.mrf.mxu0
    %v123 = vadd.f32 %v69, %v122
    %v124 = vpop.f32.mrf.mxu0
    %v125 = vadd.f32 %v69, %v124
    %126 = vdwg.mxu0
    %127 = vmatpush.bf16.msra.mxu0 0
    %128 = vmatpush.bf16.msra.mxu0 0
    %129 = vmatpush.bf16.msra.mxu0 0
    %130 = vmatpush.bf16.msra.mxu0 0
    %131 = vmatpush.bf16.msra.mxu0 0
    %132 = vmatpush.bf16.msra.mxu0 0
    %133 = vmatpush.bf16.msra.mxu0 0
    %134 = vmatpush.bf16.msra.mxu0 %v96
    %135 = vmatmul.bf16.gmra.mxu0 %v80
    %v136 = vpop.f32.mrf.mxu0
    %v137 = vadd.f32 %v70, %v136
    %v138 = vpop.f32.mrf.mxu0
    %v139 = vadd.f32 %v70, %v138
    %140 = vmatmul.bf16.gmra.mxu0 %v83
    %v141 = vpop.f32.mrf.mxu0
    %v142 = vadd.f32 %v70, %v141
    %v143 = vpop.f32.mrf.mxu0
    %v144 = vadd.f32 %v70, %v143
    %145 = vmatmul.bf16.gmra.mxu0 %v86
    %v146 = vpop.f32.mrf.mxu0
    %v147 = vadd.f32 %v70, %v146
    %v148 = vpop.f32.mrf.mxu0
    %v149 = vadd.f32 %v70, %v148
    %150 = vmatmul.bf16.gmra.mxu0 %v89
    %v151 = vpop.f32.mrf.mxu0
    %v152 = vadd.f32 %v70, %v151
    %v153 = vpop.f32.mrf.mxu0
    %v154 = vadd.f32 %v70, %v153
    %155 = vdwg.mxu0
    %v156 = vld [vmem:[%s2] sm:$0xff]
    %v157 = vld [vmem:[%s2 + $0x8] sm:$0xff]
    %v158 = vld [vmem:[%s2 + $0x10] sm:$0xff]
    %v159 = vld [vmem:[%s2 + $0x18] sm:$0xff]
    %v160 = vld [vmem:[%s2 + $0x20] sm:$0xff]
    %v161 = vld [vmem:[%s2 + $0x28] sm:$0xff]
    %v162 = vld [vmem:[%s2 + $0x30] sm:$0xff]
    %v163 = vld [vmem:[%s2 + $0x38] sm:$0xff]
    %v164 = vld [vmem:[#allocation2] sm:$0xff]
    %v165 = vld [vmem:[#allocation2 + $0x8] sm:$0xff]
    %v166 = vld [vmem:[#allocation2 + $0x10] sm:$0xff]
    %v167 = vld [vmem:[#allocation2 + $0x18] sm:$0xff]
    %v168 = vld [vmem:[#allocation2 + $0x20] sm:$0xff]
    %v169 = vld [vmem:[#allocation2 + $0x28] sm:$0xff]
    %v170 = vld [vmem:[#allocation2 + $0x30] sm:$0xff]
    %v171 = vld [vmem:[#allocation2 + $0x38] sm:$0xff]
    %v172 = vld [vmem:[#allocation2 + $0x40] sm:$0xff]
    %v173 = vld [vmem:[#allocation2 + $0x48] sm:$0xff]
    %v174 = vld [vmem:[#allocation2 + $0x50] sm:$0xff]
    %v175 = vld [vmem:[#allocation2 + $0x58] sm:$0xff]
    %v176 = vld [vmem:[#allocation2 + $0x60] sm:$0xff]
    %v177 = vld [vmem:[#allocation2 + $0x68] sm:$0xff]
    %v178 = vld [vmem:[#allocation2 + $0x70] sm:$0xff]
    %v179 = vld [vmem:[#allocation2 + $0x78] sm:$0xff]
    %s180 = scalar_lea.vmem [#allocation2], 128
    %v181 = vld [vmem:[%s180] sm:$0xff]
    %v182 = vld [vmem:[%s180 + $0x8] sm:$0xff]
    %v183 = vld [vmem:[%s180 + $0x10] sm:$0xff]
    %v184 = vld [vmem:[%s180 + $0x18] sm:$0xff]
    %v185 = vld [vmem:[%s180 + $0x20] sm:$0xff]
    %v186 = vld [vmem:[%s180 + $0x28] sm:$0xff]
    %v187 = vld [vmem:[%s180 + $0x30] sm:$0xff]
    %v188 = vld [vmem:[%s180 + $0x38] sm:$0xff]
    %v189 = vld [vmem:[%s180 + $0x40] sm:$0xff]
    %v190 = vld [vmem:[%s180 + $0x48] sm:$0xff]
    %v191 = vld [vmem:[%s180 + $0x50] sm:$0xff]
    %v192 = vld [vmem:[%s180 + $0x58] sm:$0xff]
    %v193 = vld [vmem:[%s180 + $0x60] sm:$0xff]
    %v194 = vld [vmem:[%s180 + $0x68] sm:$0xff]
    %v195 = vld [vmem:[%s180 + $0x70] sm:$0xff]
    %v196 = vld [vmem:[%s180 + $0x78] sm:$0xff]
    %s197 = scalar_lea.vmem [#allocation2], 256
    %v198 = vld [vmem:[%s197] sm:$0xff]
    %v199 = vld [vmem:[%s197 + $0x8] sm:$0xff]
    %v200 = vld [vmem:[%s197 + $0x10] sm:$0xff]
    %v201 = vld [vmem:[%s197 + $0x18] sm:$0xff]
    %v202 = vld [vmem:[%s197 + $0x20] sm:$0xff]
    %v203 = vld [vmem:[%s197 + $0x28] sm:$0xff]
    %v204 = vld [vmem:[%s197 + $0x30] sm:$0xff]
    %v205 = vld [vmem:[%s197 + $0x38] sm:$0xff]
    %v206 = vld [vmem:[%s197 + $0x40] sm:$0xff]
    %v207 = vld [vmem:[%s197 + $0x48] sm:$0xff]
    %v208 = vld [vmem:[%s197 + $0x50] sm:$0xff]
    %v209 = vld [vmem:[%s197 + $0x58] sm:$0xff]
    %v210 = vld [vmem:[%s197 + $0x60] sm:$0xff]
    %v211 = vld [vmem:[%s197 + $0x68] sm:$0xff]
    %v212 = vld [vmem:[%s197 + $0x70] sm:$0xff]
    %v213 = vld [vmem:[%s197 + $0x78] sm:$0xff]
    %s214 = scalar_lea.vmem %s4, 2
    %v215 = vld [vmem:[%s214] sm:$0x3]
    %s216 = scalar_lea.vmem %s4, 4
    %v217 = vld [vmem:[%s216] sm:$0x3]
    %s218 = scalar_lea.vmem %s4, 6
    %v219 = vld [vmem:[%s218] sm:$0x3]
    %v228 = vunpack.c.l.b16 %v156
    %v229 = vunpack.c.h.b16 %v156
    %v230 = vunpack.c.l.b16 %v157
    %v231 = vunpack.c.h.b16 %v157
    %v232 = vunpack.c.l.b16 %v158
    %v233 = vunpack.c.h.b16 %v158
    %v234 = vunpack.c.l.b16 %v159
    %v235 = vunpack.c.h.b16 %v159
    %v236 = vunpack.c.l.b16 %v160
    %v237 = vunpack.c.h.b16 %v160
    %v238 = vunpack.c.l.b16 %v161
    %v239 = vunpack.c.h.b16 %v161
    %v240 = vunpack.c.l.b16 %v162
    %v241 = vunpack.c.h.b16 %v162
    %v242 = vunpack.c.l.b16 %v163
    %v243 = vunpack.c.h.b16 %v163
    %v244 = vpack.c.b16 %v230, %v228
    %v245 = vpack.c.b16 %v231, %v229
    %v246 = vpack.c.b16 %v234, %v232
    %v247 = vpack.c.b16 %v235, %v233
    %v248 = vpack.c.b16 %v238, %v236
    %v249 = vpack.c.b16 %v239, %v237
    %v250 = vpack.c.b16 %v242, %v240
    %v251 = vpack.c.b16 %v243, %v241
    %vm260 = vcmask 523264
    %v262 = vsel %vm260, 0, 0
    %264 = vmatpush.bf16.msra.mxu0 0
    %265 = vmatpush.bf16.msra.mxu0 0
    %266 = vmatpush.bf16.msra.mxu0 0
    %267 = vmatpush.bf16.msra.mxu0 0
    %268 = vmatpush.bf16.msra.mxu0 %v250
    %269 = vmatpush.bf16.msra.mxu0 %v248
    %270 = vmatpush.bf16.msra.mxu0 %v246
    %271 = vmatpush.bf16.msra.mxu0 %v244
    %272 = vmatmul.bf16.gmra.mxu0 %v262
    %v273 = vpop.f32.mrf.mxu0
    %v274 = vadd.f32 0.0, %v273
    %v275 = vpop.f32.mrf.mxu0
    %276 = vdwg.mxu0
    %277 = vmatpush.bf16.msra.mxu0 0
    %278 = vmatpush.bf16.msra.mxu0 0
    %279 = vmatpush.bf16.msra.mxu0 0
    %280 = vmatpush.bf16.msra.mxu0 0
    %281 = vmatpush.bf16.msra.mxu0 %v251
    %282 = vmatpush.bf16.msra.mxu0 %v249
    %283 = vmatpush.bf16.msra.mxu0 %v247
    %284 = vmatpush.bf16.msra.mxu0 %v245
    %285 = vmatmul.bf16.gmra.mxu0 %v262
    %v286 = vpop.f32.mrf.mxu0
    %v287 = vadd.f32 0.0, %v286
    %v288 = vpop.f32.mrf.mxu0
    %289 = vdwg.mxu0
    %v290 = vadd.f32 %v108, %v274
    %v291 = vadd.f32 %v137, %v287
    %v292 = vxor.u32 %v290, 2147483648
    %v293 = vmul.f32 %v292, 1.442695
    %v294 = vpow.pop %v293
    %v295 = vadd.f32 %v294, 1.0
    %v296 = vrcp.pop %v295
    %v297 = vmul.f32 %v295, %v296
    %v298 = vsub.f32 1.0, %v297
    %v299 = vmul.f32 %v296, %v298
    %v300 = vadd.f32 %v296, %v299
    %vm301 = vweird.f32 %v295
    %vm302 = vweird.f32 %v296
    %vm303 = vmor %vm301, %vm302
    %v304 = vsel %vm303, %v296, %v300
    %v305 = vand.u32 2147483647, %v295
    %vm306 = vcmp.eq.f32.partialorder %v305, 8.507059e+37
    %v307 = vand.u32 %v295, 2147483648
    %v308 = vor.u32 1.1754944e-38, %v307
    %v309 = vsel %vm306, %v308, %v304
    %v310 = vmul.f32 1.0, %v309
    %v311 = vmul.f32 %v291, %v52
    %v312 = vxor.u32 %v311, 2147483648
    %v313 = vmul.f32 %v312, 1.442695
    %v314 = vpow.pop %v313
    %v315 = vadd.f32 %v314, 1.0
    %v316 = vrcp.pop %v315
    %v317 = vmul.f32 %v315, %v316
    %v318 = vsub.f32 1.0, %v317
    %v319 = vmul.f32 %v316, %v318
    %v320 = vadd.f32 %v316, %v319
    %vm321 = vweird.f32 %v315
    %vm322 = vweird.f32 %v316
    %vm323 = vmor %vm321, %vm322
    %v324 = vsel %vm323, %v316, %v320
    %v325 = vand.u32 2147483647, %v315
    %vm326 = vcmp.eq.f32.partialorder %v325, 8.507059e+37
    %v327 = vand.u32 %v315, 2147483648
    %v328 = vor.u32 1.1754944e-38, %v327
    %v329 = vsel %vm326, %v328, %v324
    %v330 = vmul.f32 1.0, %v329
    %v331 = vmul.f32 %v330, %v52
    %v332 = vsub.f32 %v331, %v53
    %v333 = vmul.f32 %v310, %v332
    %v334 = vmul.f32 %v310, 0.0
    %336 = vrot.lane.b32.xlu0 %v333, 64
    %v337 = vpop.permute.xlu0 %336
    %v339 = vadd.f32 %v334, %v337
    %v340 = vtanh.pop %v339
    %v341 = vmul.f32 %v332, %v340
    %v342 = vpack.c.bf16 %v341, %v341
    %v344 = vsel %vm260, %v342, 0
    %346 = vmatpush.bf16.msra.mxu0 0
    %347 = vmatpush.bf16.msra.mxu0 0
    %348 = vmatpush.bf16.msra.mxu0 0
    %349 = vmatpush.bf16.msra.mxu0 0
    %350 = vmatpush.bf16.msra.mxu0 %v250
    %351 = vmatpush.bf16.msra.mxu0 %v248
    %352 = vmatpush.bf16.msra.mxu0 %v246
    %353 = vmatpush.bf16.msra.mxu0 %v244
    %354 = vmatmul.bf16.gmra.mxu0 %v344
    %v355 = vpop.f32.mrf.mxu0
    %v356 = vadd.f32 0.0, %v355
    %v357 = vpop.f32.mrf.mxu0
    %358 = vdwg.mxu0
    %359 = vmatpush.bf16.msra.mxu0 0
    %360 = vmatpush.bf16.msra.mxu0 0
    %361 = vmatpush.bf16.msra.mxu0 0
    %362 = vmatpush.bf16.msra.mxu0 0
    %363 = vmatpush.bf16.msra.mxu0 %v251
    %364 = vmatpush.bf16.msra.mxu0 %v249
    %365 = vmatpush.bf16.msra.mxu0 %v247
    %366 = vmatpush.bf16.msra.mxu0 %v245
    %367 = vmatmul.bf16.gmra.mxu0 %v344
    %v368 = vpop.f32.mrf.mxu0
    %v369 = vadd.f32 0.0, %v368
    %v370 = vpop.f32.mrf.mxu0
    %371 = vdwg.mxu0
    %v372 = vadd.f32 %v110, %v356
    %v373 = vadd.f32 %v139, %v369
    %v374 = vxor.u32 %v372, 2147483648
    %v375 = vmul.f32 %v374, 1.442695
    %v376 = vpow.pop %v375
    %v377 = vadd.f32 %v376, 1.0
    %v378 = vrcp.pop %v377
    %v379 = vmul.f32 %v377, %v378
    %v380 = vsub.f32 1.0, %v379
    %v381 = vmul.f32 %v378, %v380
    %v382 = vadd.f32 %v378, %v381
    %vm383 = vweird.f32 %v377
    %vm384 = vweird.f32 %v378
    %vm385 = vmor %vm383, %vm384
    %v386 = vsel %vm385, %v378, %v382
    %v387 = vand.u32 2147483647, %v377
    %vm388 = vcmp.eq.f32.partialorder %v387, 8.507059e+37
    %v389 = vand.u32 %v377, 2147483648
    %v390 = vor.u32 1.1754944e-38, %v389
    %v391 = vsel %vm388, %v390, %v386
    %v392 = vmul.f32 1.0, %v391
    %v393 = vmul.f32 %v373, %v52
    %v394 = vxor.u32 %v393, 2147483648
    %v395 = vmul.f32 %v394, 1.442695
    %v396 = vpow.pop %v395
    %v397 = vadd.f32 %v396, 1.0
    %v398 = vrcp.pop %v397
    %v399 = vmul.f32 %v397, %v398
    %v400 = vsub.f32 1.0, %v399
    %v401 = vmul.f32 %v398, %v400
    %v402 = vadd.f32 %v398, %v401
    %vm403 = vweird.f32 %v397
    %vm404 = vweird.f32 %v398
    %vm405 = vmor %vm403, %vm404
    %v406 = vsel %vm405, %v398, %v402
    %v407 = vand.u32 2147483647, %v397
    %vm408 = vcmp.eq.f32.partialorder %v407, 8.507059e+37
    %v409 = vand.u32 %v397, 2147483648
    %v410 = vor.u32 1.1754944e-38, %v409
    %v411 = vsel %vm408, %v410, %v406
    %v412 = vmul.f32 1.0, %v411
    %v413 = vmul.f32 %v412, %v52
    %v414 = vsub.f32 %v413, %v53
    %v415 = vmul.f32 %v392, %v414
    %v416 = vmul.f32 %v392, %v339
    %418 = vrot.lane.b32.xlu0 %v415, 64
    %v419 = vpop.permute.xlu0 %418
    %v421 = vadd.f32 %v416, %v419
    %v422 = vtanh.pop %v421
    %v423 = vmul.f32 %v414, %v422
    %v424 = vpack.c.bf16 %v423, %v423
    %v425 = vsel %vm260, %v342, 0
    %v428 = vperm.slane %v215, 0
    %v429 = vperm.slane %v215, 1
    %v448 = vunpack.c.l.b16 %v164
    %v449 = vunpack.c.h.b16 %v164
    %v450 = vunpack.c.l.b16 %v165
    %v451 = vunpack.c.h.b16 %v165
    %v452 = vunpack.c.l.b16 %v166
    %v453 = vunpack.c.h.b16 %v166
    %v454 = vunpack.c.l.b16 %v167
    %v455 = vunpack.c.h.b16 %v167
    %v456 = vunpack.c.l.b16 %v168
    %v457 = vunpack.c.h.b16 %v168
    %v458 = vunpack.c.l.b16 %v169
    %v459 = vunpack.c.h.b16 %v169
    %v460 = vunpack.c.l.b16 %v170
    %v461 = vunpack.c.h.b16 %v170
    %v462 = vunpack.c.l.b16 %v171
    %v463 = vunpack.c.h.b16 %v171
    %v464 = vunpack.c.l.b16 %v172
    %v465 = vunpack.c.h.b16 %v172
    %v466 = vunpack.c.l.b16 %v173
    %v467 = vunpack.c.h.b16 %v173
    %v468 = vunpack.c.l.b16 %v174
    %v469 = vunpack.c.h.b16 %v174
    %v470 = vunpack.c.l.b16 %v175
    %v471 = vunpack.c.h.b16 %v175
    %v472 = vunpack.c.l.b16 %v176
    %v473 = vunpack.c.h.b16 %v176
    %v474 = vunpack.c.l.b16 %v177
    %v475 = vunpack.c.h.b16 %v177
    %v476 = vunpack.c.l.b16 %v178
    %v477 = vunpack.c.h.b16 %v178
    %v478 = vunpack.c.l.b16 %v179
    %v479 = vunpack.c.h.b16 %v179
    %v480 = vpack.c.b16 %v450, %v448
    %v481 = vpack.c.b16 %v451, %v449
    %v482 = vpack.c.b16 %v454, %v452
    %v483 = vpack.c.b16 %v455, %v453
    %v484 = vpack.c.b16 %v458, %v456
    %v485 = vpack.c.b16 %v459, %v457
    %v486 = vpack.c.b16 %v462, %v460
    %v487 = vpack.c.b16 %v463, %v461
    %v488 = vpack.c.b16 %v466, %v464
    %v489 = vpack.c.b16 %v467, %v465
    %v490 = vpack.c.b16 %v470, %v468
    %v491 = vpack.c.b16 %v471, %v469
    %v492 = vpack.c.b16 %v474, %v472
    %v493 = vpack.c.b16 %v475, %v473
    %v494 = vpack.c.b16 %v478, %v476
    %v495 = vpack.c.b16 %v479, %v477
    %512 = vmatpush.bf16.msra.mxu0 %v494
    %513 = vmatpush.bf16.msra.mxu0 %v492
    %514 = vmatpush.bf16.msra.mxu0 %v490
    %515 = vmatpush.bf16.msra.mxu0 %v488
    %516 = vmatpush.bf16.msra.mxu0 %v486
    %517 = vmatpush.bf16.msra.mxu0 %v484
    %518 = vmatpush.bf16.msra.mxu0 %v482
    %519 = vmatpush.bf16.msra.mxu0 %v480
    %520 = vmatmul.bf16.gmra.mxu0 %v425
    %v521 = vpop.f32.mrf.mxu0
    %v522 = vadd.f32 %v428, %v521
    %v523 = vpop.f32.mrf.mxu0
    %524 = vdwg.mxu0
    %525 = vmatpush.bf16.msra.mxu0 %v495
    %526 = vmatpush.bf16.msra.mxu0 %v493
    %527 = vmatpush.bf16.msra.mxu0 %v491
    %528 = vmatpush.bf16.msra.mxu0 %v489
    %529 = vmatpush.bf16.msra.mxu0 %v487
    %530 = vmatpush.bf16.msra.mxu0 %v485
    %531 = vmatpush.bf16.msra.mxu0 %v483
    %532 = vmatpush.bf16.msra.mxu0 %v481
    %533 = vmatmul.bf16.gmra.mxu0 %v425
    %v534 = vpop.f32.mrf.mxu0
    %v535 = vadd.f32 %v429, %v534
    %v536 = vpop.f32.mrf.mxu0
    %537 = vdwg.mxu0
    %v538 = vxor.u32 %v522, 2147483648
    %v539 = vmul.f32 %v538, 1.442695
    %v540 = vpow.pop %v539
    %v541 = vadd.f32 %v540, 1.0
    %v542 = vrcp.pop %v541
    %v543 = vmul.f32 %v541, %v542
    %v544 = vsub.f32 1.0, %v543
    %v545 = vmul.f32 %v542, %v544
    %v546 = vadd.f32 %v542, %v545
    %vm547 = vweird.f32 %v541
    %vm548 = vweird.f32 %v542
    %vm549 = vmor %vm547, %vm548
    %v550 = vsel %vm549, %v542, %v546
    %v551 = vand.u32 2147483647, %v541
    %vm552 = vcmp.eq.f32.partialorder %v551, 8.507059e+37
    %v553 = vand.u32 %v541, 2147483648
    %v554 = vor.u32 1.1754944e-38, %v553
    %v555 = vsel %vm552, %v554, %v550
    %v556 = vmul.f32 1.0, %v555
    %v557 = vmul.f32 %v535, %v52
    %v558 = vxor.u32 %v557, 2147483648
    %v559 = vmul.f32 %v558, 1.442695
    %v560 = vpow.pop %v559
    %v561 = vadd.f32 %v560, 1.0
    %v562 = vrcp.pop %v561
    %v563 = vmul.f32 %v561, %v562
    %v564 = vsub.f32 1.0, %v563
    %v565 = vmul.f32 %v562, %v564
    %v566 = vadd.f32 %v562, %v565
    %vm567 = vweird.f32 %v561
    %vm568 = vweird.f32 %v562
    %vm569 = vmor %vm567, %vm568
    %v570 = vsel %vm569, %v562, %v566
    %v571 = vand.u32 2147483647, %v561
    %vm572 = vcmp.eq.f32.partialorder %v571, 8.507059e+37
    %v573 = vand.u32 %v561, 2147483648
    %v574 = vor.u32 1.1754944e-38, %v573
    %v575 = vsel %vm572, %v574, %v570
    %v576 = vmul.f32 1.0, %v575
    %v577 = vmul.f32 %v576, %v52
    %v578 = vsub.f32 %v577, %v53
    %v579 = vmul.f32 %v556, %v578
    %v580 = vmul.f32 %v556, 0.0
    %582 = vrot.lane.b32.xlu0 %v579, 64
    %v583 = vpop.permute.xlu0 %582
    %v585 = vadd.f32 %v580, %v583
    %v586 = vtanh.pop %v585
    %v587 = vmul.f32 %v578, %v586
    %v588 = vpack.c.bf16 %v587, %v587
    %v590 = vsel %vm260, %v424, 0
    %592 = vmatpush.bf16.msra.mxu0 0
    %593 = vmatpush.bf16.msra.mxu0 0
    %594 = vmatpush.bf16.msra.mxu0 0
    %595 = vmatpush.bf16.msra.mxu0 0
    %596 = vmatpush.bf16.msra.mxu0 %v250
    %597 = vmatpush.bf16.msra.mxu0 %v248
    %598 = vmatpush.bf16.msra.mxu0 %v246
    %599 = vmatpush.bf16.msra.mxu0 %v244
    %600 = vmatmul.bf16.gmra.mxu0 %v590
    %v601 = vpop.f32.mrf.mxu0
    %v602 = vadd.f32 0.0, %v601
    %v603 = vpop.f32.mrf.mxu0
    %604 = vdwg.mxu0
    %605 = vmatpush.bf16.msra.mxu0 0
    %606 = vmatpush.bf16.msra.mxu0 0
    %607 = vmatpush.bf16.msra.mxu0 0
    %608 = vmatpush.bf16.msra.mxu0 0
    %609 = vmatpush.bf16.msra.mxu0 %v251
    %610 = vmatpush.bf16.msra.mxu0 %v249
    %611 = vmatpush.bf16.msra.mxu0 %v247
    %612 = vmatpush.bf16.msra.mxu0 %v245
    %613 = vmatmul.bf16.gmra.mxu0 %v590
    %v614 = vpop.f32.mrf.mxu0
    %v615 = vadd.f32 0.0, %v614
    %v616 = vpop.f32.mrf.mxu0
    %617 = vdwg.mxu0
    %v618 = vadd.f32 %v113, %v602
    %v619 = vadd.f32 %v142, %v615
    %v620 = vxor.u32 %v618, 2147483648
    %v621 = vmul.f32 %v620, 1.442695
    %v622 = vpow.pop %v621
    %v623 = vadd.f32 %v622, 1.0
    %v624 = vrcp.pop %v623
    %v625 = vmul.f32 %v623, %v624
    %v626 = vsub.f32 1.0, %v625
    %v627 = vmul.f32 %v624, %v626
    %v628 = vadd.f32 %v624, %v627
    %vm629 = vweird.f32 %v623
    %vm630 = vweird.f32 %v624
    %vm631 = vmor %vm629, %vm630
    %v632 = vsel %vm631, %v624, %v628
    %v633 = vand.u32 2147483647, %v623
    %vm634 = vcmp.eq.f32.partialorder %v633, 8.507059e+37
    %v635 = vand.u32 %v623, 2147483648
    %v636 = vor.u32 1.1754944e-38, %v635
    %v637 = vsel %vm634, %v636, %v632
    %v638 = vmul.f32 1.0, %v637
    %v639 = vmul.f32 %v619, %v52
    %v640 = vxor.u32 %v639, 2147483648
    %v641 = vmul.f32 %v640, 1.442695
    %v642 = vpow.pop %v641
    %v643 = vadd.f32 %v642, 1.0
    %v644 = vrcp.pop %v643
    %v645 = vmul.f32 %v643, %v644
    %v646 = vsub.f32 1.0, %v645
    %v647 = vmul.f32 %v644, %v646
    %v648 = vadd.f32 %v644, %v647
    %vm649 = vweird.f32 %v643
    %vm650 = vweird.f32 %v644
    %vm651 = vmor %vm649, %vm650
    %v652 = vsel %vm651, %v644, %v648
    %v653 = vand.u32 2147483647, %v643
    %vm654 = vcmp.eq.f32.partialorder %v653, 8.507059e+37
    %v655 = vand.u32 %v643, 2147483648
    %v656 = vor.u32 1.1754944e-38, %v655
    %v657 = vsel %vm654, %v656, %v652
    %v658 = vmul.f32 1.0, %v657
    %v659 = vmul.f32 %v658, %v52
    %v660 = vsub.f32 %v659, %v53
    %v661 = vmul.f32 %v638, %v660
    %v662 = vmul.f32 %v638, %v421
    %664 = vrot.lane.b32.xlu0 %v661, 64
    %v665 = vpop.permute.xlu0 %664
    %v667 = vadd.f32 %v662, %v665
    %v668 = vtanh.pop %v667
    %v669 = vmul.f32 %v660, %v668
    %v670 = vpack.c.bf16 %v669, %v669
    %v672 = vunpack.c.l.b16 %v588
    %v673 = vpack.c.b16 %v672, %v672
    %674 = vrot.lane.b32.xlu0 %v673, 64
    %v675 = vpop.permute.xlu0 %674
    %v677 = vsel %vm260, %v424, %v675
    %679 = vmatpush.bf16.msra.mxu0 %v494
    %680 = vmatpush.bf16.msra.mxu0 %v492
    %681 = vmatpush.bf16.msra.mxu0 %v490
    %682 = vmatpush.bf16.msra.mxu0 %v488
    %683 = vmatpush.bf16.msra.mxu0 %v486
    %684 = vmatpush.bf16.msra.mxu0 %v484
    %685 = vmatpush.bf16.msra.mxu0 %v482
    %686 = vmatpush.bf16.msra.mxu0 %v480
    %687 = vmatmul.bf16.gmra.mxu0 %v677
    %v688 = vpop.f32.mrf.mxu0
    %v689 = vadd.f32 %v428, %v688
    %v690 = vpop.f32.mrf.mxu0
    %691 = vdwg.mxu0
    %692 = vmatpush.bf16.msra.mxu0 %v495
    %693 = vmatpush.bf16.msra.mxu0 %v493
    %694 = vmatpush.bf16.msra.mxu0 %v491
    %695 = vmatpush.bf16.msra.mxu0 %v489
    %696 = vmatpush.bf16.msra.mxu0 %v487
    %697 = vmatpush.bf16.msra.mxu0 %v485
    %698 = vmatpush.bf16.msra.mxu0 %v483
    %699 = vmatpush.bf16.msra.mxu0 %v481
    %700 = vmatmul.bf16.gmra.mxu0 %v677
    %v701 = vpop.f32.mrf.mxu0
    %v702 = vadd.f32 %v429, %v701
    %v703 = vpop.f32.mrf.mxu0
    %704 = vdwg.mxu0
    %v705 = vxor.u32 %v689, 2147483648
    %v706 = vmul.f32 %v705, 1.442695
    %v707 = vpow.pop %v706
    %v708 = vadd.f32 %v707, 1.0
    %v709 = vrcp.pop %v708
    %v710 = vmul.f32 %v708, %v709
    %v711 = vsub.f32 1.0, %v710
    %v712 = vmul.f32 %v709, %v711
    %v713 = vadd.f32 %v709, %v712
    %vm714 = vweird.f32 %v708
    %vm715 = vweird.f32 %v709
    %vm716 = vmor %vm714, %vm715
    %v717 = vsel %vm716, %v709, %v713
    %v718 = vand.u32 2147483647, %v708
    %vm719 = vcmp.eq.f32.partialorder %v718, 8.507059e+37
    %v720 = vand.u32 %v708, 2147483648
    %v721 = vor.u32 1.1754944e-38, %v720
    %v722 = vsel %vm719, %v721, %v717
    %v723 = vmul.f32 1.0, %v722
    %v724 = vmul.f32 %v702, %v52
    %v725 = vxor.u32 %v724, 2147483648
    %v726 = vmul.f32 %v725, 1.442695
    %v727 = vpow.pop %v726
    %v728 = vadd.f32 %v727, 1.0
    %v729 = vrcp.pop %v728
    %v730 = vmul.f32 %v728, %v729
    %v731 = vsub.f32 1.0, %v730
    %v732 = vmul.f32 %v729, %v731
    %v733 = vadd.f32 %v729, %v732
    %vm734 = vweird.f32 %v728
    %vm735 = vweird.f32 %v729
    %vm736 = vmor %vm734, %vm735
    %v737 = vsel %vm736, %v729, %v733
    %v738 = vand.u32 2147483647, %v728
    %vm739 = vcmp.eq.f32.partialorder %v738, 8.507059e+37
    %v740 = vand.u32 %v728, 2147483648
    %v741 = vor.u32 1.1754944e-38, %v740
    %v742 = vsel %vm739, %v741, %v737
    %v743 = vmul.f32 1.0, %v742
    %v744 = vmul.f32 %v743, %v52
    %v745 = vsub.f32 %v744, %v53
    %v746 = vmul.f32 %v723, %v745
    %v747 = vmul.f32 %v723, %v585
    %749 = vrot.lane.b32.xlu0 %v746, 64
    %v750 = vpop.permute.xlu0 %749
    %v752 = vadd.f32 %v747, %v750
    %v753 = vtanh.pop %v752
    %v754 = vmul.f32 %v745, %v753
    %v755 = vpack.c.bf16 %v754, %v754
    %v757 = vsel %vm260, %v588, 0
    %v760 = vperm.slane %v217, 0
    %v761 = vperm.slane %v217, 1
    %v780 = vunpack.c.l.b16 %v181
    %v781 = vunpack.c.h.b16 %v181
    %v782 = vunpack.c.l.b16 %v182
    %v783 = vunpack.c.h.b16 %v182
    %v784 = vunpack.c.l.b16 %v183
    %v785 = vunpack.c.h.b16 %v183
    %v786 = vunpack.c.l.b16 %v184
    %v787 = vunpack.c.h.b16 %v184
    %v788 = vunpack.c.l.b16 %v185
    %v789 = vunpack.c.h.b16 %v185
    %v790 = vunpack.c.l.b16 %v186
    %v791 = vunpack.c.h.b16 %v186
    %v792 = vunpack.c.l.b16 %v187
    %v793 = vunpack.c.h.b16 %v187
    %v794 = vunpack.c.l.b16 %v188
    %v795 = vunpack.c.h.b16 %v188
    %v796 = vunpack.c.l.b16 %v189
    %v797 = vunpack.c.h.b16 %v189
    %v798 = vunpack.c.l.b16 %v190
    %v799 = vunpack.c.h.b16 %v190
    %v800 = vunpack.c.l.b16 %v191
    %v801 = vunpack.c.h.b16 %v191
    %v802 = vunpack.c.l.b16 %v192
    %v803 = vunpack.c.h.b16 %v192
    %v804 = vunpack.c.l.b16 %v193
    %v805 = vunpack.c.h.b16 %v193
    %v806 = vunpack.c.l.b16 %v194
    %v807 = vunpack.c.h.b16 %v194
    %v808 = vunpack.c.l.b16 %v195
    %v809 = vunpack.c.h.b16 %v195
    %v810 = vunpack.c.l.b16 %v196
    %v811 = vunpack.c.h.b16 %v196
    %v812 = vpack.c.b16 %v782, %v780
    %v813 = vpack.c.b16 %v783, %v781
    %v814 = vpack.c.b16 %v786, %v784
    %v815 = vpack.c.b16 %v787, %v785
    %v816 = vpack.c.b16 %v790, %v788
    %v817 = vpack.c.b16 %v791, %v789
    %v818 = vpack.c.b16 %v794, %v792
    %v819 = vpack.c.b16 %v795, %v793
    %v820 = vpack.c.b16 %v798, %v796
    %v821 = vpack.c.b16 %v799, %v797
    %v822 = vpack.c.b16 %v802, %v800
    %v823 = vpack.c.b16 %v803, %v801
    %v824 = vpack.c.b16 %v806, %v804
    %v825 = vpack.c.b16 %v807, %v805
    %v826 = vpack.c.b16 %v810, %v808
    %v827 = vpack.c.b16 %v811, %v809
    %844 = vmatpush.bf16.msra.mxu0 %v826
    %845 = vmatpush.bf16.msra.mxu0 %v824
    %846 = vmatpush.bf16.msra.mxu0 %v822
    %847 = vmatpush.bf16.msra.mxu0 %v820
    %848 = vmatpush.bf16.msra.mxu0 %v818
    %849 = vmatpush.bf16.msra.mxu0 %v816
    %850 = vmatpush.bf16.msra.mxu0 %v814
    %851 = vmatpush.bf16.msra.mxu0 %v812
    %852 = vmatmul.bf16.gmra.mxu0 %v757
    %v853 = vpop.f32.mrf.mxu0
    %v854 = vadd.f32 %v760, %v853
    %v855 = vpop.f32.mrf.mxu0
    %856 = vdwg.mxu0
    %857 = vmatpush.bf16.msra.mxu0 %v827
    %858 = vmatpush.bf16.msra.mxu0 %v825
    %859 = vmatpush.bf16.msra.mxu0 %v823
    %860 = vmatpush.bf16.msra.mxu0 %v821
    %861 = vmatpush.bf16.msra.mxu0 %v819
    %862 = vmatpush.bf16.msra.mxu0 %v817
    %863 = vmatpush.bf16.msra.mxu0 %v815
    %864 = vmatpush.bf16.msra.mxu0 %v813
    %865 = vmatmul.bf16.gmra.mxu0 %v757
    %v866 = vpop.f32.mrf.mxu0
    %v867 = vadd.f32 %v761, %v866
    %v868 = vpop.f32.mrf.mxu0
    %869 = vdwg.mxu0
    %v870 = vxor.u32 %v854, 2147483648
    %v871 = vmul.f32 %v870, 1.442695
    %v872 = vpow.pop %v871
    %v873 = vadd.f32 %v872, 1.0
    %v874 = vrcp.pop %v873
    %v875 = vmul.f32 %v873, %v874
    %v876 = vsub.f32 1.0, %v875
    %v877 = vmul.f32 %v874, %v876
    %v878 = vadd.f32 %v874, %v877
    %vm879 = vweird.f32 %v873
    %vm880 = vweird.f32 %v874
    %vm881 = vmor %vm879, %vm880
    %v882 = vsel %vm881, %v874, %v878
    %v883 = vand.u32 2147483647, %v873
    %vm884 = vcmp.eq.f32.partialorder %v883, 8.507059e+37
    %v885 = vand.u32 %v873, 2147483648
    %v886 = vor.u32 1.1754944e-38, %v885
    %v887 = vsel %vm884, %v886, %v882
    %v888 = vmul.f32 1.0, %v887
    %v889 = vmul.f32 %v867, %v52
    %v890 = vxor.u32 %v889, 2147483648
    %v891 = vmul.f32 %v890, 1.442695
    %v892 = vpow.pop %v891
    %v893 = vadd.f32 %v892, 1.0
    %v894 = vrcp.pop %v893
    %v895 = vmul.f32 %v893, %v894
    %v896 = vsub.f32 1.0, %v895
    %v897 = vmul.f32 %v894, %v896
    %v898 = vadd.f32 %v894, %v897
    %vm899 = vweird.f32 %v893
    %vm900 = vweird.f32 %v894
    %vm901 = vmor %vm899, %vm900
    %v902 = vsel %vm901, %v894, %v898
    %v903 = vand.u32 2147483647, %v893
    %vm904 = vcmp.eq.f32.partialorder %v903, 8.507059e+37
    %v905 = vand.u32 %v893, 2147483648
    %v906 = vor.u32 1.1754944e-38, %v905
    %v907 = vsel %vm904, %v906, %v902
    %v908 = vmul.f32 1.0, %v907
    %v909 = vmul.f32 %v908, %v52
    %v910 = vsub.f32 %v909, %v53
    %v911 = vmul.f32 %v888, %v910
    %v912 = vmul.f32 %v888, 0.0
    %914 = vrot.lane.b32.xlu0 %v911, 64
    %v915 = vpop.permute.xlu0 %914
    %v917 = vadd.f32 %v912, %v915
    %v918 = vtanh.pop %v917
    %v919 = vmul.f32 %v910, %v918
    %v920 = vpack.c.bf16 %v919, %v919
    %v922 = vsel %vm260, %v670, 0
    %924 = vmatpush.bf16.msra.mxu0 0
    %925 = vmatpush.bf16.msra.mxu0 0
    %926 = vmatpush.bf16.msra.mxu0 0
    %927 = vmatpush.bf16.msra.mxu0 0
    %928 = vmatpush.bf16.msra.mxu0 %v250
    %929 = vmatpush.bf16.msra.mxu0 %v248
    %930 = vmatpush.bf16.msra.mxu0 %v246
    %931 = vmatpush.bf16.msra.mxu0 %v244
    %932 = vmatmul.bf16.gmra.mxu0 %v922
    %v933 = vpop.f32.mrf.mxu0
    %v934 = vadd.f32 0.0, %v933
    %v935 = vpop.f32.mrf.mxu0
    %936 = vdwg.mxu0
    %937 = vmatpush.bf16.msra.mxu0 0
    %938 = vmatpush.bf16.msra.mxu0 0
    %939 = vmatpush.bf16.msra.mxu0 0
    %940 = vmatpush.bf16.msra.mxu0 0
    %941 = vmatpush.bf16.msra.mxu0 %v251
    %942 = vmatpush.bf16.msra.mxu0 %v249
    %943 = vmatpush.bf16.msra.mxu0 %v247
    %944 = vmatpush.bf16.msra.mxu0 %v245
    %945 = vmatmul.bf16.gmra.mxu0 %v922
    %v946 = vpop.f32.mrf.mxu0
    %v947 = vadd.f32 0.0, %v946
    %v948 = vpop.f32.mrf.mxu0
    %949 = vdwg.mxu0
    %v950 = vadd.f32 %v115, %v934
    %v951 = vadd.f32 %v144, %v947
    %v952 = vxor.u32 %v950, 2147483648
    %v953 = vmul.f32 %v952, 1.442695
    %v954 = vpow.pop %v953
    %v955 = vadd.f32 %v954, 1.0
    %v956 = vrcp.pop %v955
    %v957 = vmul.f32 %v955, %v956
    %v958 = vsub.f32 1.0, %v957
    %v959 = vmul.f32 %v956, %v958
    %v960 = vadd.f32 %v956, %v959
    %vm961 = vweird.f32 %v955
    %vm962 = vweird.f32 %v956
    %vm963 = vmor %vm961, %vm962
    %v964 = vsel %vm963, %v956, %v960
    %v965 = vand.u32 2147483647, %v955
    %vm966 = vcmp.eq.f32.partialorder %v965, 8.507059e+37
    %v967 = vand.u32 %v955, 2147483648
    %v968 = vor.u32 1.1754944e-38, %v967
    %v969 = vsel %vm966, %v968, %v964
    %v970 = vmul.f32 1.0, %v969
    %v971 = vmul.f32 %v951, %v52
    %v972 = vxor.u32 %v971, 2147483648
    %v973 = vmul.f32 %v972, 1.442695
    %v974 = vpow.pop %v973
    %v975 = vadd.f32 %v974, 1.0
    %v976 = vrcp.pop %v975
    %v977 = vmul.f32 %v975, %v976
    %v978 = vsub.f32 1.0, %v977
    %v979 = vmul.f32 %v976, %v978
    %v980 = vadd.f32 %v976, %v979
    %vm981 = vweird.f32 %v975
    %vm982 = vweird.f32 %v976
    %vm983 = vmor %vm981, %vm982
    %v984 = vsel %vm983, %v976, %v980
    %v985 = vand.u32 2147483647, %v975
    %vm986 = vcmp.eq.f32.partialorder %v985, 8.507059e+37
    %v987 = vand.u32 %v975, 2147483648
    %v988 = vor.u32 1.1754944e-38, %v987
    %v989 = vsel %vm986, %v988, %v984
    %v990 = vmul.f32 1.0, %v989
    %v991 = vmul.f32 %v990, %v52
    %v992 = vsub.f32 %v991, %v53
    %v993 = vmul.f32 %v970, %v992
    %v994 = vmul.f32 %v970, %v667
    %996 = vrot.lane.b32.xlu0 %v993, 64
    %v997 = vpop.permute.xlu0 %996
    %v999 = vadd.f32 %v994, %v997
    %v1000 = vtanh.pop %v999
    %v1001 = vmul.f32 %v992, %v1000
    %v1002 = vpack.c.bf16 %v1001, %v1001
    %v1004 = vunpack.c.l.b16 %v755
    %v1005 = vpack.c.b16 %v1004, %v1004
    %1006 = vrot.lane.b32.xlu0 %v1005, 64
    %v1007 = vpop.permute.xlu0 %1006
    %v1009 = vsel %vm260, %v670, %v1007
    %1011 = vmatpush.bf16.msra.mxu0 %v494
    %1012 = vmatpush.bf16.msra.mxu0 %v492
    %1013 = vmatpush.bf16.msra.mxu0 %v490
    %1014 = vmatpush.bf16.msra.mxu0 %v488
    %1015 = vmatpush.bf16.msra.mxu0 %v486
    %1016 = vmatpush.bf16.msra.mxu0 %v484
    %1017 = vmatpush.bf16.msra.mxu0 %v482
    %1018 = vmatpush.bf16.msra.mxu0 %v480
    %1019 = vmatmul.bf16.gmra.mxu0 %v1009
    %v1020 = vpop.f32.mrf.mxu0
    %v1021 = vadd.f32 %v428, %v1020
    %v1022 = vpop.f32.mrf.mxu0
    %1023 = vdwg.mxu0
    %1024 = vmatpush.bf16.msra.mxu0 %v495
    %1025 = vmatpush.bf16.msra.mxu0 %v493
    %1026 = vmatpush.bf16.msra.mxu0 %v491
    %1027 = vmatpush.bf16.msra.mxu0 %v489
    %1028 = vmatpush.bf16.msra.mxu0 %v487
    %1029 = vmatpush.bf16.msra.mxu0 %v485
    %1030 = vmatpush.bf16.msra.mxu0 %v483
    %1031 = vmatpush.bf16.msra.mxu0 %v481
    %1032 = vmatmul.bf16.gmra.mxu0 %v1009
    %v1033 = vpop.f32.mrf.mxu0
    %v1034 = vadd.f32 %v429, %v1033
    %v1035 = vpop.f32.mrf.mxu0
    %1036 = vdwg.mxu0
    %v1037 = vxor.u32 %v1021, 2147483648
    %v1038 = vmul.f32 %v1037, 1.442695
    %v1039 = vpow.pop %v1038
    %v1040 = vadd.f32 %v1039, 1.0
    %v1041 = vrcp.pop %v1040
    %v1042 = vmul.f32 %v1040, %v1041
    %v1043 = vsub.f32 1.0, %v1042
    %v1044 = vmul.f32 %v1041, %v1043
    %v1045 = vadd.f32 %v1041, %v1044
    %vm1046 = vweird.f32 %v1040
    %vm1047 = vweird.f32 %v1041
    %vm1048 = vmor %vm1046, %vm1047
    %v1049 = vsel %vm1048, %v1041, %v1045
    %v1050 = vand.u32 2147483647, %v1040
    %vm1051 = vcmp.eq.f32.partialorder %v1050, 8.507059e+37
    %v1052 = vand.u32 %v1040, 2147483648
    %v1053 = vor.u32 1.1754944e-38, %v1052
    %v1054 = vsel %vm1051, %v1053, %v1049
    %v1055 = vmul.f32 1.0, %v1054
    %v1056 = vmul.f32 %v1034, %v52
    %v1057 = vxor.u32 %v1056, 2147483648
    %v1058 = vmul.f32 %v1057, 1.442695
    %v1059 = vpow.pop %v1058
    %v1060 = vadd.f32 %v1059, 1.0
    %v1061 = vrcp.pop %v1060
    %v1062 = vmul.f32 %v1060, %v1061
    %v1063 = vsub.f32 1.0, %v1062
    %v1064 = vmul.f32 %v1061, %v1063
    %v1065 = vadd.f32 %v1061, %v1064
    %vm1066 = vweird.f32 %v1060
    %vm1067 = vweird.f32 %v1061
    %vm1068 = vmor %vm1066, %vm1067
    %v1069 = vsel %vm1068, %v1061, %v1065
    %v1070 = vand.u32 2147483647, %v1060
    %vm1071 = vcmp.eq.f32.partialorder %v1070, 8.507059e+37
    %v1072 = vand.u32 %v1060, 2147483648
    %v1073 = vor.u32 1.1754944e-38, %v1072
    %v1074 = vsel %vm1071, %v1073, %v1069
    %v1075 = vmul.f32 1.0, %v1074
    %v1076 = vmul.f32 %v1075, %v52
    %v1077 = vsub.f32 %v1076, %v53
    %v1078 = vmul.f32 %v1055, %v1077
    %v1079 = vmul.f32 %v1055, %v752
    %1081 = vrot.lane.b32.xlu0 %v1078, 64
    %v1082 = vpop.permute.xlu0 %1081
    %v1084 = vadd.f32 %v1079, %v1082
    %v1085 = vtanh.pop %v1084
    %v1086 = vmul.f32 %v1077, %v1085
    %v1087 = vpack.c.bf16 %v1086, %v1086
    %v1089 = vunpack.c.l.b16 %v920
    %v1090 = vpack.c.b16 %v1089, %v1089
    %1091 = vrot.lane.b32.xlu0 %v1090, 64
    %v1092 = vpop.permute.xlu0 %1091
    %v1095 = vsel %vm260, %v755, %v1092
    %1097 = vmatpush.bf16.msra.mxu0 %v826
    %1098 = vmatpush.bf16.msra.mxu0 %v824
    %1099 = vmatpush.bf16.msra.mxu0 %v822
    %1100 = vmatpush.bf16.msra.mxu0 %v820
    %1101 = vmatpush.bf16.msra.mxu0 %v818
    %1102 = vmatpush.bf16.msra.mxu0 %v816
    %1103 = vmatpush.bf16.msra.mxu0 %v814
    %1104 = vmatpush.bf16.msra.mxu0 %v812
    %1105 = vmatmul.bf16.gmra.mxu0 %v1095
    %v1106 = vpop.f32.mrf.mxu0
    %v1107 = vadd.f32 %v760, %v1106
    %v1108 = vpop.f32.mrf.mxu0
    %1109 = vdwg.mxu0
    %1110 = vmatpush.bf16.msra.mxu0 %v827
    %1111 = vmatpush.bf16.msra.mxu0 %v825
    %1112 = vmatpush.bf16.msra.mxu0 %v823
    %1113 = vmatpush.bf16.msra.mxu0 %v821
    %1114 = vmatpush.bf16.msra.mxu0 %v819
    %1115 = vmatpush.bf16.msra.mxu0 %v817
    %1116 = vmatpush.bf16.msra.mxu0 %v815
    %1117 = vmatpush.bf16.msra.mxu0 %v813
    %1118 = vmatmul.bf16.gmra.mxu0 %v1095
    %v1119 = vpop.f32.mrf.mxu0
    %v1120 = vadd.f32 %v761, %v1119
    %v1121 = vpop.f32.mrf.mxu0
    %1122 = vdwg.mxu0
    %v1123 = vxor.u32 %v1107, 2147483648
    %v1124 = vmul.f32 %v1123, 1.442695
    %v1125 = vpow.pop %v1124
    %v1126 = vadd.f32 %v1125, 1.0
    %v1127 = vrcp.pop %v1126
    %v1128 = vmul.f32 %v1126, %v1127
    %v1129 = vsub.f32 1.0, %v1128
    %v1130 = vmul.f32 %v1127, %v1129
    %v1131 = vadd.f32 %v1127, %v1130
    %vm1132 = vweird.f32 %v1126
    %vm1133 = vweird.f32 %v1127
    %vm1134 = vmor %vm1132, %vm1133
    %v1135 = vsel %vm1134, %v1127, %v1131
    %v1136 = vand.u32 2147483647, %v1126
    %vm1137 = vcmp.eq.f32.partialorder %v1136, 8.507059e+37
    %v1138 = vand.u32 %v1126, 2147483648
    %v1139 = vor.u32 1.1754944e-38, %v1138
    %v1140 = vsel %vm1137, %v1139, %v1135
    %v1141 = vmul.f32 1.0, %v1140
    %v1142 = vmul.f32 %v1120, %v52
    %v1143 = vxor.u32 %v1142, 2147483648
    %v1144 = vmul.f32 %v1143, 1.442695
    %v1145 = vpow.pop %v1144
    %v1146 = vadd.f32 %v1145, 1.0
    %v1147 = vrcp.pop %v1146
    %v1148 = vmul.f32 %v1146, %v1147
    %v1149 = vsub.f32 1.0, %v1148
    %v1150 = vmul.f32 %v1147, %v1149
    %v1151 = vadd.f32 %v1147, %v1150
    %vm1152 = vweird.f32 %v1146
    %vm1153 = vweird.f32 %v1147
    %vm1154 = vmor %vm1152, %vm1153
    %v1155 = vsel %vm1154, %v1147, %v1151
    %v1156 = vand.u32 2147483647, %v1146
    %vm1157 = vcmp.eq.f32.partialorder %v1156, 8.507059e+37
    %v1158 = vand.u32 %v1146, 2147483648
    %v1159 = vor.u32 1.1754944e-38, %v1158
    %v1160 = vsel %vm1157, %v1159, %v1155
    %v1161 = vmul.f32 1.0, %v1160
    %v1162 = vmul.f32 %v1161, %v52
    %v1163 = vsub.f32 %v1162, %v53
    %v1164 = vmul.f32 %v1141, %v1163
    %v1165 = vmul.f32 %v1141, %v917
    %1167 = vrot.lane.b32.xlu0 %v1164, 64
    %v1168 = vpop.permute.xlu0 %1167
    %v1170 = vadd.f32 %v1165, %v1168
    %v1171 = vtanh.pop %v1170
    %v1172 = vmul.f32 %v1163, %v1171
    %v1173 = vpack.c.bf16 %v1172, %v1172
    %v1175 = vsel %vm260, %v920, 0
    %v1178 = vperm.slane %v219, 0
    %v1179 = vperm.slane %v219, 1
    %v1198 = vunpack.c.l.b16 %v198
    %v1199 = vunpack.c.h.b16 %v198
    %v1200 = vunpack.c.l.b16 %v199
    %v1201 = vunpack.c.h.b16 %v199
    %v1202 = vunpack.c.l.b16 %v200
    %v1203 = vunpack.c.h.b16 %v200
    %v1204 = vunpack.c.l.b16 %v201
    %v1205 = vunpack.c.h.b16 %v201
    %v1206 = vunpack.c.l.b16 %v202
    %v1207 = vunpack.c.h.b16 %v202
    %v1208 = vunpack.c.l.b16 %v203
    %v1209 = vunpack.c.h.b16 %v203
    %v1210 = vunpack.c.l.b16 %v204
    %v1211 = vunpack.c.h.b16 %v204
    %v1212 = vunpack.c.l.b16 %v205
    %v1213 = vunpack.c.h.b16 %v205
    %v1214 = vunpack.c.l.b16 %v206
    %v1215 = vunpack.c.h.b16 %v206
    %v1216 = vunpack.c.l.b16 %v207
    %v1217 = vunpack.c.h.b16 %v207
    %v1218 = vunpack.c.l.b16 %v208
    %v1219 = vunpack.c.h.b16 %v208
    %v1220 = vunpack.c.l.b16 %v209
    %v1221 = vunpack.c.h.b16 %v209
    %v1222 = vunpack.c.l.b16 %v210
    %v1223 = vunpack.c.h.b16 %v210
    %v1224 = vunpack.c.l.b16 %v211
    %v1225 = vunpack.c.h.b16 %v211
    %v1226 = vunpack.c.l.b16 %v212
    %v1227 = vunpack.c.h.b16 %v212
    %v1228 = vunpack.c.l.b16 %v213
    %v1229 = vunpack.c.h.b16 %v213
    %v1230 = vpack.c.b16 %v1200, %v1198
    %v1231 = vpack.c.b16 %v1201, %v1199
    %v1232 = vpack.c.b16 %v1204, %v1202
    %v1233 = vpack.c.b16 %v1205, %v1203
    %v1234 = vpack.c.b16 %v1208, %v1206
    %v1235 = vpack.c.b16 %v1209, %v1207
    %v1236 = vpack.c.b16 %v1212, %v1210
    %v1237 = vpack.c.b16 %v1213, %v1211
    %v1238 = vpack.c.b16 %v1216, %v1214
    %v1239 = vpack.c.b16 %v1217, %v1215
    %v1240 = vpack.c.b16 %v1220, %v1218
    %v1241 = vpack.c.b16 %v1221, %v1219
    %v1242 = vpack.c.b16 %v1224, %v1222
    %v1243 = vpack.c.b16 %v1225, %v1223
    %v1244 = vpack.c.b16 %v1228, %v1226
    %v1245 = vpack.c.b16 %v1229, %v1227
    %1262 = vmatpush.bf16.msra.mxu0 %v1244
    %1263 = vmatpush.bf16.msra.mxu0 %v1242
    %1264 = vmatpush.bf16.msra.mxu0 %v1240
    %1265 = vmatpush.bf16.msra.mxu0 %v1238
    %1266 = vmatpush.bf16.msra.mxu0 %v1236
    %1267 = vmatpush.bf16.msra.mxu0 %v1234
    %1268 = vmatpush.bf16.msra.mxu0 %v1232
    %1269 = vmatpush.bf16.msra.mxu0 %v1230
    %1270 = vmatmul.bf16.gmra.mxu0 %v1175
    %v1271 = vpop.f32.mrf.mxu0
    %v1272 = vadd.f32 %v1178, %v1271
    %v1273 = vpop.f32.mrf.mxu0
    %1274 = vdwg.mxu0
    %1275 = vmatpush.bf16.msra.mxu0 %v1245
    %1276 = vmatpush.bf16.msra.mxu0 %v1243
    %1277 = vmatpush.bf16.msra.mxu0 %v1241
    %1278 = vmatpush.bf16.msra.mxu0 %v1239
    %1279 = vmatpush.bf16.msra.mxu0 %v1237
    %1280 = vmatpush.bf16.msra.mxu0 %v1235
    %1281 = vmatpush.bf16.msra.mxu0 %v1233
    %1282 = vmatpush.bf16.msra.mxu0 %v1231
    %1283 = vmatmul.bf16.gmra.mxu0 %v1175
    %v1284 = vpop.f32.mrf.mxu0
    %v1285 = vadd.f32 %v1179, %v1284
    %v1286 = vpop.f32.mrf.mxu0
    %1287 = vdwg.mxu0
    %v1288 = vxor.u32 %v1272, 2147483648
    %v1289 = vmul.f32 %v1288, 1.442695
    %v1290 = vpow.pop %v1289
    %v1291 = vadd.f32 %v1290, 1.0
    %v1292 = vrcp.pop %v1291
    %v1293 = vmul.f32 %v1291, %v1292
    %v1294 = vsub.f32 1.0, %v1293
    %v1295 = vmul.f32 %v1292, %v1294
    %v1296 = vadd.f32 %v1292, %v1295
    %vm1297 = vweird.f32 %v1291
    %vm1298 = vweird.f32 %v1292
    %vm1299 = vmor %vm1297, %vm1298
    %v1300 = vsel %vm1299, %v1292, %v1296
    %v1301 = vand.u32 2147483647, %v1291
    %vm1302 = vcmp.eq.f32.partialorder %v1301, 8.507059e+37
    %v1303 = vand.u32 %v1291, 2147483648
    %v1304 = vor.u32 1.1754944e-38, %v1303
    %v1305 = vsel %vm1302, %v1304, %v1300
    %v1306 = vmul.f32 1.0, %v1305
    %v1307 = vmul.f32 %v1285, %v52
    %v1308 = vxor.u32 %v1307, 2147483648
    %v1309 = vmul.f32 %v1308, 1.442695
    %v1310 = vpow.pop %v1309
    %v1311 = vadd.f32 %v1310, 1.0
    %v1312 = vrcp.pop %v1311
    %v1313 = vmul.f32 %v1311, %v1312
    %v1314 = vsub.f32 1.0, %v1313
    %v1315 = vmul.f32 %v1312, %v1314
    %v1316 = vadd.f32 %v1312, %v1315
    %vm1317 = vweird.f32 %v1311
    %vm1318 = vweird.f32 %v1312
    %vm1319 = vmor %vm1317, %vm1318
    %v1320 = vsel %vm1319, %v1312, %v1316
    %v1321 = vand.u32 2147483647, %v1311
    %vm1322 = vcmp.eq.f32.partialorder %v1321, 8.507059e+37
    %v1323 = vand.u32 %v1311, 2147483648
    %v1324 = vor.u32 1.1754944e-38, %v1323
    %v1325 = vsel %vm1322, %v1324, %v1320
    %v1326 = vmul.f32 1.0, %v1325
    %v1327 = vmul.f32 %v1326, %v52
    %v1328 = vsub.f32 %v1327, %v53
    %v1329 = vmul.f32 %v1306, %v1328
    %v1330 = vmul.f32 %v1306, 0.0
    %1332 = vrot.lane.b32.xlu0 %v1329, 64
    %v1333 = vpop.permute.xlu0 %1332
    %v1335 = vadd.f32 %v1330, %v1333
    %v1336 = vtanh.pop %v1335
    %v1337 = vmul.f32 %v1328, %v1336
    %v1338 = vpack.c.bf16 %v1337, %v1337
    %v1340 = vsel %vm260, %v1002, 0
    %1342 = vmatpush.bf16.msra.mxu0 0
    %1343 = vmatpush.bf16.msra.mxu0 0
    %1344 = vmatpush.bf16.msra.mxu0 0
    %1345 = vmatpush.bf16.msra.mxu0 0
    %1346 = vmatpush.bf16.msra.mxu0 %v250
    %1347 = vmatpush.bf16.msra.mxu0 %v248
    %1348 = vmatpush.bf16.msra.mxu0 %v246
    %1349 = vmatpush.bf16.msra.mxu0 %v244
    %1350 = vmatmul.bf16.gmra.mxu0 %v1340
    %v1351 = vpop.f32.mrf.mxu0
    %v1352 = vadd.f32 0.0, %v1351
    %v1353 = vpop.f32.mrf.mxu0
    %1354 = vdwg.mxu0
    %1355 = vmatpush.bf16.msra.mxu0 0
    %1356 = vmatpush.bf16.msra.mxu0 0
    %1357 = vmatpush.bf16.msra.mxu0 0
    %1358 = vmatpush.bf16.msra.mxu0 0
    %1359 = vmatpush.bf16.msra.mxu0 %v251
    %1360 = vmatpush.bf16.msra.mxu0 %v249
    %1361 = vmatpush.bf16.msra.mxu0 %v247
    %1362 = vmatpush.bf16.msra.mxu0 %v245
    %1363 = vmatmul.bf16.gmra.mxu0 %v1340
    %v1364 = vpop.f32.mrf.mxu0
    %v1365 = vadd.f32 0.0, %v1364
    %v1366 = vpop.f32.mrf.mxu0
    %1367 = vdwg.mxu0
    %v1368 = vadd.f32 %v118, %v1352
    %v1369 = vadd.f32 %v147, %v1365
    %v1370 = vxor.u32 %v1368, 2147483648
    %v1371 = vmul.f32 %v1370, 1.442695
    %v1372 = vpow.pop %v1371
    %v1373 = vadd.f32 %v1372, 1.0
    %v1374 = vrcp.pop %v1373
    %v1375 = vmul.f32 %v1373, %v1374
    %v1376 = vsub.f32 1.0, %v1375
    %v1377 = vmul.f32 %v1374, %v1376
    %v1378 = vadd.f32 %v1374, %v1377
    %vm1379 = vweird.f32 %v1373
    %vm1380 = vweird.f32 %v1374
    %vm1381 = vmor %vm1379, %vm1380
    %v1382 = vsel %vm1381, %v1374, %v1378
    %v1383 = vand.u32 2147483647, %v1373
    %vm1384 = vcmp.eq.f32.partialorder %v1383, 8.507059e+37
    %v1385 = vand.u32 %v1373, 2147483648
    %v1386 = vor.u32 1.1754944e-38, %v1385
    %v1387 = vsel %vm1384, %v1386, %v1382
    %v1388 = vmul.f32 1.0, %v1387
    %v1389 = vmul.f32 %v1369, %v52
    %v1390 = vxor.u32 %v1389, 2147483648
    %v1391 = vmul.f32 %v1390, 1.442695
    %v1392 = vpow.pop %v1391
    %v1393 = vadd.f32 %v1392, 1.0
    %v1394 = vrcp.pop %v1393
    %v1395 = vmul.f32 %v1393, %v1394
    %v1396 = vsub.f32 1.0, %v1395
    %v1397 = vmul.f32 %v1394, %v1396
    %v1398 = vadd.f32 %v1394, %v1397
    %vm1399 = vweird.f32 %v1393
    %vm1400 = vweird.f32 %v1394
    %vm1401 = vmor %vm1399, %vm1400
    %v1402 = vsel %vm1401, %v1394, %v1398
    %v1403 = vand.u32 2147483647, %v1393
    %vm1404 = vcmp.eq.f32.partialorder %v1403, 8.507059e+37
    %v1405 = vand.u32 %v1393, 2147483648
    %v1406 = vor.u32 1.1754944e-38, %v1405
    %v1407 = vsel %vm1404, %v1406, %v1402
    %v1408 = vmul.f32 1.0, %v1407
    %v1409 = vmul.f32 %v1408, %v52
    %v1410 = vsub.f32 %v1409, %v53
    %v1411 = vmul.f32 %v1388, %v1410
    %v1412 = vmul.f32 %v1388, %v999
    %1414 = vrot.lane.b32.xlu0 %v1411, 64
    %v1415 = vpop.permute.xlu0 %1414
    %v1417 = vadd.f32 %v1412, %v1415
    %v1418 = vtanh.pop %v1417
    %v1419 = vmul.f32 %v1410, %v1418
    %v1420 = vpack.c.bf16 %v1419, %v1419
    %v1422 = vunpack.c.l.b16 %v1087
    %v1423 = vpack.c.b16 %v1422, %v1422
    %1424 = vrot.lane.b32.xlu0 %v1423, 64
    %v1425 = vpop.permute.xlu0 %1424
    %v1427 = vsel %vm260, %v1002, %v1425
    %1429 = vmatpush.bf16.msra.mxu0 %v494
    %1430 = vmatpush.bf16.msra.mxu0 %v492
    %1431 = vmatpush.bf16.msra.mxu0 %v490
    %1432 = vmatpush.bf16.msra.mxu0 %v488
    %1433 = vmatpush.bf16.msra.mxu0 %v486
    %1434 = vmatpush.bf16.msra.mxu0 %v484
    %1435 = vmatpush.bf16.msra.mxu0 %v482
    %1436 = vmatpush.bf16.msra.mxu0 %v480
    %1437 = vmatmul.bf16.gmra.mxu0 %v1427
    %v1438 = vpop.f32.mrf.mxu0
    %v1439 = vadd.f32 %v428, %v1438
    %v1440 = vpop.f32.mrf.mxu0
    %1441 = vdwg.mxu0
    %1442 = vmatpush.bf16.msra.mxu0 %v495
    %1443 = vmatpush.bf16.msra.mxu0 %v493
    %1444 = vmatpush.bf16.msra.mxu0 %v491
    %1445 = vmatpush.bf16.msra.mxu0 %v489
    %1446 = vmatpush.bf16.msra.mxu0 %v487
    %1447 = vmatpush.bf16.msra.mxu0 %v485
    %1448 = vmatpush.bf16.msra.mxu0 %v483
    %1449 = vmatpush.bf16.msra.mxu0 %v481
    %1450 = vmatmul.bf16.gmra.mxu0 %v1427
    %v1451 = vpop.f32.mrf.mxu0
    %v1452 = vadd.f32 %v429, %v1451
    %v1453 = vpop.f32.mrf.mxu0
    %1454 = vdwg.mxu0
    %v1455 = vxor.u32 %v1439, 2147483648
    %v1456 = vmul.f32 %v1455, 1.442695
    %v1457 = vpow.pop %v1456
    %v1458 = vadd.f32 %v1457, 1.0
    %v1459 = vrcp.pop %v1458
    %v1460 = vmul.f32 %v1458, %v1459
    %v1461 = vsub.f32 1.0, %v1460
    %v1462 = vmul.f32 %v1459, %v1461
    %v1463 = vadd.f32 %v1459, %v1462
    %vm1464 = vweird.f32 %v1458
    %vm1465 = vweird.f32 %v1459
    %vm1466 = vmor %vm1464, %vm1465
    %v1467 = vsel %vm1466, %v1459, %v1463
    %v1468 = vand.u32 2147483647, %v1458
    %vm1469 = vcmp.eq.f32.partialorder %v1468, 8.507059e+37
    %v1470 = vand.u32 %v1458, 2147483648
    %v1471 = vor.u32 1.1754944e-38, %v1470
    %v1472 = vsel %vm1469, %v1471, %v1467
    %v1473 = vmul.f32 1.0, %v1472
    %v1474 = vmul.f32 %v1452, %v52
    %v1475 = vxor.u32 %v1474, 2147483648
    %v1476 = vmul.f32 %v1475, 1.442695
    %v1477 = vpow.pop %v1476
    %v1478 = vadd.f32 %v1477, 1.0
    %v1479 = vrcp.pop %v1478
    %v1480 = vmul.f32 %v1478, %v1479
    %v1481 = vsub.f32 1.0, %v1480
    %v1482 = vmul.f32 %v1479, %v1481
    %v1483 = vadd.f32 %v1479, %v1482
    %vm1484 = vweird.f32 %v1478
    %vm1485 = vweird.f32 %v1479
    %vm1486 = vmor %vm1484, %vm1485
    %v1487 = vsel %vm1486, %v1479, %v1483
    %v1488 = vand.u32 2147483647, %v1478
    %vm1489 = vcmp.eq.f32.partialorder %v1488, 8.507059e+37
    %v1490 = vand.u32 %v1478, 2147483648
    %v1491 = vor.u32 1.1754944e-38, %v1490
    %v1492 = vsel %vm1489, %v1491, %v1487
    %v1493 = vmul.f32 1.0, %v1492
    %v1494 = vmul.f32 %v1493, %v52
    %v1495 = vsub.f32 %v1494, %v53
    %v1496 = vmul.f32 %v1473, %v1495
    %v1497 = vmul.f32 %v1473, %v1084
    %1499 = vrot.lane.b32.xlu0 %v1496, 64
    %v1500 = vpop.permute.xlu0 %1499
    %v1502 = vadd.f32 %v1497, %v1500
    %v1503 = vtanh.pop %v1502
    %v1504 = vmul.f32 %v1495, %v1503
    %v1505 = vpack.c.bf16 %v1504, %v1504
    %v1507 = vunpack.c.l.b16 %v1173
    %v1508 = vpack.c.b16 %v1507, %v1507
    %1509 = vrot.lane.b32.xlu0 %v1508, 64
    %v1510 = vpop.permute.xlu0 %1509
    %v1513 = vsel %vm260, %v1087, %v1510
    %1515 = vmatpush.bf16.msra.mxu0 %v826
    %1516 = vmatpush.bf16.msra.mxu0 %v824
    %1517 = vmatpush.bf16.msra.mxu0 %v822
    %1518 = vmatpush.bf16.msra.mxu0 %v820
    %1519 = vmatpush.bf16.msra.mxu0 %v818
    %1520 = vmatpush.bf16.msra.mxu0 %v816
    %1521 = vmatpush.bf16.msra.mxu0 %v814
    %1522 = vmatpush.bf16.msra.mxu0 %v812
    %1523 = vmatmul.bf16.gmra.mxu0 %v1513
    %v1524 = vpop.f32.mrf.mxu0
    %v1525 = vadd.f32 %v760, %v1524
    %v1526 = vpop.f32.mrf.mxu0
    %1527 = vdwg.mxu0
    %1528 = vmatpush.bf16.msra.mxu0 %v827
    %1529 = vmatpush.bf16.msra.mxu0 %v825
    %1530 = vmatpush.bf16.msra.mxu0 %v823
    %1531 = vmatpush.bf16.msra.mxu0 %v821
    %1532 = vmatpush.bf16.msra.mxu0 %v819
    %1533 = vmatpush.bf16.msra.mxu0 %v817
    %1534 = vmatpush.bf16.msra.mxu0 %v815
    %1535 = vmatpush.bf16.msra.mxu0 %v813
    %1536 = vmatmul.bf16.gmra.mxu0 %v1513
    %v1537 = vpop.f32.mrf.mxu0
    %v1538 = vadd.f32 %v761, %v1537
    %v1539 = vpop.f32.mrf.mxu0
    %1540 = vdwg.mxu0
    %v1541 = vxor.u32 %v1525, 2147483648
    %v1542 = vmul.f32 %v1541, 1.442695
    %v1543 = vpow.pop %v1542
    %v1544 = vadd.f32 %v1543, 1.0
    %v1545 = vrcp.pop %v1544
    %v1546 = vmul.f32 %v1544, %v1545
    %v1547 = vsub.f32 1.0, %v1546
    %v1548 = vmul.f32 %v1545, %v1547
    %v1549 = vadd.f32 %v1545, %v1548
    %vm1550 = vweird.f32 %v1544
    %vm1551 = vweird.f32 %v1545
    %vm1552 = vmor %vm1550, %vm1551
    %v1553 = vsel %vm1552, %v1545, %v1549
    %v1554 = vand.u32 2147483647, %v1544
    %vm1555 = vcmp.eq.f32.partialorder %v1554, 8.507059e+37
    %v1556 = vand.u32 %v1544, 2147483648
    %v1557 = vor.u32 1.1754944e-38, %v1556
    %v1558 = vsel %vm1555, %v1557, %v1553
    %v1559 = vmul.f32 1.0, %v1558
    %v1560 = vmul.f32 %v1538, %v52
    %v1561 = vxor.u32 %v1560, 2147483648
    %v1562 = vmul.f32 %v1561, 1.442695
    %v1563 = vpow.pop %v1562
    %v1564 = vadd.f32 %v1563, 1.0
    %v1565 = vrcp.pop %v1564
    %v1566 = vmul.f32 %v1564, %v1565
    %v1567 = vsub.f32 1.0, %v1566
    %v1568 = vmul.f32 %v1565, %v1567
    %v1569 = vadd.f32 %v1565, %v1568
    %vm1570 = vweird.f32 %v1564
    %vm1571 = vweird.f32 %v1565
    %vm1572 = vmor %vm1570, %vm1571
    %v1573 = vsel %vm1572, %v1565, %v1569
    %v1574 = vand.u32 2147483647, %v1564
    %vm1575 = vcmp.eq.f32.partialorder %v1574, 8.507059e+37
    %v1576 = vand.u32 %v1564, 2147483648
    %v1577 = vor.u32 1.1754944e-38, %v1576
    %v1578 = vsel %vm1575, %v1577, %v1573
    %v1579 = vmul.f32 1.0, %v1578
    %v1580 = vmul.f32 %v1579, %v52
    %v1581 = vsub.f32 %v1580, %v53
    %v1582 = vmul.f32 %v1559, %v1581
    %v1583 = vmul.f32 %v1559, %v1170
    %1585 = vrot.lane.b32.xlu0 %v1582, 64
    %v1586 = vpop.permute.xlu0 %1585
    %v1588 = vadd.f32 %v1583, %v1586
    %v1589 = vtanh.pop %v1588
    %v1590 = vmul.f32 %v1581, %v1589
    %v1591 = vpack.c.bf16 %v1590, %v1590
    %v1593 = vunpack.c.l.b16 %v1338
    %v1594 = vpack.c.b16 %v1593, %v1593
    %1595 = vrot.lane.b32.xlu0 %v1594, 64
    %v1596 = vpop.permute.xlu0 %1595
    %v1599 = vsel %vm260, %v1173, %v1596
    %1601 = vmatpush.bf16.msra.mxu0 %v1244
    %1602 = vmatpush.bf16.msra.mxu0 %v1242
    %1603 = vmatpush.bf16.msra.mxu0 %v1240
    %1604 = vmatpush.bf16.msra.mxu0 %v1238
    %1605 = vmatpush.bf16.msra.mxu0 %v1236
    %1606 = vmatpush.bf16.msra.mxu0 %v1234
    %1607 = vmatpush.bf16.msra.mxu0 %v1232
    %1608 = vmatpush.bf16.msra.mxu0 %v1230
    %1609 = vmatmul.bf16.gmra.mxu0 %v1599
    %v1610 = vpop.f32.mrf.mxu0
    %v1611 = vadd.f32 %v1178, %v1610
    %v1612 = vpop.f32.mrf.mxu0
    %1613 = vdwg.mxu0
    %1614 = vmatpush.bf16.msra.mxu0 %v1245
    %1615 = vmatpush.bf16.msra.mxu0 %v1243
    %1616 = vmatpush.bf16.msra.mxu0 %v1241
    %1617 = vmatpush.bf16.msra.mxu0 %v1239
    %1618 = vmatpush.bf16.msra.mxu0 %v1237
    %1619 = vmatpush.bf16.msra.mxu0 %v1235
    %1620 = vmatpush.bf16.msra.mxu0 %v1233
    %1621 = vmatpush.bf16.msra.mxu0 %v1231
    %1622 = vmatmul.bf16.gmra.mxu0 %v1599
    %v1623 = vpop.f32.mrf.mxu0
    %v1624 = vadd.f32 %v1179, %v1623
    %v1625 = vpop.f32.mrf.mxu0
    %1626 = vdwg.mxu0
    %v1627 = vxor.u32 %v1611, 2147483648
    %v1628 = vmul.f32 %v1627, 1.442695
    %v1629 = vpow.pop %v1628
    %v1630 = vadd.f32 %v1629, 1.0
    %v1631 = vrcp.pop %v1630
    %v1632 = vmul.f32 %v1630, %v1631
    %v1633 = vsub.f32 1.0, %v1632
    %v1634 = vmul.f32 %v1631, %v1633
    %v1635 = vadd.f32 %v1631, %v1634
    %vm1636 = vweird.f32 %v1630
    %vm1637 = vweird.f32 %v1631
    %vm1638 = vmor %vm1636, %vm1637
    %v1639 = vsel %vm1638, %v1631, %v1635
    %v1640 = vand.u32 2147483647, %v1630
    %vm1641 = vcmp.eq.f32.partialorder %v1640, 8.507059e+37
    %v1642 = vand.u32 %v1630, 2147483648
    %v1643 = vor.u32 1.1754944e-38, %v1642
    %v1644 = vsel %vm1641, %v1643, %v1639
    %v1645 = vmul.f32 1.0, %v1644
    %v1646 = vmul.f32 %v1624, %v52
    %v1647 = vxor.u32 %v1646, 2147483648
    %v1648 = vmul.f32 %v1647, 1.442695
    %v1649 = vpow.pop %v1648
    %v1650 = vadd.f32 %v1649, 1.0
    %v1651 = vrcp.pop %v1650
    %v1652 = vmul.f32 %v1650, %v1651
    %v1653 = vsub.f32 1.0, %v1652
    %v1654 = vmul.f32 %v1651, %v1653
    %v1655 = vadd.f32 %v1651, %v1654
    %vm1656 = vweird.f32 %v1650
    %vm1657 = vweird.f32 %v1651
    %vm1658 = vmor %vm1656, %vm1657
    %v1659 = vsel %vm1658, %v1651, %v1655
    %v1660 = vand.u32 2147483647, %v1650
    %vm1661 = vcmp.eq.f32.partialorder %v1660, 8.507059e+37
    %v1662 = vand.u32 %v1650, 2147483648
    %v1663 = vor.u32 1.1754944e-38, %v1662
    %v1664 = vsel %vm1661, %v1663, %v1659
    %v1665 = vmul.f32 1.0, %v1664
    %v1666 = vmul.f32 %v1665, %v52
    %v1667 = vsub.f32 %v1666, %v53
    %v1668 = vmul.f32 %v1645, %v1667
    %v1669 = vmul.f32 %v1645, %v1335
    %1671 = vrot.lane.b32.xlu0 %v1668, 64
    %v1672 = vpop.permute.xlu0 %1671
    %v1674 = vadd.f32 %v1669, %v1672
    %v1675 = vtanh.pop %v1674
    %v1676 = vmul.f32 %v1667, %v1675
    %v1677 = vpack.c.bf16 %v1676, %v1676
    %v1679 = vsel %vm260, %v1420, 0
    %1681 = vmatpush.bf16.msra.mxu0 0
    %1682 = vmatpush.bf16.msra.mxu0 0
    %1683 = vmatpush.bf16.msra.mxu0 0
    %1684 = vmatpush.bf16.msra.mxu0 0
    %1685 = vmatpush.bf16.msra.mxu0 %v250
    %1686 = vmatpush.bf16.msra.mxu0 %v248
    %1687 = vmatpush.bf16.msra.mxu0 %v246
    %1688 = vmatpush.bf16.msra.mxu0 %v244
    %1689 = vmatmul.bf16.gmra.mxu0 %v1679
    %v1690 = vpop.f32.mrf.mxu0
    %v1691 = vadd.f32 0.0, %v1690
    %v1692 = vpop.f32.mrf.mxu0
    %1693 = vdwg.mxu0
    %1694 = vmatpush.bf16.msra.mxu0 0
    %1695 = vmatpush.bf16.msra.mxu0 0
    %1696 = vmatpush.bf16.msra.mxu0 0
    %1697 = vmatpush.bf16.msra.mxu0 0
    %1698 = vmatpush.bf16.msra.mxu0 %v251
    %1699 = vmatpush.bf16.msra.mxu0 %v249
    %1700 = vmatpush.bf16.msra.mxu0 %v247
    %1701 = vmatpush.bf16.msra.mxu0 %v245
    %1702 = vmatmul.bf16.gmra.mxu0 %v1679
    %v1703 = vpop.f32.mrf.mxu0
    %v1704 = vadd.f32 0.0, %v1703
    %v1705 = vpop.f32.mrf.mxu0
    %1706 = vdwg.mxu0
    %v1707 = vadd.f32 %v120, %v1691
    %v1708 = vadd.f32 %v149, %v1704
    %v1709 = vxor.u32 %v1707, 2147483648
    %v1710 = vmul.f32 %v1709, 1.442695
    %v1711 = vpow.pop %v1710
    %v1712 = vadd.f32 %v1711, 1.0
    %v1713 = vrcp.pop %v1712
    %v1714 = vmul.f32 %v1712, %v1713
    %v1715 = vsub.f32 1.0, %v1714
    %v1716 = vmul.f32 %v1713, %v1715
    %v1717 = vadd.f32 %v1713, %v1716
    %vm1718 = vweird.f32 %v1712
    %vm1719 = vweird.f32 %v1713
    %vm1720 = vmor %vm1718, %vm1719
    %v1721 = vsel %vm1720, %v1713, %v1717
    %v1722 = vand.u32 2147483647, %v1712
    %vm1723 = vcmp.eq.f32.partialorder %v1722, 8.507059e+37
    %v1724 = vand.u32 %v1712, 2147483648
    %v1725 = vor.u32 1.1754944e-38, %v1724
    %v1726 = vsel %vm1723, %v1725, %v1721
    %v1727 = vmul.f32 1.0, %v1726
    %v1728 = vmul.f32 %v1708, %v52
    %v1729 = vxor.u32 %v1728, 2147483648
    %v1730 = vmul.f32 %v1729, 1.442695
    %v1731 = vpow.pop %v1730
    %v1732 = vadd.f32 %v1731, 1.0
    %v1733 = vrcp.pop %v1732
    %v1734 = vmul.f32 %v1732, %v1733
    %v1735 = vsub.f32 1.0, %v1734
    %v1736 = vmul.f32 %v1733, %v1735
    %v1737 = vadd.f32 %v1733, %v1736
    %vm1738 = vweird.f32 %v1732
    %vm1739 = vweird.f32 %v1733
    %vm1740 = vmor %vm1738, %vm1739
    %v1741 = vsel %vm1740, %v1733, %v1737
    %v1742 = vand.u32 2147483647, %v1732
    %vm1743 = vcmp.eq.f32.partialorder %v1742, 8.507059e+37
    %v1744 = vand.u32 %v1732, 2147483648
    %v1745 = vor.u32 1.1754944e-38, %v1744
    %v1746 = vsel %vm1743, %v1745, %v1741
    %v1747 = vmul.f32 1.0, %v1746
    %v1748 = vmul.f32 %v1747, %v52
    %v1749 = vsub.f32 %v1748, %v53
    %v1750 = vmul.f32 %v1727, %v1749
    %v1751 = vmul.f32 %v1727, %v1417
    %1753 = vrot.lane.b32.xlu0 %v1750, 64
    %v1754 = vpop.permute.xlu0 %1753
    %v1756 = vadd.f32 %v1751, %v1754
    %v1757 = vtanh.pop %v1756
    %v1758 = vmul.f32 %v1749, %v1757
    %v1759 = vpack.c.bf16 %v1758, %v1758
    %v1761 = vunpack.c.l.b16 %v1505
    %v1762 = vpack.c.b16 %v1761, %v1761
    %1763 = vrot.lane.b32.xlu0 %v1762, 64
    %v1764 = vpop.permute.xlu0 %1763
    %v1766 = vsel %vm260, %v1420, %v1764
    %1768 = vmatpush.bf16.msra.mxu0 %v494
    %1769 = vmatpush.bf16.msra.mxu0 %v492
    %1770 = vmatpush.bf16.msra.mxu0 %v490
    %1771 = vmatpush.bf16.msra.mxu0 %v488
    %1772 = vmatpush.bf16.msra.mxu0 %v486
    %1773 = vmatpush.bf16.msra.mxu0 %v484
    %1774 = vmatpush.bf16.msra.mxu0 %v482
    %1775 = vmatpush.bf16.msra.mxu0 %v480
    %1776 = vmatmul.bf16.gmra.mxu0 %v1766
    %v1777 = vpop.f32.mrf.mxu0
    %v1778 = vadd.f32 %v428, %v1777
    %v1779 = vpop.f32.mrf.mxu0
    %1780 = vdwg.mxu0
    %1781 = vmatpush.bf16.msra.mxu0 %v495
    %1782 = vmatpush.bf16.msra.mxu0 %v493
    %1783 = vmatpush.bf16.msra.mxu0 %v491
    %1784 = vmatpush.bf16.msra.mxu0 %v489
    %1785 = vmatpush.bf16.msra.mxu0 %v487
    %1786 = vmatpush.bf16.msra.mxu0 %v485
    %1787 = vmatpush.bf16.msra.mxu0 %v483
    %1788 = vmatpush.bf16.msra.mxu0 %v481
    %1789 = vmatmul.bf16.gmra.mxu0 %v1766
    %v1790 = vpop.f32.mrf.mxu0
    %v1791 = vadd.f32 %v429, %v1790
    %v1792 = vpop.f32.mrf.mxu0
    %1793 = vdwg.mxu0
    %v1794 = vxor.u32 %v1778, 2147483648
    %v1795 = vmul.f32 %v1794, 1.442695
    %v1796 = vpow.pop %v1795
    %v1797 = vadd.f32 %v1796, 1.0
    %v1798 = vrcp.pop %v1797
    %v1799 = vmul.f32 %v1797, %v1798
    %v1800 = vsub.f32 1.0, %v1799
    %v1801 = vmul.f32 %v1798, %v1800
    %v1802 = vadd.f32 %v1798, %v1801
    %vm1803 = vweird.f32 %v1797
    %vm1804 = vweird.f32 %v1798
    %vm1805 = vmor %vm1803, %vm1804
    %v1806 = vsel %vm1805, %v1798, %v1802
    %v1807 = vand.u32 2147483647, %v1797
    %vm1808 = vcmp.eq.f32.partialorder %v1807, 8.507059e+37
    %v1809 = vand.u32 %v1797, 2147483648
    %v1810 = vor.u32 1.1754944e-38, %v1809
    %v1811 = vsel %vm1808, %v1810, %v1806
    %v1812 = vmul.f32 1.0, %v1811
    %v1813 = vmul.f32 %v1791, %v52
    %v1814 = vxor.u32 %v1813, 2147483648
    %v1815 = vmul.f32 %v1814, 1.442695
    %v1816 = vpow.pop %v1815
    %v1817 = vadd.f32 %v1816, 1.0
    %v1818 = vrcp.pop %v1817
    %v1819 = vmul.f32 %v1817, %v1818
    %v1820 = vsub.f32 1.0, %v1819
    %v1821 = vmul.f32 %v1818, %v1820
    %v1822 = vadd.f32 %v1818, %v1821
    %vm1823 = vweird.f32 %v1817
    %vm1824 = vweird.f32 %v1818
    %vm1825 = vmor %vm1823, %vm1824
    %v1826 = vsel %vm1825, %v1818, %v1822
    %v1827 = vand.u32 2147483647, %v1817
    %vm1828 = vcmp.eq.f32.partialorder %v1827, 8.507059e+37
    %v1829 = vand.u32 %v1817, 2147483648
    %v1830 = vor.u32 1.1754944e-38, %v1829
    %v1831 = vsel %vm1828, %v1830, %v1826
    %v1832 = vmul.f32 1.0, %v1831
    %v1833 = vmul.f32 %v1832, %v52
    %v1834 = vsub.f32 %v1833, %v53
    %v1835 = vmul.f32 %v1812, %v1834
    %v1836 = vmul.f32 %v1812, %v1502
    %1838 = vrot.lane.b32.xlu0 %v1835, 64
    %v1839 = vpop.permute.xlu0 %1838
    %v1841 = vadd.f32 %v1836, %v1839
    %v1842 = vtanh.pop %v1841
    %v1843 = vmul.f32 %v1834, %v1842
    %v1844 = vpack.c.bf16 %v1843, %v1843
    %v1846 = vunpack.c.l.b16 %v1591
    %v1847 = vpack.c.b16 %v1846, %v1846
    %1848 = vrot.lane.b32.xlu0 %v1847, 64
    %v1849 = vpop.permute.xlu0 %1848
    %v1852 = vsel %vm260, %v1505, %v1849
    %1854 = vmatpush.bf16.msra.mxu0 %v826
    %1855 = vmatpush.bf16.msra.mxu0 %v824
    %1856 = vmatpush.bf16.msra.mxu0 %v822
    %1857 = vmatpush.bf16.msra.mxu0 %v820
    %1858 = vmatpush.bf16.msra.mxu0 %v818
    %1859 = vmatpush.bf16.msra.mxu0 %v816
    %1860 = vmatpush.bf16.msra.mxu0 %v814
    %1861 = vmatpush.bf16.msra.mxu0 %v812
    %1862 = vmatmul.bf16.gmra.mxu0 %v1852
    %v1863 = vpop.f32.mrf.mxu0
    %v1864 = vadd.f32 %v760, %v1863
    %v1865 = vpop.f32.mrf.mxu0
    %1866 = vdwg.mxu0
    %1867 = vmatpush.bf16.msra.mxu0 %v827
    %1868 = vmatpush.bf16.msra.mxu0 %v825
    %1869 = vmatpush.bf16.msra.mxu0 %v823
    %1870 = vmatpush.bf16.msra.mxu0 %v821
    %1871 = vmatpush.bf16.msra.mxu0 %v819
    %1872 = vmatpush.bf16.msra.mxu0 %v817
    %1873 = vmatpush.bf16.msra.mxu0 %v815
    %1874 = vmatpush.bf16.msra.mxu0 %v813
    %1875 = vmatmul.bf16.gmra.mxu0 %v1852
    %v1876 = vpop.f32.mrf.mxu0
    %v1877 = vadd.f32 %v761, %v1876
    %v1878 = vpop.f32.mrf.mxu0
    %1879 = vdwg.mxu0
    %v1880 = vxor.u32 %v1864, 2147483648
    %v1881 = vmul.f32 %v1880, 1.442695
    %v1882 = vpow.pop %v1881
    %v1883 = vadd.f32 %v1882, 1.0
    %v1884 = vrcp.pop %v1883
    %v1885 = vmul.f32 %v1883, %v1884
    %v1886 = vsub.f32 1.0, %v1885
    %v1887 = vmul.f32 %v1884, %v1886
    %v1888 = vadd.f32 %v1884, %v1887
    %vm1889 = vweird.f32 %v1883
    %vm1890 = vweird.f32 %v1884
    %vm1891 = vmor %vm1889, %vm1890
    %v1892 = vsel %vm1891, %v1884, %v1888
    %v1893 = vand.u32 2147483647, %v1883
    %vm1894 = vcmp.eq.f32.partialorder %v1893, 8.507059e+37
    %v1895 = vand.u32 %v1883, 2147483648
    %v1896 = vor.u32 1.1754944e-38, %v1895
    %v1897 = vsel %vm1894, %v1896, %v1892
    %v1898 = vmul.f32 1.0, %v1897
    %v1899 = vmul.f32 %v1877, %v52
    %v1900 = vxor.u32 %v1899, 2147483648
    %v1901 = vmul.f32 %v1900, 1.442695
    %v1902 = vpow.pop %v1901
    %v1903 = vadd.f32 %v1902, 1.0
    %v1904 = vrcp.pop %v1903
    %v1905 = vmul.f32 %v1903, %v1904
    %v1906 = vsub.f32 1.0, %v1905
    %v1907 = vmul.f32 %v1904, %v1906
    %v1908 = vadd.f32 %v1904, %v1907
    %vm1909 = vweird.f32 %v1903
    %vm1910 = vweird.f32 %v1904
    %vm1911 = vmor %vm1909, %vm1910
    %v1912 = vsel %vm1911, %v1904, %v1908
    %v1913 = vand.u32 2147483647, %v1903
    %vm1914 = vcmp.eq.f32.partialorder %v1913, 8.507059e+37
    %v1915 = vand.u32 %v1903, 2147483648
    %v1916 = vor.u32 1.1754944e-38, %v1915
    %v1917 = vsel %vm1914, %v1916, %v1912
    %v1918 = vmul.f32 1.0, %v1917
    %v1919 = vmul.f32 %v1918, %v52
    %v1920 = vsub.f32 %v1919, %v53
    %v1921 = vmul.f32 %v1898, %v1920
    %v1922 = vmul.f32 %v1898, %v1588
    %1924 = vrot.lane.b32.xlu0 %v1921, 64
    %v1925 = vpop.permute.xlu0 %1924
    %v1927 = vadd.f32 %v1922, %v1925
    %v1928 = vtanh.pop %v1927
    %v1929 = vmul.f32 %v1920, %v1928
    %v1930 = vpack.c.bf16 %v1929, %v1929
    %v1932 = vunpack.c.l.b16 %v1677
    %v1933 = vpack.c.b16 %v1932, %v1932
    %1934 = vrot.lane.b32.xlu0 %v1933, 64
    %v1935 = vpop.permute.xlu0 %1934
    %v1938 = vsel %vm260, %v1591, %v1935
    %1940 = vmatpush.bf16.msra.mxu0 %v1244
    %1941 = vmatpush.bf16.msra.mxu0 %v1242
    %1942 = vmatpush.bf16.msra.mxu0 %v1240
    %1943 = vmatpush.bf16.msra.mxu0 %v1238
    %1944 = vmatpush.bf16.msra.mxu0 %v1236
    %1945 = vmatpush.bf16.msra.mxu0 %v1234
    %1946 = vmatpush.bf16.msra.mxu0 %v1232
    %1947 = vmatpush.bf16.msra.mxu0 %v1230
    %1948 = vmatmul.bf16.gmra.mxu0 %v1938
    %v1949 = vpop.f32.mrf.mxu0
    %v1950 = vadd.f32 %v1178, %v1949
    %v1951 = vpop.f32.mrf.mxu0
    %1952 = vdwg.mxu0
    %1953 = vmatpush.bf16.msra.mxu0 %v1245
    %1954 = vmatpush.bf16.msra.mxu0 %v1243
    %1955 = vmatpush.bf16.msra.mxu0 %v1241
    %1956 = vmatpush.bf16.msra.mxu0 %v1239
    %1957 = vmatpush.bf16.msra.mxu0 %v1237
    %1958 = vmatpush.bf16.msra.mxu0 %v1235
    %1959 = vmatpush.bf16.msra.mxu0 %v1233
    %1960 = vmatpush.bf16.msra.mxu0 %v1231
    %1961 = vmatmul.bf16.gmra.mxu0 %v1938
    %v1962 = vpop.f32.mrf.mxu0
    %v1963 = vadd.f32 %v1179, %v1962
    %v1964 = vpop.f32.mrf.mxu0
    %1965 = vdwg.mxu0
    %v1966 = vxor.u32 %v1950, 2147483648
    %v1967 = vmul.f32 %v1966, 1.442695
    %v1968 = vpow.pop %v1967
    %v1969 = vadd.f32 %v1968, 1.0
    %v1970 = vrcp.pop %v1969
    %v1971 = vmul.f32 %v1969, %v1970
    %v1972 = vsub.f32 1.0, %v1971
    %v1973 = vmul.f32 %v1970, %v1972
    %v1974 = vadd.f32 %v1970, %v1973
    %vm1975 = vweird.f32 %v1969
    %vm1976 = vweird.f32 %v1970
    %vm1977 = vmor %vm1975, %vm1976
    %v1978 = vsel %vm1977, %v1970, %v1974
    %v1979 = vand.u32 2147483647, %v1969
    %vm1980 = vcmp.eq.f32.partialorder %v1979, 8.507059e+37
    %v1981 = vand.u32 %v1969, 2147483648
    %v1982 = vor.u32 1.1754944e-38, %v1981
    %v1983 = vsel %vm1980, %v1982, %v1978
    %v1984 = vmul.f32 1.0, %v1983
    %v1985 = vmul.f32 %v1963, %v52
    %v1986 = vxor.u32 %v1985, 2147483648
    %v1987 = vmul.f32 %v1986, 1.442695
    %v1988 = vpow.pop %v1987
    %v1989 = vadd.f32 %v1988, 1.0
    %v1990 = vrcp.pop %v1989
    %v1991 = vmul.f32 %v1989, %v1990
    %v1992 = vsub.f32 1.0, %v1991
    %v1993 = vmul.f32 %v1990, %v1992
    %v1994 = vadd.f32 %v1990, %v1993
    %vm1995 = vweird.f32 %v1989
    %vm1996 = vweird.f32 %v1990
    %vm1997 = vmor %vm1995, %vm1996
    %v1998 = vsel %vm1997, %v1990, %v1994
    %v1999 = vand.u32 2147483647, %v1989
    %vm2000 = vcmp.eq.f32.partialorder %v1999, 8.507059e+37
    %v2001 = vand.u32 %v1989, 2147483648
    %v2002 = vor.u32 1.1754944e-38, %v2001
    %v2003 = vsel %vm2000, %v2002, %v1998
    %v2004 = vmul.f32 1.0, %v2003
    %v2005 = vmul.f32 %v2004, %v52
    %v2006 = vsub.f32 %v2005, %v53
    %v2007 = vmul.f32 %v1984, %v2006
    %v2008 = vmul.f32 %v1984, %v1674
    %2010 = vrot.lane.b32.xlu0 %v2007, 64
    %v2011 = vpop.permute.xlu0 %2010
    %v2013 = vadd.f32 %v2008, %v2011
    %v2014 = vtanh.pop %v2013
    %v2015 = vmul.f32 %v2006, %v2014
    %v2016 = vpack.c.bf16 %v2015, %v2015
    %v2018 = vsel %vm260, %v1759, 0
    %2020 = vmatpush.bf16.msra.mxu0 0
    %2021 = vmatpush.bf16.msra.mxu0 0
    %2022 = vmatpush.bf16.msra.mxu0 0
    %2023 = vmatpush.bf16.msra.mxu0 0
    %2024 = vmatpush.bf16.msra.mxu0 %v250
    %2025 = vmatpush.bf16.msra.mxu0 %v248
    %2026 = vmatpush.bf16.msra.mxu0 %v246
    %2027 = vmatpush.bf16.msra.mxu0 %v244
    %2028 = vmatmul.bf16.gmra.mxu0 %v2018
    %v2029 = vpop.f32.mrf.mxu0
    %v2030 = vadd.f32 0.0, %v2029
    %v2031 = vpop.f32.mrf.mxu0
    %2032 = vdwg.mxu0
    %2033 = vmatpush.bf16.msra.mxu0 0
    %2034 = vmatpush.bf16.msra.mxu0 0
    %2035 = vmatpush.bf16.msra.mxu0 0
    %2036 = vmatpush.bf16.msra.mxu0 0
    %2037 = vmatpush.bf16.msra.mxu0 %v251
    %2038 = vmatpush.bf16.msra.mxu0 %v249
    %2039 = vmatpush.bf16.msra.mxu0 %v247
    %2040 = vmatpush.bf16.msra.mxu0 %v245
    %2041 = vmatmul.bf16.gmra.mxu0 %v2018
    %v2042 = vpop.f32.mrf.mxu0
    %v2043 = vadd.f32 0.0, %v2042
    %v2044 = vpop.f32.mrf.mxu0
    %2045 = vdwg.mxu0
    %v2046 = vadd.f32 %v123, %v2030
    %v2047 = vadd.f32 %v152, %v2043
    %v2048 = vxor.u32 %v2046, 2147483648
    %v2049 = vmul.f32 %v2048, 1.442695
    %v2050 = vpow.pop %v2049
    %v2051 = vadd.f32 %v2050, 1.0
    %v2052 = vrcp.pop %v2051
    %v2053 = vmul.f32 %v2051, %v2052
    %v2054 = vsub.f32 1.0, %v2053
    %v2055 = vmul.f32 %v2052, %v2054
    %v2056 = vadd.f32 %v2052, %v2055
    %vm2057 = vweird.f32 %v2051
    %vm2058 = vweird.f32 %v2052
    %vm2059 = vmor %vm2057, %vm2058
    %v2060 = vsel %vm2059, %v2052, %v2056
    %v2061 = vand.u32 2147483647, %v2051
    %vm2062 = vcmp.eq.f32.partialorder %v2061, 8.507059e+37
    %v2063 = vand.u32 %v2051, 2147483648
    %v2064 = vor.u32 1.1754944e-38, %v2063
    %v2065 = vsel %vm2062, %v2064, %v2060
    %v2066 = vmul.f32 1.0, %v2065
    %v2067 = vmul.f32 %v2047, %v52
    %v2068 = vxor.u32 %v2067, 2147483648
    %v2069 = vmul.f32 %v2068, 1.442695
    %v2070 = vpow.pop %v2069
    %v2071 = vadd.f32 %v2070, 1.0
    %v2072 = vrcp.pop %v2071
    %v2073 = vmul.f32 %v2071, %v2072
    %v2074 = vsub.f32 1.0, %v2073
    %v2075 = vmul.f32 %v2072, %v2074
    %v2076 = vadd.f32 %v2072, %v2075
    %vm2077 = vweird.f32 %v2071
    %vm2078 = vweird.f32 %v2072
    %vm2079 = vmor %vm2077, %vm2078
    %v2080 = vsel %vm2079, %v2072, %v2076
    %v2081 = vand.u32 2147483647, %v2071
    %vm2082 = vcmp.eq.f32.partialorder %v2081, 8.507059e+37
    %v2083 = vand.u32 %v2071, 2147483648
    %v2084 = vor.u32 1.1754944e-38, %v2083
    %v2085 = vsel %vm2082, %v2084, %v2080
    %v2086 = vmul.f32 1.0, %v2085
    %v2087 = vmul.f32 %v2086, %v52
    %v2088 = vsub.f32 %v2087, %v53
    %v2089 = vmul.f32 %v2066, %v2088
    %v2090 = vmul.f32 %v2066, %v1756
    %2092 = vrot.lane.b32.xlu0 %v2089, 64
    %v2093 = vpop.permute.xlu0 %2092
    %v2095 = vadd.f32 %v2090, %v2093
    %v2096 = vtanh.pop %v2095
    %v2097 = vmul.f32 %v2088, %v2096
    %v2098 = vpack.c.bf16 %v2097, %v2097
    %v2100 = vunpack.c.l.b16 %v1844
    %v2101 = vpack.c.b16 %v2100, %v2100
    %2102 = vrot.lane.b32.xlu0 %v2101, 64
    %v2103 = vpop.permute.xlu0 %2102
    %v2105 = vsel %vm260, %v1759, %v2103
    %2107 = vmatpush.bf16.msra.mxu0 %v494
    %2108 = vmatpush.bf16.msra.mxu0 %v492
    %2109 = vmatpush.bf16.msra.mxu0 %v490
    %2110 = vmatpush.bf16.msra.mxu0 %v488
    %2111 = vmatpush.bf16.msra.mxu0 %v486
    %2112 = vmatpush.bf16.msra.mxu0 %v484
    %2113 = vmatpush.bf16.msra.mxu0 %v482
    %2114 = vmatpush.bf16.msra.mxu0 %v480
    %2115 = vmatmul.bf16.gmra.mxu0 %v2105
    %v2116 = vpop.f32.mrf.mxu0
    %v2117 = vadd.f32 %v428, %v2116
    %v2118 = vpop.f32.mrf.mxu0
    %2119 = vdwg.mxu0
    %2120 = vmatpush.bf16.msra.mxu0 %v495
    %2121 = vmatpush.bf16.msra.mxu0 %v493
    %2122 = vmatpush.bf16.msra.mxu0 %v491
    %2123 = vmatpush.bf16.msra.mxu0 %v489
    %2124 = vmatpush.bf16.msra.mxu0 %v487
    %2125 = vmatpush.bf16.msra.mxu0 %v485
    %2126 = vmatpush.bf16.msra.mxu0 %v483
    %2127 = vmatpush.bf16.msra.mxu0 %v481
    %2128 = vmatmul.bf16.gmra.mxu0 %v2105
    %v2129 = vpop.f32.mrf.mxu0
    %v2130 = vadd.f32 %v429, %v2129
    %v2131 = vpop.f32.mrf.mxu0
    %2132 = vdwg.mxu0
    %v2133 = vxor.u32 %v2117, 2147483648
    %v2134 = vmul.f32 %v2133, 1.442695
    %v2135 = vpow.pop %v2134
    %v2136 = vadd.f32 %v2135, 1.0
    %v2137 = vrcp.pop %v2136
    %v2138 = vmul.f32 %v2136, %v2137
    %v2139 = vsub.f32 1.0, %v2138
    %v2140 = vmul.f32 %v2137, %v2139
    %v2141 = vadd.f32 %v2137, %v2140
    %vm2142 = vweird.f32 %v2136
    %vm2143 = vweird.f32 %v2137
    %vm2144 = vmor %vm2142, %vm2143
    %v2145 = vsel %vm2144, %v2137, %v2141
    %v2146 = vand.u32 2147483647, %v2136
    %vm2147 = vcmp.eq.f32.partialorder %v2146, 8.507059e+37
    %v2148 = vand.u32 %v2136, 2147483648
    %v2149 = vor.u32 1.1754944e-38, %v2148
    %v2150 = vsel %vm2147, %v2149, %v2145
    %v2151 = vmul.f32 1.0, %v2150
    %v2152 = vmul.f32 %v2130, %v52
    %v2153 = vxor.u32 %v2152, 2147483648
    %v2154 = vmul.f32 %v2153, 1.442695
    %v2155 = vpow.pop %v2154
    %v2156 = vadd.f32 %v2155, 1.0
    %v2157 = vrcp.pop %v2156
    %v2158 = vmul.f32 %v2156, %v2157
    %v2159 = vsub.f32 1.0, %v2158
    %v2160 = vmul.f32 %v2157, %v2159
    %v2161 = vadd.f32 %v2157, %v2160
    %vm2162 = vweird.f32 %v2156
    %vm2163 = vweird.f32 %v2157
    %vm2164 = vmor %vm2162, %vm2163
    %v2165 = vsel %vm2164, %v2157, %v2161
    %v2166 = vand.u32 2147483647, %v2156
    %vm2167 = vcmp.eq.f32.partialorder %v2166, 8.507059e+37
    %v2168 = vand.u32 %v2156, 2147483648
    %v2169 = vor.u32 1.1754944e-38, %v2168
    %v2170 = vsel %vm2167, %v2169, %v2165
    %v2171 = vmul.f32 1.0, %v2170
    %v2172 = vmul.f32 %v2171, %v52
    %v2173 = vsub.f32 %v2172, %v53
    %v2174 = vmul.f32 %v2151, %v2173
    %v2175 = vmul.f32 %v2151, %v1841
    %2177 = vrot.lane.b32.xlu0 %v2174, 64
    %v2178 = vpop.permute.xlu0 %2177
    %v2180 = vadd.f32 %v2175, %v2178
    %v2181 = vtanh.pop %v2180
    %v2182 = vmul.f32 %v2173, %v2181
    %v2183 = vpack.c.bf16 %v2182, %v2182
    %v2185 = vunpack.c.l.b16 %v1930
    %v2186 = vpack.c.b16 %v2185, %v2185
    %2187 = vrot.lane.b32.xlu0 %v2186, 64
    %v2188 = vpop.permute.xlu0 %2187
    %v2191 = vsel %vm260, %v1844, %v2188
    %2193 = vmatpush.bf16.msra.mxu0 %v826
    %2194 = vmatpush.bf16.msra.mxu0 %v824
    %2195 = vmatpush.bf16.msra.mxu0 %v822
    %2196 = vmatpush.bf16.msra.mxu0 %v820
    %2197 = vmatpush.bf16.msra.mxu0 %v818
    %2198 = vmatpush.bf16.msra.mxu0 %v816
    %2199 = vmatpush.bf16.msra.mxu0 %v814
    %2200 = vmatpush.bf16.msra.mxu0 %v812
    %2201 = vmatmul.bf16.gmra.mxu0 %v2191
    %v2202 = vpop.f32.mrf.mxu0
    %v2203 = vadd.f32 %v760, %v2202
    %v2204 = vpop.f32.mrf.mxu0
    %2205 = vdwg.mxu0
    %2206 = vmatpush.bf16.msra.mxu0 %v827
    %2207 = vmatpush.bf16.msra.mxu0 %v825
    %2208 = vmatpush.bf16.msra.mxu0 %v823
    %2209 = vmatpush.bf16.msra.mxu0 %v821
    %2210 = vmatpush.bf16.msra.mxu0 %v819
    %2211 = vmatpush.bf16.msra.mxu0 %v817
    %2212 = vmatpush.bf16.msra.mxu0 %v815
    %2213 = vmatpush.bf16.msra.mxu0 %v813
    %2214 = vmatmul.bf16.gmra.mxu0 %v2191
    %v2215 = vpop.f32.mrf.mxu0
    %v2216 = vadd.f32 %v761, %v2215
    %v2217 = vpop.f32.mrf.mxu0
    %2218 = vdwg.mxu0
    %v2219 = vxor.u32 %v2203, 2147483648
    %v2220 = vmul.f32 %v2219, 1.442695
    %v2221 = vpow.pop %v2220
    %v2222 = vadd.f32 %v2221, 1.0
    %v2223 = vrcp.pop %v2222
    %v2224 = vmul.f32 %v2222, %v2223
    %v2225 = vsub.f32 1.0, %v2224
    %v2226 = vmul.f32 %v2223, %v2225
    %v2227 = vadd.f32 %v2223, %v2226
    %vm2228 = vweird.f32 %v2222
    %vm2229 = vweird.f32 %v2223
    %vm2230 = vmor %vm2228, %vm2229
    %v2231 = vsel %vm2230, %v2223, %v2227
    %v2232 = vand.u32 2147483647, %v2222
    %vm2233 = vcmp.eq.f32.partialorder %v2232, 8.507059e+37
    %v2234 = vand.u32 %v2222, 2147483648
    %v2235 = vor.u32 1.1754944e-38, %v2234
    %v2236 = vsel %vm2233, %v2235, %v2231
    %v2237 = vmul.f32 1.0, %v2236
    %v2238 = vmul.f32 %v2216, %v52
    %v2239 = vxor.u32 %v2238, 2147483648
    %v2240 = vmul.f32 %v2239, 1.442695
    %v2241 = vpow.pop %v2240
    %v2242 = vadd.f32 %v2241, 1.0
    %v2243 = vrcp.pop %v2242
    %v2244 = vmul.f32 %v2242, %v2243
    %v2245 = vsub.f32 1.0, %v2244
    %v2246 = vmul.f32 %v2243, %v2245
    %v2247 = vadd.f32 %v2243, %v2246
    %vm2248 = vweird.f32 %v2242
    %vm2249 = vweird.f32 %v2243
    %vm2250 = vmor %vm2248, %vm2249
    %v2251 = vsel %vm2250, %v2243, %v2247
    %v2252 = vand.u32 2147483647, %v2242
    %vm2253 = vcmp.eq.f32.partialorder %v2252, 8.507059e+37
    %v2254 = vand.u32 %v2242, 2147483648
    %v2255 = vor.u32 1.1754944e-38, %v2254
    %v2256 = vsel %vm2253, %v2255, %v2251
    %v2257 = vmul.f32 1.0, %v2256
    %v2258 = vmul.f32 %v2257, %v52
    %v2259 = vsub.f32 %v2258, %v53
    %v2260 = vmul.f32 %v2237, %v2259
    %v2261 = vmul.f32 %v2237, %v1927
    %2263 = vrot.lane.b32.xlu0 %v2260, 64
    %v2264 = vpop.permute.xlu0 %2263
    %v2266 = vadd.f32 %v2261, %v2264
    %v2267 = vtanh.pop %v2266
    %v2268 = vmul.f32 %v2259, %v2267
    %v2269 = vpack.c.bf16 %v2268, %v2268
    %v2271 = vunpack.c.l.b16 %v2016
    %v2272 = vpack.c.b16 %v2271, %v2271
    %2273 = vrot.lane.b32.xlu0 %v2272, 64
    %v2274 = vpop.permute.xlu0 %2273
    %v2277 = vsel %vm260, %v1930, %v2274
    %2279 = vmatpush.bf16.msra.mxu0 %v1244
    %2280 = vmatpush.bf16.msra.mxu0 %v1242
    %2281 = vmatpush.bf16.msra.mxu0 %v1240
    %2282 = vmatpush.bf16.msra.mxu0 %v1238
    %2283 = vmatpush.bf16.msra.mxu0 %v1236
    %2284 = vmatpush.bf16.msra.mxu0 %v1234
    %2285 = vmatpush.bf16.msra.mxu0 %v1232
    %2286 = vmatpush.bf16.msra.mxu0 %v1230
    %2287 = vmatmul.bf16.gmra.mxu0 %v2277
    %v2288 = vpop.f32.mrf.mxu0
    %v2289 = vadd.f32 %v1178, %v2288
    %v2290 = vpop.f32.mrf.mxu0
    %2291 = vdwg.mxu0
    %2292 = vmatpush.bf16.msra.mxu0 %v1245
    %2293 = vmatpush.bf16.msra.mxu0 %v1243
    %2294 = vmatpush.bf16.msra.mxu0 %v1241
    %2295 = vmatpush.bf16.msra.mxu0 %v1239
    %2296 = vmatpush.bf16.msra.mxu0 %v1237
    %2297 = vmatpush.bf16.msra.mxu0 %v1235
    %2298 = vmatpush.bf16.msra.mxu0 %v1233
    %2299 = vmatpush.bf16.msra.mxu0 %v1231
    %2300 = vmatmul.bf16.gmra.mxu0 %v2277
    %v2301 = vpop.f32.mrf.mxu0
    %v2302 = vadd.f32 %v1179, %v2301
    %v2303 = vpop.f32.mrf.mxu0
    %2304 = vdwg.mxu0
    %v2305 = vxor.u32 %v2289, 2147483648
    %v2306 = vmul.f32 %v2305, 1.442695
    %v2307 = vpow.pop %v2306
    %v2308 = vadd.f32 %v2307, 1.0
    %v2309 = vrcp.pop %v2308
    %v2310 = vmul.f32 %v2308, %v2309
    %v2311 = vsub.f32 1.0, %v2310
    %v2312 = vmul.f32 %v2309, %v2311
    %v2313 = vadd.f32 %v2309, %v2312
    %vm2314 = vweird.f32 %v2308
    %vm2315 = vweird.f32 %v2309
    %vm2316 = vmor %vm2314, %vm2315
    %v2317 = vsel %vm2316, %v2309, %v2313
    %v2318 = vand.u32 2147483647, %v2308
    %vm2319 = vcmp.eq.f32.partialorder %v2318, 8.507059e+37
    %v2320 = vand.u32 %v2308, 2147483648
    %v2321 = vor.u32 1.1754944e-38, %v2320
    %v2322 = vsel %vm2319, %v2321, %v2317
    %v2323 = vmul.f32 1.0, %v2322
    %v2324 = vmul.f32 %v2302, %v52
    %v2325 = vxor.u32 %v2324, 2147483648
    %v2326 = vmul.f32 %v2325, 1.442695
    %v2327 = vpow.pop %v2326
    %v2328 = vadd.f32 %v2327, 1.0
    %v2329 = vrcp.pop %v2328
    %v2330 = vmul.f32 %v2328, %v2329
    %v2331 = vsub.f32 1.0, %v2330
    %v2332 = vmul.f32 %v2329, %v2331
    %v2333 = vadd.f32 %v2329, %v2332
    %vm2334 = vweird.f32 %v2328
    %vm2335 = vweird.f32 %v2329
    %vm2336 = vmor %vm2334, %vm2335
    %v2337 = vsel %vm2336, %v2329, %v2333
    %v2338 = vand.u32 2147483647, %v2328
    %vm2339 = vcmp.eq.f32.partialorder %v2338, 8.507059e+37
    %v2340 = vand.u32 %v2328, 2147483648
    %v2341 = vor.u32 1.1754944e-38, %v2340
    %v2342 = vsel %vm2339, %v2341, %v2337
    %v2343 = vmul.f32 1.0, %v2342
    %v2344 = vmul.f32 %v2343, %v52
    %v2345 = vsub.f32 %v2344, %v53
    %v2346 = vmul.f32 %v2323, %v2345
    %v2347 = vmul.f32 %v2323, %v2013
    %2349 = vrot.lane.b32.xlu0 %v2346, 64
    %v2350 = vpop.permute.xlu0 %2349
    %v2352 = vadd.f32 %v2347, %v2350
    %v2353 = vtanh.pop %v2352
    %v2354 = vmul.f32 %v2345, %v2353
    %v2355 = vpack.c.bf16 %v2354, %v2354
    %v2357 = vsel %vm260, %v2098, 0
    %2359 = vmatpush.bf16.msra.mxu0 0
    %2360 = vmatpush.bf16.msra.mxu0 0
    %2361 = vmatpush.bf16.msra.mxu0 0
    %2362 = vmatpush.bf16.msra.mxu0 0
    %2363 = vmatpush.bf16.msra.mxu0 %v250
    %2364 = vmatpush.bf16.msra.mxu0 %v248
    %2365 = vmatpush.bf16.msra.mxu0 %v246
    %2366 = vmatpush.bf16.msra.mxu0 %v244
    %2367 = vmatmul.bf16.gmra.mxu0 %v2357
    %v2368 = vpop.f32.mrf.mxu0
    %v2369 = vadd.f32 0.0, %v2368
    %v2370 = vpop.f32.mrf.mxu0
    %2371 = vdwg.mxu0
    %2372 = vmatpush.bf16.msra.mxu0 0
    %2373 = vmatpush.bf16.msra.mxu0 0
    %2374 = vmatpush.bf16.msra.mxu0 0
    %2375 = vmatpush.bf16.msra.mxu0 0
    %2376 = vmatpush.bf16.msra.mxu0 %v251
    %2377 = vmatpush.bf16.msra.mxu0 %v249
    %2378 = vmatpush.bf16.msra.mxu0 %v247
    %2379 = vmatpush.bf16.msra.mxu0 %v245
    %2380 = vmatmul.bf16.gmra.mxu0 %v2357
    %v2381 = vpop.f32.mrf.mxu0
    %v2382 = vadd.f32 0.0, %v2381
    %v2383 = vpop.f32.mrf.mxu0
    %2384 = vdwg.mxu0
    %v2385 = vadd.f32 %v125, %v2369
    %v2386 = vadd.f32 %v154, %v2382
    %v2387 = vxor.u32 %v2385, 2147483648
    %v2388 = vmul.f32 %v2387, 1.442695
    %v2389 = vpow.pop %v2388
    %v2390 = vadd.f32 %v2389, 1.0
    %v2391 = vrcp.pop %v2390
    %v2392 = vmul.f32 %v2390, %v2391
    %v2393 = vsub.f32 1.0, %v2392
    %v2394 = vmul.f32 %v2391, %v2393
    %v2395 = vadd.f32 %v2391, %v2394
    %vm2396 = vweird.f32 %v2390
    %vm2397 = vweird.f32 %v2391
    %vm2398 = vmor %vm2396, %vm2397
    %v2399 = vsel %vm2398, %v2391, %v2395
    %v2400 = vand.u32 2147483647, %v2390
    %vm2401 = vcmp.eq.f32.partialorder %v2400, 8.507059e+37
    %v2402 = vand.u32 %v2390, 2147483648
    %v2403 = vor.u32 1.1754944e-38, %v2402
    %v2404 = vsel %vm2401, %v2403, %v2399
    %v2405 = vmul.f32 1.0, %v2404
    %v2406 = vmul.f32 %v2386, %v52
    %v2407 = vxor.u32 %v2406, 2147483648
    %v2408 = vmul.f32 %v2407, 1.442695
    %v2409 = vpow.pop %v2408
    %v2410 = vadd.f32 %v2409, 1.0
    %v2411 = vrcp.pop %v2410
    %v2412 = vmul.f32 %v2410, %v2411
    %v2413 = vsub.f32 1.0, %v2412
    %v2414 = vmul.f32 %v2411, %v2413
    %v2415 = vadd.f32 %v2411, %v2414
    %vm2416 = vweird.f32 %v2410
    %vm2417 = vweird.f32 %v2411
    %vm2418 = vmor %vm2416, %vm2417
    %v2419 = vsel %vm2418, %v2411, %v2415
    %v2420 = vand.u32 2147483647, %v2410
    %vm2421 = vcmp.eq.f32.partialorder %v2420, 8.507059e+37
    %v2422 = vand.u32 %v2410, 2147483648
    %v2423 = vor.u32 1.1754944e-38, %v2422
    %v2424 = vsel %vm2421, %v2423, %v2419
    %v2425 = vmul.f32 1.0, %v2424
    %v2426 = vmul.f32 %v2425, %v52
    %v2427 = vsub.f32 %v2426, %v53
    %v2428 = vmul.f32 %v2405, %v2427
    %v2429 = vmul.f32 %v2405, %v2095
    %2431 = vrot.lane.b32.xlu0 %v2428, 64
    %v2432 = vpop.permute.xlu0 %2431
    %v2434 = vadd.f32 %v2429, %v2432
    %v2435 = vtanh.pop %v2434
    %v2436 = vmul.f32 %v2427, %v2435
    %v2437 = vpack.c.bf16 %v2436, %v2436
    %v2439 = vunpack.c.l.b16 %v2183
    %v2440 = vpack.c.b16 %v2439, %v2439
    %2441 = vrot.lane.b32.xlu0 %v2440, 64
    %v2442 = vpop.permute.xlu0 %2441
    %v2444 = vsel %vm260, %v2098, %v2442
    %2446 = vmatpush.bf16.msra.mxu0 %v494
    %2447 = vmatpush.bf16.msra.mxu0 %v492
    %2448 = vmatpush.bf16.msra.mxu0 %v490
    %2449 = vmatpush.bf16.msra.mxu0 %v488
    %2450 = vmatpush.bf16.msra.mxu0 %v486
    %2451 = vmatpush.bf16.msra.mxu0 %v484
    %2452 = vmatpush.bf16.msra.mxu0 %v482
    %2453 = vmatpush.bf16.msra.mxu0 %v480
    %2454 = vmatmul.bf16.gmra.mxu0 %v2444
    %v2455 = vpop.f32.mrf.mxu0
    %v2456 = vadd.f32 %v428, %v2455
    %v2457 = vpop.f32.mrf.mxu0
    %2458 = vdwg.mxu0
    %2459 = vmatpush.bf16.msra.mxu0 %v495
    %2460 = vmatpush.bf16.msra.mxu0 %v493
    %2461 = vmatpush.bf16.msra.mxu0 %v491
    %2462 = vmatpush.bf16.msra.mxu0 %v489
    %2463 = vmatpush.bf16.msra.mxu0 %v487
    %2464 = vmatpush.bf16.msra.mxu0 %v485
    %2465 = vmatpush.bf16.msra.mxu0 %v483
    %2466 = vmatpush.bf16.msra.mxu0 %v481
    %2467 = vmatmul.bf16.gmra.mxu0 %v2444
    %v2468 = vpop.f32.mrf.mxu0
    %v2469 = vadd.f32 %v429, %v2468
    %v2470 = vpop.f32.mrf.mxu0
    %2471 = vdwg.mxu0
    %v2472 = vxor.u32 %v2456, 2147483648
    %v2473 = vmul.f32 %v2472, 1.442695
    %v2474 = vpow.pop %v2473
    %v2475 = vadd.f32 %v2474, 1.0
    %v2476 = vrcp.pop %v2475
    %v2477 = vmul.f32 %v2475, %v2476
    %v2478 = vsub.f32 1.0, %v2477
    %v2479 = vmul.f32 %v2476, %v2478
    %v2480 = vadd.f32 %v2476, %v2479
    %vm2481 = vweird.f32 %v2475
    %vm2482 = vweird.f32 %v2476
    %vm2483 = vmor %vm2481, %vm2482
    %v2484 = vsel %vm2483, %v2476, %v2480
    %v2485 = vand.u32 2147483647, %v2475
    %vm2486 = vcmp.eq.f32.partialorder %v2485, 8.507059e+37
    %v2487 = vand.u32 %v2475, 2147483648
    %v2488 = vor.u32 1.1754944e-38, %v2487
    %v2489 = vsel %vm2486, %v2488, %v2484
    %v2490 = vmul.f32 1.0, %v2489
    %v2491 = vmul.f32 %v2469, %v52
    %v2492 = vxor.u32 %v2491, 2147483648
    %v2493 = vmul.f32 %v2492, 1.442695
    %v2494 = vpow.pop %v2493
    %v2495 = vadd.f32 %v2494, 1.0
    %v2496 = vrcp.pop %v2495
    %v2497 = vmul.f32 %v2495, %v2496
    %v2498 = vsub.f32 1.0, %v2497
    %v2499 = vmul.f32 %v2496, %v2498
    %v2500 = vadd.f32 %v2496, %v2499
    %vm2501 = vweird.f32 %v2495
    %vm2502 = vweird.f32 %v2496
    %vm2503 = vmor %vm2501, %vm2502
    %v2504 = vsel %vm2503, %v2496, %v2500
    %v2505 = vand.u32 2147483647, %v2495
    %vm2506 = vcmp.eq.f32.partialorder %v2505, 8.507059e+37
    %v2507 = vand.u32 %v2495, 2147483648
    %v2508 = vor.u32 1.1754944e-38, %v2507
    %v2509 = vsel %vm2506, %v2508, %v2504
    %v2510 = vmul.f32 1.0, %v2509
    %v2511 = vmul.f32 %v2510, %v52
    %v2512 = vsub.f32 %v2511, %v53
    %v2513 = vmul.f32 %v2490, %v2512
    %v2514 = vmul.f32 %v2490, %v2180
    %2516 = vrot.lane.b32.xlu0 %v2513, 64
    %v2517 = vpop.permute.xlu0 %2516
    %v2519 = vadd.f32 %v2514, %v2517
    %v2520 = vtanh.pop %v2519
    %v2521 = vmul.f32 %v2512, %v2520
    %v2522 = vpack.c.bf16 %v2521, %v2521
    %v2524 = vunpack.c.l.b16 %v2269
    %v2525 = vpack.c.b16 %v2524, %v2524
    %2526 = vrot.lane.b32.xlu0 %v2525, 64
    %v2527 = vpop.permute.xlu0 %2526
    %v2530 = vsel %vm260, %v2183, %v2527
    %2532 = vmatpush.bf16.msra.mxu0 %v826
    %2533 = vmatpush.bf16.msra.mxu0 %v824
    %2534 = vmatpush.bf16.msra.mxu0 %v822
    %2535 = vmatpush.bf16.msra.mxu0 %v820
    %2536 = vmatpush.bf16.msra.mxu0 %v818
    %2537 = vmatpush.bf16.msra.mxu0 %v816
    %2538 = vmatpush.bf16.msra.mxu0 %v814
    %2539 = vmatpush.bf16.msra.mxu0 %v812
    %2540 = vmatmul.bf16.gmra.mxu0 %v2530
    %v2541 = vpop.f32.mrf.mxu0
    %v2542 = vadd.f32 %v760, %v2541
    %v2543 = vpop.f32.mrf.mxu0
    %2544 = vdwg.mxu0
    %2545 = vmatpush.bf16.msra.mxu0 %v827
    %2546 = vmatpush.bf16.msra.mxu0 %v825
    %2547 = vmatpush.bf16.msra.mxu0 %v823
    %2548 = vmatpush.bf16.msra.mxu0 %v821
    %2549 = vmatpush.bf16.msra.mxu0 %v819
    %2550 = vmatpush.bf16.msra.mxu0 %v817
    %2551 = vmatpush.bf16.msra.mxu0 %v815
    %2552 = vmatpush.bf16.msra.mxu0 %v813
    %2553 = vmatmul.bf16.gmra.mxu0 %v2530
    %v2554 = vpop.f32.mrf.mxu0
    %v2555 = vadd.f32 %v761, %v2554
    %v2556 = vpop.f32.mrf.mxu0
    %2557 = vdwg.mxu0
    %v2558 = vxor.u32 %v2542, 2147483648
    %v2559 = vmul.f32 %v2558, 1.442695
    %v2560 = vpow.pop %v2559
    %v2561 = vadd.f32 %v2560, 1.0
    %v2562 = vrcp.pop %v2561
    %v2563 = vmul.f32 %v2561, %v2562
    %v2564 = vsub.f32 1.0, %v2563
    %v2565 = vmul.f32 %v2562, %v2564
    %v2566 = vadd.f32 %v2562, %v2565
    %vm2567 = vweird.f32 %v2561
    %vm2568 = vweird.f32 %v2562
    %vm2569 = vmor %vm2567, %vm2568
    %v2570 = vsel %vm2569, %v2562, %v2566
    %v2571 = vand.u32 2147483647, %v2561
    %vm2572 = vcmp.eq.f32.partialorder %v2571, 8.507059e+37
    %v2573 = vand.u32 %v2561, 2147483648
    %v2574 = vor.u32 1.1754944e-38, %v2573
    %v2575 = vsel %vm2572, %v2574, %v2570
    %v2576 = vmul.f32 1.0, %v2575
    %v2577 = vmul.f32 %v2555, %v52
    %v2578 = vxor.u32 %v2577, 2147483648
    %v2579 = vmul.f32 %v2578, 1.442695
    %v2580 = vpow.pop %v2579
    %v2581 = vadd.f32 %v2580, 1.0
    %v2582 = vrcp.pop %v2581
    %v2583 = vmul.f32 %v2581, %v2582
    %v2584 = vsub.f32 1.0, %v2583
    %v2585 = vmul.f32 %v2582, %v2584
    %v2586 = vadd.f32 %v2582, %v2585
    %vm2587 = vweird.f32 %v2581
    %vm2588 = vweird.f32 %v2582
    %vm2589 = vmor %vm2587, %vm2588
    %v2590 = vsel %vm2589, %v2582, %v2586
    %v2591 = vand.u32 2147483647, %v2581
    %vm2592 = vcmp.eq.f32.partialorder %v2591, 8.507059e+37
    %v2593 = vand.u32 %v2581, 2147483648
    %v2594 = vor.u32 1.1754944e-38, %v2593
    %v2595 = vsel %vm2592, %v2594, %v2590
    %v2596 = vmul.f32 1.0, %v2595
    %v2597 = vmul.f32 %v2596, %v52
    %v2598 = vsub.f32 %v2597, %v53
    %v2599 = vmul.f32 %v2576, %v2598
    %v2600 = vmul.f32 %v2576, %v2266
    %2602 = vrot.lane.b32.xlu0 %v2599, 64
    %v2603 = vpop.permute.xlu0 %2602
    %v2605 = vadd.f32 %v2600, %v2603
    %v2606 = vtanh.pop %v2605
    %v2607 = vmul.f32 %v2598, %v2606
    %v2608 = vpack.c.bf16 %v2607, %v2607
    %v2610 = vunpack.c.l.b16 %v2355
    %v2611 = vpack.c.b16 %v2610, %v2610
    %2612 = vrot.lane.b32.xlu0 %v2611, 64
    %v2613 = vpop.permute.xlu0 %2612
    %v2616 = vsel %vm260, %v2269, %v2613
    %2618 = vmatpush.bf16.msra.mxu0 %v1244
    %2619 = vmatpush.bf16.msra.mxu0 %v1242
    %2620 = vmatpush.bf16.msra.mxu0 %v1240
    %2621 = vmatpush.bf16.msra.mxu0 %v1238
    %2622 = vmatpush.bf16.msra.mxu0 %v1236
    %2623 = vmatpush.bf16.msra.mxu0 %v1234
    %2624 = vmatpush.bf16.msra.mxu0 %v1232
    %2625 = vmatpush.bf16.msra.mxu0 %v1230
    %2626 = vmatmul.bf16.gmra.mxu0 %v2616
    %v2627 = vpop.f32.mrf.mxu0
    %v2628 = vadd.f32 %v1178, %v2627
    %v2629 = vpop.f32.mrf.mxu0
    %2630 = vdwg.mxu0
    %2631 = vmatpush.bf16.msra.mxu0 %v1245
    %2632 = vmatpush.bf16.msra.mxu0 %v1243
    %2633 = vmatpush.bf16.msra.mxu0 %v1241
    %2634 = vmatpush.bf16.msra.mxu0 %v1239
    %2635 = vmatpush.bf16.msra.mxu0 %v1237
    %2636 = vmatpush.bf16.msra.mxu0 %v1235
    %2637 = vmatpush.bf16.msra.mxu0 %v1233
    %2638 = vmatpush.bf16.msra.mxu0 %v1231
    %2639 = vmatmul.bf16.gmra.mxu0 %v2616
    %v2640 = vpop.f32.mrf.mxu0
    %v2641 = vadd.f32 %v1179, %v2640
    %v2642 = vpop.f32.mrf.mxu0
    %2643 = vdwg.mxu0
    %v2644 = vxor.u32 %v2628, 2147483648
    %v2645 = vmul.f32 %v2644, 1.442695
    %v2646 = vpow.pop %v2645
    %v2647 = vadd.f32 %v2646, 1.0
    %v2648 = vrcp.pop %v2647
    %v2649 = vmul.f32 %v2647, %v2648
    %v2650 = vsub.f32 1.0, %v2649
    %v2651 = vmul.f32 %v2648, %v2650
    %v2652 = vadd.f32 %v2648, %v2651
    %vm2653 = vweird.f32 %v2647
    %vm2654 = vweird.f32 %v2648
    %vm2655 = vmor %vm2653, %vm2654
    %v2656 = vsel %vm2655, %v2648, %v2652
    %v2657 = vand.u32 2147483647, %v2647
    %vm2658 = vcmp.eq.f32.partialorder %v2657, 8.507059e+37
    %v2659 = vand.u32 %v2647, 2147483648
    %v2660 = vor.u32 1.1754944e-38, %v2659
    %v2661 = vsel %vm2658, %v2660, %v2656
    %v2662 = vmul.f32 1.0, %v2661
    %v2663 = vmul.f32 %v2641, %v52
    %v2664 = vxor.u32 %v2663, 2147483648
    %v2665 = vmul.f32 %v2664, 1.442695
    %v2666 = vpow.pop %v2665
    %v2667 = vadd.f32 %v2666, 1.0
    %v2668 = vrcp.pop %v2667
    %v2669 = vmul.f32 %v2667, %v2668
    %v2670 = vsub.f32 1.0, %v2669
    %v2671 = vmul.f32 %v2668, %v2670
    %v2672 = vadd.f32 %v2668, %v2671
    %vm2673 = vweird.f32 %v2667
    %vm2674 = vweird.f32 %v2668
    %vm2675 = vmor %vm2673, %vm2674
    %v2676 = vsel %vm2675, %v2668, %v2672
    %v2677 = vand.u32 2147483647, %v2667
    %vm2678 = vcmp.eq.f32.partialorder %v2677, 8.507059e+37
    %v2679 = vand.u32 %v2667, 2147483648
    %v2680 = vor.u32 1.1754944e-38, %v2679
    %v2681 = vsel %vm2678, %v2680, %v2676
    %v2682 = vmul.f32 1.0, %v2681
    %v2683 = vmul.f32 %v2682, %v52
    %v2684 = vsub.f32 %v2683, %v53
    %v2685 = vmul.f32 %v2662, %v2684
    %v2686 = vmul.f32 %v2662, %v2352
    %2688 = vrot.lane.b32.xlu0 %v2685, 64
    %v2689 = vpop.permute.xlu0 %2688
    %v2691 = vadd.f32 %v2686, %v2689
    %v2692 = vtanh.pop %v2691
    %v2693 = vmul.f32 %v2684, %v2692
    %v2694 = vpack.c.bf16 %v2693, %v2693
    %v2696 = vunpack.c.l.b16 %v2522
    %v2697 = vpack.c.b16 %v2696, %v2696
    %2698 = vrot.lane.b32.xlu0 %v2697, 64
    %v2699 = vpop.permute.xlu0 %2698
    %v2702 = vsel %vm260, %v2437, %v2699
    %2704 = vmatpush.bf16.msra.mxu0 %v494
    %2705 = vmatpush.bf16.msra.mxu0 %v492
    %2706 = vmatpush.bf16.msra.mxu0 %v490
    %2707 = vmatpush.bf16.msra.mxu0 %v488
    %2708 = vmatpush.bf16.msra.mxu0 %v486
    %2709 = vmatpush.bf16.msra.mxu0 %v484
    %2710 = vmatpush.bf16.msra.mxu0 %v482
    %2711 = vmatpush.bf16.msra.mxu0 %v480
    %2712 = vmatmul.bf16.gmra.mxu0 %v2702
    %v2713 = vpop.f32.mrf.mxu0
    %v2714 = vadd.f32 %v428, %v2713
    %v2715 = vpop.f32.mrf.mxu0
    %2716 = vdwg.mxu0
    %2717 = vmatpush.bf16.msra.mxu0 %v495
    %2718 = vmatpush.bf16.msra.mxu0 %v493
    %2719 = vmatpush.bf16.msra.mxu0 %v491
    %2720 = vmatpush.bf16.msra.mxu0 %v489
    %2721 = vmatpush.bf16.msra.mxu0 %v487
    %2722 = vmatpush.bf16.msra.mxu0 %v485
    %2723 = vmatpush.bf16.msra.mxu0 %v483
    %2724 = vmatpush.bf16.msra.mxu0 %v481
    %2725 = vmatmul.bf16.gmra.mxu0 %v2702
    %v2726 = vpop.f32.mrf.mxu0
    %v2727 = vadd.f32 %v429, %v2726
    %v2728 = vpop.f32.mrf.mxu0
    %2729 = vdwg.mxu0
    %v2730 = vxor.u32 %v2714, 2147483648
    %v2731 = vmul.f32 %v2730, 1.442695
    %v2732 = vpow.pop %v2731
    %v2733 = vadd.f32 %v2732, 1.0
    %v2734 = vrcp.pop %v2733
    %v2735 = vmul.f32 %v2733, %v2734
    %v2736 = vsub.f32 1.0, %v2735
    %v2737 = vmul.f32 %v2734, %v2736
    %v2738 = vadd.f32 %v2734, %v2737
    %vm2739 = vweird.f32 %v2733
    %vm2740 = vweird.f32 %v2734
    %vm2741 = vmor %vm2739, %vm2740
    %v2742 = vsel %vm2741, %v2734, %v2738
    %v2743 = vand.u32 2147483647, %v2733
    %vm2744 = vcmp.eq.f32.partialorder %v2743, 8.507059e+37
    %v2745 = vand.u32 %v2733, 2147483648
    %v2746 = vor.u32 1.1754944e-38, %v2745
    %v2747 = vsel %vm2744, %v2746, %v2742
    %v2748 = vmul.f32 1.0, %v2747
    %v2749 = vmul.f32 %v2727, %v52
    %v2750 = vxor.u32 %v2749, 2147483648
    %v2751 = vmul.f32 %v2750, 1.442695
    %v2752 = vpow.pop %v2751
    %v2753 = vadd.f32 %v2752, 1.0
    %v2754 = vrcp.pop %v2753
    %v2755 = vmul.f32 %v2753, %v2754
    %v2756 = vsub.f32 1.0, %v2755
    %v2757 = vmul.f32 %v2754, %v2756
    %v2758 = vadd.f32 %v2754, %v2757
    %vm2759 = vweird.f32 %v2753
    %vm2760 = vweird.f32 %v2754
    %vm2761 = vmor %vm2759, %vm2760
    %v2762 = vsel %vm2761, %v2754, %v2758
    %v2763 = vand.u32 2147483647, %v2753
    %vm2764 = vcmp.eq.f32.partialorder %v2763, 8.507059e+37
    %v2765 = vand.u32 %v2753, 2147483648
    %v2766 = vor.u32 1.1754944e-38, %v2765
    %v2767 = vsel %vm2764, %v2766, %v2762
    %v2768 = vmul.f32 1.0, %v2767
    %v2769 = vmul.f32 %v2768, %v52
    %v2770 = vsub.f32 %v2769, %v53
    %v2771 = vmul.f32 %v2748, %v2770
    %v2772 = vmul.f32 %v2748, %v2519
    %2774 = vrot.lane.b32.xlu0 %v2771, 64
    %v2775 = vpop.permute.xlu0 %2774
    %v2777 = vadd.f32 %v2772, %v2775
    %v2778 = vtanh.pop %v2777
    %v2779 = vmul.f32 %v2770, %v2778
    %v2780 = vpack.c.bf16 %v2779, %v2779
    %v2782 = vunpack.c.l.b16 %v2608
    %v2783 = vpack.c.b16 %v2782, %v2782
    %2784 = vrot.lane.b32.xlu0 %v2783, 64
    %v2785 = vpop.permute.xlu0 %2784
    %v2788 = vsel %vm260, %v2522, %v2785
    %2790 = vmatpush.bf16.msra.mxu0 %v826
    %2791 = vmatpush.bf16.msra.mxu0 %v824
    %2792 = vmatpush.bf16.msra.mxu0 %v822
    %2793 = vmatpush.bf16.msra.mxu0 %v820
    %2794 = vmatpush.bf16.msra.mxu0 %v818
    %2795 = vmatpush.bf16.msra.mxu0 %v816
    %2796 = vmatpush.bf16.msra.mxu0 %v814
    %2797 = vmatpush.bf16.msra.mxu0 %v812
    %2798 = vmatmul.bf16.gmra.mxu0 %v2788
    %v2799 = vpop.f32.mrf.mxu0
    %v2800 = vadd.f32 %v760, %v2799
    %v2801 = vpop.f32.mrf.mxu0
    %2802 = vdwg.mxu0
    %2803 = vmatpush.bf16.msra.mxu0 %v827
    %2804 = vmatpush.bf16.msra.mxu0 %v825
    %2805 = vmatpush.bf16.msra.mxu0 %v823
    %2806 = vmatpush.bf16.msra.mxu0 %v821
    %2807 = vmatpush.bf16.msra.mxu0 %v819
    %2808 = vmatpush.bf16.msra.mxu0 %v817
    %2809 = vmatpush.bf16.msra.mxu0 %v815
    %2810 = vmatpush.bf16.msra.mxu0 %v813
    %2811 = vmatmul.bf16.gmra.mxu0 %v2788
    %v2812 = vpop.f32.mrf.mxu0
    %v2813 = vadd.f32 %v761, %v2812
    %v2814 = vpop.f32.mrf.mxu0
    %2815 = vdwg.mxu0
    %v2816 = vxor.u32 %v2800, 2147483648
    %v2817 = vmul.f32 %v2816, 1.442695
    %v2818 = vpow.pop %v2817
    %v2819 = vadd.f32 %v2818, 1.0
    %v2820 = vrcp.pop %v2819
    %v2821 = vmul.f32 %v2819, %v2820
    %v2822 = vsub.f32 1.0, %v2821
    %v2823 = vmul.f32 %v2820, %v2822
    %v2824 = vadd.f32 %v2820, %v2823
    %vm2825 = vweird.f32 %v2819
    %vm2826 = vweird.f32 %v2820
    %vm2827 = vmor %vm2825, %vm2826
    %v2828 = vsel %vm2827, %v2820, %v2824
    %v2829 = vand.u32 2147483647, %v2819
    %vm2830 = vcmp.eq.f32.partialorder %v2829, 8.507059e+37
    %v2831 = vand.u32 %v2819, 2147483648
    %v2832 = vor.u32 1.1754944e-38, %v2831
    %v2833 = vsel %vm2830, %v2832, %v2828
    %v2834 = vmul.f32 1.0, %v2833
    %v2835 = vmul.f32 %v2813, %v52
    %v2836 = vxor.u32 %v2835, 2147483648
    %v2837 = vmul.f32 %v2836, 1.442695
    %v2838 = vpow.pop %v2837
    %v2839 = vadd.f32 %v2838, 1.0
    %v2840 = vrcp.pop %v2839
    %v2841 = vmul.f32 %v2839, %v2840
    %v2842 = vsub.f32 1.0, %v2841
    %v2843 = vmul.f32 %v2840, %v2842
    %v2844 = vadd.f32 %v2840, %v2843
    %vm2845 = vweird.f32 %v2839
    %vm2846 = vweird.f32 %v2840
    %vm2847 = vmor %vm2845, %vm2846
    %v2848 = vsel %vm2847, %v2840, %v2844
    %v2849 = vand.u32 2147483647, %v2839
    %vm2850 = vcmp.eq.f32.partialorder %v2849, 8.507059e+37
    %v2851 = vand.u32 %v2839, 2147483648
    %v2852 = vor.u32 1.1754944e-38, %v2851
    %v2853 = vsel %vm2850, %v2852, %v2848
    %v2854 = vmul.f32 1.0, %v2853
    %v2855 = vmul.f32 %v2854, %v52
    %v2856 = vsub.f32 %v2855, %v53
    %v2857 = vmul.f32 %v2834, %v2856
    %v2858 = vmul.f32 %v2834, %v2605
    %2860 = vrot.lane.b32.xlu0 %v2857, 64
    %v2861 = vpop.permute.xlu0 %2860
    %v2863 = vadd.f32 %v2858, %v2861
    %v2864 = vtanh.pop %v2863
    %v2865 = vmul.f32 %v2856, %v2864
    %v2866 = vpack.c.bf16 %v2865, %v2865
    %v2868 = vunpack.c.l.b16 %v2694
    %v2869 = vpack.c.b16 %v2868, %v2868
    %2870 = vrot.lane.b32.xlu0 %v2869, 64
    %v2871 = vpop.permute.xlu0 %2870
    %v2874 = vsel %vm260, %v2608, %v2871
    %2876 = vmatpush.bf16.msra.mxu0 %v1244
    %2877 = vmatpush.bf16.msra.mxu0 %v1242
    %2878 = vmatpush.bf16.msra.mxu0 %v1240
    %2879 = vmatpush.bf16.msra.mxu0 %v1238
    %2880 = vmatpush.bf16.msra.mxu0 %v1236
    %2881 = vmatpush.bf16.msra.mxu0 %v1234
    %2882 = vmatpush.bf16.msra.mxu0 %v1232
    %2883 = vmatpush.bf16.msra.mxu0 %v1230
    %2884 = vmatmul.bf16.gmra.mxu0 %v2874
    %v2885 = vpop.f32.mrf.mxu0
    %v2886 = vadd.f32 %v1178, %v2885
    %v2887 = vpop.f32.mrf.mxu0
    %2888 = vdwg.mxu0
    %2889 = vmatpush.bf16.msra.mxu0 %v1245
    %2890 = vmatpush.bf16.msra.mxu0 %v1243
    %2891 = vmatpush.bf16.msra.mxu0 %v1241
    %2892 = vmatpush.bf16.msra.mxu0 %v1239
    %2893 = vmatpush.bf16.msra.mxu0 %v1237
    %2894 = vmatpush.bf16.msra.mxu0 %v1235
    %2895 = vmatpush.bf16.msra.mxu0 %v1233
    %2896 = vmatpush.bf16.msra.mxu0 %v1231
    %2897 = vmatmul.bf16.gmra.mxu0 %v2874
    %v2898 = vpop.f32.mrf.mxu0
    %v2899 = vadd.f32 %v1179, %v2898
    %v2900 = vpop.f32.mrf.mxu0
    %2901 = vdwg.mxu0
    %v2902 = vxor.u32 %v2886, 2147483648
    %v2903 = vmul.f32 %v2902, 1.442695
    %v2904 = vpow.pop %v2903
    %v2905 = vadd.f32 %v2904, 1.0
    %v2906 = vrcp.pop %v2905
    %v2907 = vmul.f32 %v2905, %v2906
    %v2908 = vsub.f32 1.0, %v2907
    %v2909 = vmul.f32 %v2906, %v2908
    %v2910 = vadd.f32 %v2906, %v2909
    %vm2911 = vweird.f32 %v2905
    %vm2912 = vweird.f32 %v2906
    %vm2913 = vmor %vm2911, %vm2912
    %v2914 = vsel %vm2913, %v2906, %v2910
    %v2915 = vand.u32 2147483647, %v2905
    %vm2916 = vcmp.eq.f32.partialorder %v2915, 8.507059e+37
    %v2917 = vand.u32 %v2905, 2147483648
    %v2918 = vor.u32 1.1754944e-38, %v2917
    %v2919 = vsel %vm2916, %v2918, %v2914
    %v2920 = vmul.f32 1.0, %v2919
    %v2921 = vmul.f32 %v2899, %v52
    %v2922 = vxor.u32 %v2921, 2147483648
    %v2923 = vmul.f32 %v2922, 1.442695
    %v2924 = vpow.pop %v2923
    %v2925 = vadd.f32 %v2924, 1.0
    %v2926 = vrcp.pop %v2925
    %v2927 = vmul.f32 %v2925, %v2926
    %v2928 = vsub.f32 1.0, %v2927
    %v2929 = vmul.f32 %v2926, %v2928
    %v2930 = vadd.f32 %v2926, %v2929
    %vm2931 = vweird.f32 %v2925
    %vm2932 = vweird.f32 %v2926
    %vm2933 = vmor %vm2931, %vm2932
    %v2934 = vsel %vm2933, %v2926, %v2930
    %v2935 = vand.u32 2147483647, %v2925
    %vm2936 = vcmp.eq.f32.partialorder %v2935, 8.507059e+37
    %v2937 = vand.u32 %v2925, 2147483648
    %v2938 = vor.u32 1.1754944e-38, %v2937
    %v2939 = vsel %vm2936, %v2938, %v2934
    %v2940 = vmul.f32 1.0, %v2939
    %v2941 = vmul.f32 %v2940, %v52
    %v2942 = vsub.f32 %v2941, %v53
    %v2943 = vmul.f32 %v2920, %v2942
    %v2944 = vmul.f32 %v2920, %v2691
    %2946 = vrot.lane.b32.xlu0 %v2943, 64
    %v2947 = vpop.permute.xlu0 %2946
    %v2949 = vadd.f32 %v2944, %v2947
    %v2950 = vtanh.pop %v2949
    %v2951 = vmul.f32 %v2942, %v2950
    %v2952 = vpack.c.bf16 %v2951, %v2951
    %v2954 = vunpack.c.l.b16 %v2866
    %v2955 = vpack.c.b16 %v2954, %v2954
    %2956 = vrot.lane.b32.xlu0 %v2955, 64
    %v2957 = vpop.permute.xlu0 %2956
    %v2960 = vsel %vm260, %v2780, %v2957
    %2962 = vmatpush.bf16.msra.mxu0 %v826
    %2963 = vmatpush.bf16.msra.mxu0 %v824
    %2964 = vmatpush.bf16.msra.mxu0 %v822
    %2965 = vmatpush.bf16.msra.mxu0 %v820
    %2966 = vmatpush.bf16.msra.mxu0 %v818
    %2967 = vmatpush.bf16.msra.mxu0 %v816
    %2968 = vmatpush.bf16.msra.mxu0 %v814
    %2969 = vmatpush.bf16.msra.mxu0 %v812
    %2970 = vmatmul.bf16.gmra.mxu0 %v2960
    %v2971 = vpop.f32.mrf.mxu0
    %v2972 = vadd.f32 %v760, %v2971
    %v2973 = vpop.f32.mrf.mxu0
    %2974 = vdwg.mxu0
    %2975 = vmatpush.bf16.msra.mxu0 %v827
    %2976 = vmatpush.bf16.msra.mxu0 %v825
    %2977 = vmatpush.bf16.msra.mxu0 %v823
    %2978 = vmatpush.bf16.msra.mxu0 %v821
    %2979 = vmatpush.bf16.msra.mxu0 %v819
    %2980 = vmatpush.bf16.msra.mxu0 %v817
    %2981 = vmatpush.bf16.msra.mxu0 %v815
    %2982 = vmatpush.bf16.msra.mxu0 %v813
    %2983 = vmatmul.bf16.gmra.mxu0 %v2960
    %v2984 = vpop.f32.mrf.mxu0
    %v2985 = vadd.f32 %v761, %v2984
    %v2986 = vpop.f32.mrf.mxu0
    %2987 = vdwg.mxu0
    %v2988 = vxor.u32 %v2972, 2147483648
    %v2989 = vmul.f32 %v2988, 1.442695
    %v2990 = vpow.pop %v2989
    %v2991 = vadd.f32 %v2990, 1.0
    %v2992 = vrcp.pop %v2991
    %v2993 = vmul.f32 %v2991, %v2992
    %v2994 = vsub.f32 1.0, %v2993
    %v2995 = vmul.f32 %v2992, %v2994
    %v2996 = vadd.f32 %v2992, %v2995
    %vm2997 = vweird.f32 %v2991
    %vm2998 = vweird.f32 %v2992
    %vm2999 = vmor %vm2997, %vm2998
    %v3000 = vsel %vm2999, %v2992, %v2996
    %v3001 = vand.u32 2147483647, %v2991
    %vm3002 = vcmp.eq.f32.partialorder %v3001, 8.507059e+37
    %v3003 = vand.u32 %v2991, 2147483648
    %v3004 = vor.u32 1.1754944e-38, %v3003
    %v3005 = vsel %vm3002, %v3004, %v3000
    %v3006 = vmul.f32 1.0, %v3005
    %v3007 = vmul.f32 %v2985, %v52
    %v3008 = vxor.u32 %v3007, 2147483648
    %v3009 = vmul.f32 %v3008, 1.442695
    %v3010 = vpow.pop %v3009
    %v3011 = vadd.f32 %v3010, 1.0
    %v3012 = vrcp.pop %v3011
    %v3013 = vmul.f32 %v3011, %v3012
    %v3014 = vsub.f32 1.0, %v3013
    %v3015 = vmul.f32 %v3012, %v3014
    %v3016 = vadd.f32 %v3012, %v3015
    %vm3017 = vweird.f32 %v3011
    %vm3018 = vweird.f32 %v3012
    %vm3019 = vmor %vm3017, %vm3018
    %v3020 = vsel %vm3019, %v3012, %v3016
    %v3021 = vand.u32 2147483647, %v3011
    %vm3022 = vcmp.eq.f32.partialorder %v3021, 8.507059e+37
    %v3023 = vand.u32 %v3011, 2147483648
    %v3024 = vor.u32 1.1754944e-38, %v3023
    %v3025 = vsel %vm3022, %v3024, %v3020
    %v3026 = vmul.f32 1.0, %v3025
    %v3027 = vmul.f32 %v3026, %v52
    %v3028 = vsub.f32 %v3027, %v53
    %v3029 = vmul.f32 %v3006, %v3028
    %v3030 = vmul.f32 %v3006, %v2863
    %3032 = vrot.lane.b32.xlu0 %v3029, 64
    %v3033 = vpop.permute.xlu0 %3032
    %v3035 = vadd.f32 %v3030, %v3033
    %v3036 = vtanh.pop %v3035
    %v3037 = vmul.f32 %v3028, %v3036
    %v3038 = vpack.c.bf16 %v3037, %v3037
    %v3040 = vunpack.c.l.b16 %v2952
    %v3041 = vpack.c.b16 %v3040, %v3040
    %3042 = vrot.lane.b32.xlu0 %v3041, 64
    %v3043 = vpop.permute.xlu0 %3042
    %v3046 = vsel %vm260, %v2866, %v3043
    %3048 = vmatpush.bf16.msra.mxu0 %v1244
    %3049 = vmatpush.bf16.msra.mxu0 %v1242
    %3050 = vmatpush.bf16.msra.mxu0 %v1240
    %3051 = vmatpush.bf16.msra.mxu0 %v1238
    %3052 = vmatpush.bf16.msra.mxu0 %v1236
    %3053 = vmatpush.bf16.msra.mxu0 %v1234
    %3054 = vmatpush.bf16.msra.mxu0 %v1232
    %3055 = vmatpush.bf16.msra.mxu0 %v1230
    %3056 = vmatmul.bf16.gmra.mxu0 %v3046
    %v3057 = vpop.f32.mrf.mxu0
    %v3058 = vadd.f32 %v1178, %v3057
    %v3059 = vpop.f32.mrf.mxu0
    %3060 = vdwg.mxu0
    %3061 = vmatpush.bf16.msra.mxu0 %v1245
    %3062 = vmatpush.bf16.msra.mxu0 %v1243
    %3063 = vmatpush.bf16.msra.mxu0 %v1241
    %3064 = vmatpush.bf16.msra.mxu0 %v1239
    %3065 = vmatpush.bf16.msra.mxu0 %v1237
    %3066 = vmatpush.bf16.msra.mxu0 %v1235
    %3067 = vmatpush.bf16.msra.mxu0 %v1233
    %3068 = vmatpush.bf16.msra.mxu0 %v1231
    %3069 = vmatmul.bf16.gmra.mxu0 %v3046
    %v3070 = vpop.f32.mrf.mxu0
    %v3071 = vadd.f32 %v1179, %v3070
    %v3072 = vpop.f32.mrf.mxu0
    %3073 = vdwg.mxu0
    %v3074 = vxor.u32 %v3058, 2147483648
    %v3075 = vmul.f32 %v3074, 1.442695
    %v3076 = vpow.pop %v3075
    %v3077 = vadd.f32 %v3076, 1.0
    %v3078 = vrcp.pop %v3077
    %v3079 = vmul.f32 %v3077, %v3078
    %v3080 = vsub.f32 1.0, %v3079
    %v3081 = vmul.f32 %v3078, %v3080
    %v3082 = vadd.f32 %v3078, %v3081
    %vm3083 = vweird.f32 %v3077
    %vm3084 = vweird.f32 %v3078
    %vm3085 = vmor %vm3083, %vm3084
    %v3086 = vsel %vm3085, %v3078, %v3082
    %v3087 = vand.u32 2147483647, %v3077
    %vm3088 = vcmp.eq.f32.partialorder %v3087, 8.507059e+37
    %v3089 = vand.u32 %v3077, 2147483648
    %v3090 = vor.u32 1.1754944e-38, %v3089
    %v3091 = vsel %vm3088, %v3090, %v3086
    %v3092 = vmul.f32 1.0, %v3091
    %v3093 = vmul.f32 %v3071, %v52
    %v3094 = vxor.u32 %v3093, 2147483648
    %v3095 = vmul.f32 %v3094, 1.442695
    %v3096 = vpow.pop %v3095
    %v3097 = vadd.f32 %v3096, 1.0
    %v3098 = vrcp.pop %v3097
    %v3099 = vmul.f32 %v3097, %v3098
    %v3100 = vsub.f32 1.0, %v3099
    %v3101 = vmul.f32 %v3098, %v3100
    %v3102 = vadd.f32 %v3098, %v3101
    %vm3103 = vweird.f32 %v3097
    %vm3104 = vweird.f32 %v3098
    %vm3105 = vmor %vm3103, %vm3104
    %v3106 = vsel %vm3105, %v3098, %v3102
    %v3107 = vand.u32 2147483647, %v3097
    %vm3108 = vcmp.eq.f32.partialorder %v3107, 8.507059e+37
    %v3109 = vand.u32 %v3097, 2147483648
    %v3110 = vor.u32 1.1754944e-38, %v3109
    %v3111 = vsel %vm3108, %v3110, %v3106
    %v3112 = vmul.f32 1.0, %v3111
    %v3113 = vmul.f32 %v3112, %v52
    %v3114 = vsub.f32 %v3113, %v53
    %v3115 = vmul.f32 %v3092, %v3114
    %v3116 = vmul.f32 %v3092, %v2949
    %3118 = vrot.lane.b32.xlu0 %v3115, 64
    %v3119 = vpop.permute.xlu0 %3118
    %v3121 = vadd.f32 %v3116, %v3119
    %v3122 = vtanh.pop %v3121
    %v3123 = vmul.f32 %v3114, %v3122
    %v3124 = vpack.c.bf16 %v3123, %v3123
    %v3126 = vunpack.c.l.b16 %v3124
    %v3127 = vpack.c.b16 %v3126, %v3126
    %3128 = vrot.lane.b32.xlu0 %v3127, 64
    %v3129 = vpop.permute.xlu0 %3128
    %v3132 = vsel %vm260, %v3038, %v3129
    %3134 = vmatpush.bf16.msra.mxu0 %v1244
    %3135 = vmatpush.bf16.msra.mxu0 %v1242
    %3136 = vmatpush.bf16.msra.mxu0 %v1240
    %3137 = vmatpush.bf16.msra.mxu0 %v1238
    %3138 = vmatpush.bf16.msra.mxu0 %v1236
    %3139 = vmatpush.bf16.msra.mxu0 %v1234
    %3140 = vmatpush.bf16.msra.mxu0 %v1232
    %3141 = vmatpush.bf16.msra.mxu0 %v1230
    %3142 = vmatmul.bf16.gmra.mxu0 %v3132
    %v3143 = vpop.f32.mrf.mxu0
    %v3144 = vadd.f32 %v1178, %v3143
    %v3145 = vpop.f32.mrf.mxu0
    %3146 = vdwg.mxu0
    %3147 = vmatpush.bf16.msra.mxu0 %v1245
    %3148 = vmatpush.bf16.msra.mxu0 %v1243
    %3149 = vmatpush.bf16.msra.mxu0 %v1241
    %3150 = vmatpush.bf16.msra.mxu0 %v1239
    %3151 = vmatpush.bf16.msra.mxu0 %v1237
    %3152 = vmatpush.bf16.msra.mxu0 %v1235
    %3153 = vmatpush.bf16.msra.mxu0 %v1233
    %3154 = vmatpush.bf16.msra.mxu0 %v1231
    %3155 = vmatmul.bf16.gmra.mxu0 %v3132
    %v3156 = vpop.f32.mrf.mxu0
    %v3157 = vadd.f32 %v1179, %v3156
    %v3158 = vpop.f32.mrf.mxu0
    %3159 = vdwg.mxu0
    %v3160 = vxor.u32 %v3144, 2147483648
    %v3161 = vmul.f32 %v3160, 1.442695
    %v3162 = vpow.pop %v3161
    %v3163 = vadd.f32 %v3162, 1.0
    %v3164 = vrcp.pop %v3163
    %v3165 = vmul.f32 %v3163, %v3164
    %v3166 = vsub.f32 1.0, %v3165
    %v3167 = vmul.f32 %v3164, %v3166
    %v3168 = vadd.f32 %v3164, %v3167
    %vm3169 = vweird.f32 %v3163
    %vm3170 = vweird.f32 %v3164
    %vm3171 = vmor %vm3169, %vm3170
    %v3172 = vsel %vm3171, %v3164, %v3168
    %v3173 = vand.u32 2147483647, %v3163
    %vm3174 = vcmp.eq.f32.partialorder %v3173, 8.507059e+37
    %v3175 = vand.u32 %v3163, 2147483648
    %v3176 = vor.u32 1.1754944e-38, %v3175
    %v3177 = vsel %vm3174, %v3176, %v3172
    %v3178 = vmul.f32 1.0, %v3177
    %v3179 = vmul.f32 %v3157, %v52
    %v3180 = vxor.u32 %v3179, 2147483648
    %v3181 = vmul.f32 %v3180, 1.442695
    %v3182 = vpow.pop %v3181
    %v3183 = vadd.f32 %v3182, 1.0
    %v3184 = vrcp.pop %v3183
    %v3185 = vmul.f32 %v3183, %v3184
    %v3186 = vsub.f32 1.0, %v3185
    %v3187 = vmul.f32 %v3184, %v3186
    %v3188 = vadd.f32 %v3184, %v3187
    %vm3189 = vweird.f32 %v3183
    %vm3190 = vweird.f32 %v3184
    %vm3191 = vmor %vm3189, %vm3190
    %v3192 = vsel %vm3191, %v3184, %v3188
    %v3193 = vand.u32 2147483647, %v3183
    %vm3194 = vcmp.eq.f32.partialorder %v3193, 8.507059e+37
    %v3195 = vand.u32 %v3183, 2147483648
    %v3196 = vor.u32 1.1754944e-38, %v3195
    %v3197 = vsel %vm3194, %v3196, %v3192
    %v3198 = vmul.f32 1.0, %v3197
    %v3199 = vmul.f32 %v3198, %v52
    %v3200 = vsub.f32 %v3199, %v53
    %v3201 = vmul.f32 %v3178, %v3200
    %v3202 = vmul.f32 %v3178, %v3121
    %3204 = vrot.lane.b32.xlu0 %v3201, 64
    %v3205 = vpop.permute.xlu0 %3204
    %v3207 = vadd.f32 %v3202, %v3205
    %v3208 = vtanh.pop %v3207
    %v3209 = vmul.f32 %v3200, %v3208
    %v3210 = vsel %vm260, %v3209, 0.0
    %3211 = vadd.xlane.f32.xlu0 %v3210
    %v3212 = vpop.xlane.xlu0 %3211
    %v3213 = vrcp.pop 64.0
    %v3214 = vmul.f32 64.0, %v3213
    %v3215 = vsub.f32 1.0, %v3214
    %v3216 = vmul.f32 %v3213, %v3215
    %v3217 = vadd.f32 %v3213, %v3216
    %vm3218 = vweird.f32 %v3213
    %v3219 = vsel %vm3218, %v3213, %v3217
    %v3220 = vmul.f32 %v3212, %v3219
    %v3221 = vsub.f32 %v3209, %v3220
    %v3222 = vmul.f32 %v3221, %v3221
    %v3223 = vsel %vm260, %v3222, 0.0
    %3224 = vadd.xlane.f32.xlu0 %v3223
    %v3225 = vpop.xlane.xlu0 %3224
    %v3226 = vmul.f32 %v3225, %v3219
    %v3227 = vadd.f32 %v3226, 1e-05
    %v3228 = vrsqrt.pop %v3227
    %v3229 = vmul.f32 %v3228, %v3227
    %v3230 = vmul.f32 %v3229, %v3228
    %v3231 = vmul.f32 0.5, %v3230
    %v3232 = vsub.f32 1.5, %v3231
    %v3233 = vmul.f32 %v3228, %v3232
    %vm3234 = vweird.f32 %v3227
    %vm3235 = vweird.f32 %v3228
    %vm3236 = vmor %vm3234, %vm3235
    %v3237 = vsel %vm3236, %v3228, %v3233
    %v3238 = vmul.f32 %v3221, %v3237
    %v3239 = vld [vmem:[%s5] sm:$0x1]
    %v3241 = vperm.slane %v3239, 0
    %v3243 = vmul.f32 %v3238, %v3241
    %v3244 = vld [vmem:[%s6] sm:$0x1]
    %v3246 = vperm.slane %v3244, 0
    %v3248 = vadd.f32 %v3243, %v3246
    %v3249 = vld [vmem:[%s7] sm:$0xff]
    %v3250 = vld [vmem:[%s7 + $0x8] sm:$0xff]
    %v3251 = vld [vmem:[%s7 + $0x10] sm:$0xff]
    %v3252 = vld [vmem:[%s7 + $0x18] sm:$0xff]
    %v3253 = vld [vmem:[%s7 + $0x20] sm:$0xff]
    %v3254 = vld [vmem:[%s7 + $0x28] sm:$0xff]
    %v3255 = vld [vmem:[%s7 + $0x30] sm:$0xff]
    %v3256 = vld [vmem:[%s7 + $0x38] sm:$0xff]
    %v3257 = vld [vmem:[%s8] sm:$0x1]
    %v3259 = vperm.slane %v3257, 0
    %v3262 = vsel %vm260, %v3248, 0
    %3264 = vmatpush.msra.mxu0 0.0
    %3265 = vmatpush.msra.mxu0 0.0
    %3266 = vmatpush.msra.mxu0 0.0
    %3267 = vmatpush.msra.mxu0 0.0
    %3268 = vmatpush.msra.mxu0 0.0
    %3269 = vmatpush.msra.mxu0 0.0
    %3270 = vmatpush.msra.mxu0 0.0
    %3271 = vmatpush.msra.mxu0 0.0
    %3272 = vmatpush.msra.mxu0 %v3256
    %3273 = vmatpush.msra.mxu0 %v3255
    %3274 = vmatpush.msra.mxu0 %v3254
    %3275 = vmatpush.msra.mxu0 %v3253
    %3276 = vmatpush.msra.mxu0 %v3252
    %3277 = vmatpush.msra.mxu0 %v3251
    %3278 = vmatpush.msra.mxu0 %v3250
    %3279 = vmatpush.msra.mxu0 %v3249
    %3280 = vmatmul.f32.gmra.mxu0 %v3262
    %v3281 = vpop.f32.mrf.mxu0
    %v3282 = vadd.f32 %v3259, %v3281
    %3283 = vdwg.mxu0
    %vm3284 = vcmask 162816
    %3285 = vst.msk [vmem:[%s9] sm:$0xff] %vm3284, %v3282
    // Predicated region
    $region42: #{stock_predictor_forward.1} parent=1 // pred_check
      _
    $region43: #{stock_predictor_forward.1} parent=1 // pred_check_branch
      %3287 = sbr.rel (0) target = $region45
    $region44: #{stock_predictor_forward.1} parent=1 // pred_region
      _
    $region45: #{stock_predictor_forward.1} parent=1 // pred_fallthru
      _
    // Predicated region
    $region46: #{stock_predictor_forward.1} parent=1 // pred_check
      _
    $region47: #{stock_predictor_forward.1} parent=1 // pred_check_branch
      %3289 = sbr.rel (0) target = $region49
    $region48: #{stock_predictor_forward.1} parent=1 // pred_region
      _
    $region49: #{stock_predictor_forward.1} parent=1 // pred_fallthru
      _
    %3290 = vsyncpa [#allocation3], 1

</llo_original>
